<compile_context>
chip_gen: v7x
topology: tpu7x:2x2x1
jax: 0.10.0
libtpu: 0.0.40
codegen_flags: <defaults>
</compile_context>

<pallas_src>
import functools
import math

import numpy as np
import jax
import jax.numpy as jnp
from jax.experimental import pallas as pl
from jax.experimental.pallas import tpu as pltpu


# --------------------------------------------------------------------------- #
# Pallas kernel: one RoI block x one channel tile of one FPN level             #
# --------------------------------------------------------------------------- #
def _roi_align_block_kernel(blk_ref, ay_ref, ax_ref, feat_ref, out_ref, *,
                            R, out_h, out_w, W, ct):
    """Pool one block of R same-image RoIs against one channel tile.

    feat_ref : (1, 1, H, W*ct)     image/channel-group slab (H sublane, (w,c) lane)
    ay_ref   : (R*out_h, H)        stacked Y-axis bilinear weights (feature dtype)
    ax_ref   : (R, out_w, W)       per-RoI X-axis bilinear weights (float32)
    out_ref  : (R*out_h*out_w, ct) flattened, lane/sublane-dense output block
    blk_ref  : scalar-prefetch per-block image index (consumed by the index_map)
    """
    del blk_ref
    fm = feat_ref[0, 0]                                                # (H, W*ct)
    # One big MXU matmul over the whole RoI block (the dominant contraction).
    t = jnp.dot(ay_ref[...], fm, preferred_element_type=jnp.float32)  # (R*oh, W*ct)
    t3 = t.reshape(R * out_h, W, ct)                                   # un-fuse lanes
    ax = ax_ref[...].astype(jnp.float32)                               # (R, ow, W)
    axb = jnp.broadcast_to(ax[:, None, :, :], (R, out_h, out_w, W))
    axb = axb.reshape(R * out_h, out_w, W)
    # Small batched matmul over W (~3% of the FLOPs of the first matmul).
    o = jnp.einsum("bqw,bwc->bqc", axb, t3,
                   preferred_element_type=jnp.float32)                 # (R*oh, ow, ct)
    out_ref[...] = o.reshape(R * out_h * out_w, ct).astype(out_ref.dtype)


def _roi_align_level_call(feat_g, ay, ax, blk_bidx, out_dtype,
                          R, out_h, out_w, W, c_tile, vmem_limit):
    B, G, H, Wct = feat_g.shape
    N_pad = ax.shape[0]
    num_blocks = N_pad // R
    C = G * c_tile
    kernel = functools.partial(_roi_align_block_kernel, R=R, out_h=out_h,
                               out_w=out_w, W=W, ct=c_tile)
    grid_spec = pltpu.PrefetchScalarGridSpec(
        num_scalar_prefetch=1,                  # per-block image index -> SMEM
        grid=(G, num_blocks),                   # RoI axis innermost: feature reused
        in_specs=[
            pl.BlockSpec((R * out_h, H), lambda ci, rb, blk: (rb, 0)),
            pl.BlockSpec((R, out_w, W), lambda ci, rb, blk: (rb, 0, 0)),
            pl.BlockSpec((1, 1, H, Wct), lambda ci, rb, blk: (blk[rb], ci, 0, 0)),
        ],
        out_specs=pl.BlockSpec((R * out_h * out_w, c_tile),
                               lambda ci, rb, blk: (rb, ci)),
    )
    return pl.pallas_call(
        kernel,
        grid_spec=grid_spec,
        out_shape=jax.ShapeDtypeStruct((N_pad * out_h * out_w, C), out_dtype),
        compiler_params=pltpu.CompilerParams(
            dimension_semantics=("parallel", "arbitrary"),
            vmem_limit_bytes=vmem_limit),
    )(blk_bidx, ay, ax, feat_g)


# --------------------------------------------------------------------------- #
# Host-side helpers                                                            #
# --------------------------------------------------------------------------- #
def _vmem_budget():
    """(vmem_limit_bytes or None, c_tile budget), generation aware."""
    try:
        info = pltpu.get_tpu_info()
        cap = int(getattr(info, "vmem_capacity_bytes", 0) or 0)
    except Exception:
        cap = 0
    if cap <= 0:
        # Unknown generation: stay under the conservative default scoped limits.
        return None, 16 << 20
    return (cap * 3) // 4, cap // 2


def _choose_c_tile(H, W, C, itemsize, R, out_h, out_w, budget_bytes):
    """Largest channel tile whose working set fits the VMEM budget."""
    def usage(ct):
        feat = 2 * H * W * ct * itemsize                 # double-buffered feature
        wts = 2 * (R * out_h * H + R * out_w * W) * 4    # weight blocks
        t = 2 * (R * out_h) * W * ct * 4                 # t + its un-fused copy
        o = 2 * (R * out_h * out_w) * ct * 4             # result + out block
        return feat + wts + t + o
    if C <= 128 or usage(C) <= budget_bytes:
        return C
    for k in range(C // 128, 0, -1):
        ct = k * 128
        if C % ct == 0 and usage(ct) <= budget_bytes:
            return ct
    return 128 if C % 128 == 0 else C                    # graceful fallback


def _axis_weights(start, bin_sz, n_out, n_in, sr, dtype):
    """Averaged 1-D bilinear weights (torchvision aligned=False), vectorized.

    start, bin_sz : (N,) f32 (already in feature-map coordinates)
    returns (N, n_out, n_in) in `dtype`.
    """
    s = (jnp.arange(sr, dtype=jnp.float32) + 0.5) / sr                 # (sr,)
    p = jnp.arange(n_out, dtype=jnp.float32)                           # (n_out,)
    grid = p[:, None] + s[None, :]                                     # (n_out, sr)
    coord = start[:, None, None] + bin_sz[:, None, None] * grid        # (N,n_out,sr)
    valid = jnp.logical_and(coord >= -1.0, coord <= float(n_in))
    c = jnp.maximum(coord, 0.0)
    low = jnp.floor(c)
    last = float(n_in - 1)
    at_end = low >= last
    low = jnp.where(at_end, last, low)
    high = jnp.where(at_end, last, low + 1.0)
    c = jnp.where(at_end, last, c)
    lw = c - low                                                       # weight of high
    hw = 1.0 - lw                                                      # weight of low
    idx = jnp.arange(n_in, dtype=jnp.float32)
    w = (hw[..., None] * (idx == low[..., None]).astype(jnp.float32)
         + lw[..., None] * (idx == high[..., None]).astype(jnp.float32))
    w = jnp.where(valid[..., None], w, 0.0)                            # (N,n_out,sr,n_in)
    return (jnp.sum(w, axis=2) / sr).astype(dtype)                     # (N,n_out,n_in)


def _infer_scale(feat_shape, original_size):
    # torchvision derives the scale from the height ratio (index 0).
    approx = float(feat_shape[-2]) / float(original_size[0])
    return 2.0 ** float(round(math.log2(approx)))


def _compute_levels_np(boxes_np, k_min, k_max, canonical_scale, canonical_level,
                       eps=1e-6):
    """LevelMapper (FPN eq. 1) on host."""
    area = (boxes_np[:, 2] - boxes_np[:, 0]) * (boxes_np[:, 3] - boxes_np[:, 1])
    s = np.sqrt(np.maximum(area, 0.0))
    target = np.floor(canonical_level
                      + np.log2(np.maximum(s, 1e-12) / canonical_scale) + eps)
    return (np.clip(target, k_min, k_max) - k_min).astype(np.int32)


# --------------------------------------------------------------------------- #
# MultiScaleRoIAlign forward                                                   #
# --------------------------------------------------------------------------- #
class MultiScaleRoIAlignPallas:
    """JAX/Pallas equivalent of torchvision MultiScaleRoIAlign (no learned params)."""

    def __init__(self, featmap_names, output_size, sampling_ratio, *,
                 canonical_scale=224, canonical_level=4, block_rois=16):
        if isinstance(output_size, int):
            output_size = (output_size, output_size)
        if sampling_ratio <= 0:
            # TODO(synk): torchvision's adaptive sampling (sampling_ratio<=0 ->
            # ceil(roi_size/out_size) per RoI) is dynamic per RoI and not supported.
            raise NotImplementedError("sampling_ratio must be a positive integer")
        self.featmap_names = list(featmap_names)
        self.output_size = tuple(output_size)
        self.sampling_ratio = int(sampling_ratio)
        self.canonical_scale = canonical_scale
        self.canonical_level = canonical_level
        # RoI block size; multiple of 8 keeps every block sublane-aligned.
        self.block_rois = max(8, int(math.ceil(block_rois / 8)) * 8)

    def __call__(self, x, boxes, image_shapes):
        # _filter_input: keep dict insertion order, select named feature maps.
        x_filtered = [v for k, v in x.items() if k in self.featmap_names]
        # _setup_scales
        max_h = max(s[0] for s in image_shapes)
        max_w = max(s[1] for s in image_shapes)
        scales = [_infer_scale(f.shape, (max_h, max_w)) for f in x_filtered]
        k_min = int(-math.log2(scales[0]))
        k_max = int(-math.log2(scales[-1]))

        out_h, out_w = self.output_size
        sr = self.sampling_ratio
        C = x_filtered[0].shape[1]
        out_dtype = x_filtered[0].dtype
        N = sum(int(b.shape[0]) for b in boxes)
        if N == 0:
            return jnp.zeros((0, C, out_h, out_w), out_dtype)

        # Host-side RoI bookkeeping (small): concat, image ids, FPN levels.
        boxes_np = np.concatenate([np.asarray(b, np.float32) for b in boxes], axis=0)
        batch_np = np.concatenate(
            [np.full((int(b.shape[0]),), i, np.int32) for i, b in enumerate(boxes)])
        num_levels = len(x_filtered)
        if num_levels == 1:
            levels_np = np.zeros((N,), np.int32)
        else:
            levels_np = _compute_levels_np(boxes_np, k_min, k_max,
                                           self.canonical_scale, self.canonical_level)

        R = self.block_rois
        vmem_limit, budget = _vmem_budget()

        # TODO(synk): torchvision's _onnx_merge_levels tracing branch has no Pallas
        # equivalent; per-level contiguous ranges + a final gather give the same result.
        parts_out, parts_idx = [], []
        for lvl, (feat, scale) in enumerate(zip(x_filtered, scales)):
            sel = np.nonzero(levels_np == lvl)[0]
            if sel.size == 0:
                continue
            sel = sel[np.argsort(batch_np[sel], kind="stable")]
            B, _, Hf, Wf = feat.shape

            # Group this level's RoIs by image; pad each group to a multiple of R so
            # every block is uniform in image index.
            lvl_boxes, blk_bidx, valid_rows, valid_orig = [], [], [], []
            row = 0
            for b in range(B):
                idx_b = sel[batch_np[sel] == b]
                nb = int(idx_b.size)
                if nb == 0:
                    continue
                pad = (-nb) % R
                lvl_boxes.append(boxes_np[idx_b])
                if pad:
                    lvl_boxes.append(np.zeros((pad, 4), np.float32))
                blk_bidx.extend([b] * ((nb + pad) // R))
                valid_rows.append(np.arange(row, row + nb))
                valid_orig.append(idx_b)
                row += nb + pad
            lvl_boxes = np.concatenate(lvl_boxes, axis=0).astype(np.float32)
            n_pad_lvl = lvl_boxes.shape[0]
            blk_bidx = jnp.asarray(np.asarray(blk_bidx, np.int32))
            valid_rows = np.concatenate(valid_rows)
            valid_orig = np.concatenate(valid_orig)

            # Bilinear axis weights on host (vectorized, tiny; padded rows -> junk
            # that is discarded below).
            bx = jnp.asarray(lvl_boxes) * float(scale)
            roi_w = jnp.maximum(bx[:, 2] - bx[:, 0], 1.0)
            roi_h = jnp.maximum(bx[:, 3] - bx[:, 1], 1.0)
            ay = _axis_weights(bx[:, 1], roi_h / out_h, out_h, Hf, sr, feat.dtype)
            ax = _axis_weights(bx[:, 0], roi_w / out_w, out_w, Wf, sr, jnp.float32)
            ay = ay.reshape(n_pad_lvl * out_h, Hf)

            # Feature slab: (B, C//ct, H, W*ct), lane-dense and matmul-ready.
            # TODO(synk): produce FPN features channels-last upstream to avoid this
            # one transpose pass over the feature maps.
            itemsize = jnp.dtype(feat.dtype).itemsize
            c_tile = _choose_c_tile(Hf, Wf, C, itemsize, R, out_h, out_w, budget)
            G = max(1, C // c_tile)
            feat_g = jnp.transpose(feat.reshape(B, G, C // G, Hf, Wf), (0, 1, 3, 4, 2))
            feat_g = feat_g.reshape(B, G, Hf, Wf * (C // G))

            out_flat = _roi_align_level_call(feat_g, ay, ax, blk_bidx, out_dtype,
                                             R, out_h, out_w, Wf, C // G, vmem_limit)
            out_lvl = out_flat.reshape(n_pad_lvl, out_h, out_w, C)
            parts_out.append(out_lvl[jnp.asarray(valid_rows)])
            parts_idx.append(valid_orig)

        sorted_out = jnp.concatenate(parts_out, axis=0)          # (N, oh, ow, C)
        orig = np.concatenate(parts_idx)
        inv = np.empty((N,), np.int64)
        inv[orig] = np.arange(N)
        result = sorted_out[jnp.asarray(inv)]                    # original RoI order
        return jnp.transpose(result, (0, 3, 1, 2))               # (N, C, oh, ow)


# --------------------------------------------------------------------------- #
# Pure-numpy reference (torchvision roi_align, aligned=False semantics)        #
# --------------------------------------------------------------------------- #
def _bilinear_ref(fm, y, x):
    C, H, W = fm.shape
    if y < -1.0 or y > H or x < -1.0 or x > W:
        return np.zeros((C,), np.float32)
    y = max(y, 0.0)
    x = max(x, 0.0)
    y_low = int(np.floor(y))
    x_low = int(np.floor(x))
    if y_low >= H - 1:
        y_low = y_high = H - 1
        y = float(y_low)
    else:
        y_high = y_low + 1
    if x_low >= W - 1:
        x_low = x_high = W - 1
        x = float(x_low)
    else:
        x_high = x_low + 1
    ly, lx = y - y_low, x - x_low
    hy, hx = 1.0 - ly, 1.0 - lx
    return (hy * hx * fm[:, y_low, x_low] + hy * lx * fm[:, y_low, x_high]
            + ly * hx * fm[:, y_high, x_low] + ly * lx * fm[:, y_high, x_high])


def _roi_align_ref(fm, box, scale, out_h, out_w, sr):
    C = fm.shape[0]
    x1, y1, x2, y2 = [float(v) * scale for v in box]
    roi_w = max(x2 - x1, 1.0)
    roi_h = max(y2 - y1, 1.0)
    bin_w, bin_h = roi_w / out_w, roi_h / out_h
    out = np.zeros((C, out_h, out_w), np.float32)
    for ph in range(out_h):
        for pw in range(out_w):
            acc = np.zeros((C,), np.float32)
            for iy in range(sr):
                yy = y1 + bin_h * (ph + (iy + 0.5) / sr)
                for ix in range(sr):
                    xx = x1 + bin_w * (pw + (ix + 0.5) / sr)
                    acc = acc + _bilinear_ref(fm, yy, xx)
            out[:, ph, pw] = acc / (sr * sr)
    return out


def _multiscale_ref(x_filtered, boxes_list, output_size, sr, scales, levels, batch_idx):
    x_np = [np.asarray(f, np.float32) for f in x_filtered]
    b_np = np.concatenate([np.asarray(b, np.float32) for b in boxes_list], 0)
    N, C = b_np.shape[0], x_np[0].shape[1]
    out_h, out_w = output_size
    res = np.zeros((N, C, out_h, out_w), np.float32)
    for lvl, (feat, scale) in enumerate(zip(x_np, scales)):
        for r in range(N):
            if levels[r] == lvl:
                res[r] = _roi_align_ref(feat[batch_idx[r]], b_np[r], scale,
                                        out_h, out_w, sr)
    return res


# --------------------------------------------------------------------------- #
if __name__ == "__main__":
    key = jax.random.PRNGKey(0)
    kf1, kf2, kf3, kb0, kb1 = jax.random.split(key, 5)

    B, C = 2, 4
    feats = {
        "feat1": jax.random.normal(kf1, (B, C, 16, 16), jnp.float32),
        "feat2": jax.random.normal(kf2, (B, C, 12, 12), jnp.float32),  # filtered out
        "feat3": jax.random.normal(kf3, (B, C, 8, 8), jnp.float32),
    }
    image_shapes = [(64, 64), (64, 64)]

    def make_boxes(k, n):
        kxy, kwh = jax.random.split(k)
        xy = jax.random.uniform(kxy, (n, 2), minval=1.0, maxval=24.0)
        u = jax.random.uniform(kwh, (n, 2))
        small = 4.0 + 8.0 * u      # small boxes -> lower pyramid level
        large = 20.0 + 16.0 * u    # large boxes -> higher pyramid level
        wh = jnp.where((jnp.arange(n) % 2 == 0)[:, None], small, large)
        return jnp.concatenate([xy, xy + wh], axis=1).astype(jnp.float32)

    # 3 + 2 RoIs -> exercises per-level sorting, per-image grouping and padding.
    boxes = [make_boxes(kb0, 3), make_boxes(kb1, 2)]

    pooler = MultiScaleRoIAlignPallas(
        ["feat1", "feat3"], output_size=4, sampling_ratio=2,
        canonical_scale=32, canonical_level=4, block_rois=8)

    out = pooler(feats, boxes, image_shapes)
    out = jax.block_until_ready(out)

    # ---- reference check ----------------------------------------------------
    x_filtered = [feats["feat1"], feats["feat3"]]
    max_h = max(s[0] for s in image_shapes)
    max_w = max(s[1] for s in image_shapes)
    scales = [_infer_scale(f.shape, (max_h, max_w)) for f in x_filtered]
    k_min = int(-math.log2(scales[0]))
    k_max = int(-math.log2(scales[-1]))
    concat_np = np.concatenate([np.asarray(b, np.float32) for b in boxes], axis=0)
    levels_np = _compute_levels_np(concat_np, k_min, k_max, 32, 4)
    batch_idx_np = np.concatenate(
        [np.full((b.shape[0],), i, np.int64) for i, b in enumerate(boxes)])
    ref = _multiscale_ref(x_filtered, boxes, (4, 4), 2, scales, levels_np, batch_idx_np)

    assert out.shape == (5, C, 4, 4), out.shape
    np.testing.assert_allclose(np.asarray(out), ref, rtol=2e-3, atol=2e-3)
    print("KERNEL_OK")
</pallas_src>

<mosaic_0001>
module attributes {stable_mosaic.version = 11 : i64} {
  func.func @_roi_align_block_kernel(%arg0: i32, %arg1: i32, %arg2: memref<2xi32, #tpu.memory_space<smem>>, %arg3: memref<32x16xf32, #tpu.memory_space<vmem>>, %arg4: memref<8x4x16xf32, #tpu.memory_space<vmem>>, %arg5: memref<1x1x16x64xf32, #tpu.memory_space<vmem>>, %arg6: memref<128x4xf32, #tpu.memory_space<vmem>>) attributes {dimension_semantics = [#tpu.dimension_semantics<parallel>, #tpu.dimension_semantics<arbitrary>], iteration_bounds = array<i64: 1, 2>, scalar_prefetch = 1 : i64, scratch_operands = 0 : i64, tpu.core_type = #tpu.core_type<tc>, window_params = [{transform_indices = @transform_0, window_bounds = array<i64: 32, 16>}, {transform_indices = @transform_1, window_bounds = array<i64: 8, 4, 16>}, {transform_indices = @transform_2, window_bounds = array<i64: 1, 1, 16, 64>}, {transform_indices = @transform_3, window_bounds = array<i64: 128, 4>}]} {
    %c0 = arith.constant 0 : index
    %c0_0 = arith.constant 0 : index
    %c0_1 = arith.constant 0 : index
    %c0_2 = arith.constant 0 : index
    %0 = vector.load %arg5[%c0, %c0_0, %c0_1, %c0_2] : memref<1x1x16x64xf32, #tpu.memory_space<vmem>>, vector<1x1x16x64xf32>
    %1 = vector.shape_cast %0 : vector<1x1x16x64xf32> to vector<16x64xf32>
    %c0_3 = arith.constant 0 : index
    %c0_4 = arith.constant 0 : index
    %2 = vector.load %arg3[%c0_3, %c0_4] : memref<32x16xf32, #tpu.memory_space<vmem>>, vector<32x16xf32>
    %cst = arith.constant dense<0.000000e+00> : vector<32x64xf32>
    %3 = tpu.matmul %2, %1, %cst {dimension_numbers = #tpu.dot_dimension_numbers<[1], [0], [0], [1], [0, 0, 1, 1], [], []>} : vector<32x16xf32>, vector<16x64xf32>, vector<32x64xf32> -> vector<32x64xf32>
    %4 = vector.shape_cast %3 : vector<32x64xf32> to vector<32x16x4xf32>
    %c0_5 = arith.constant 0 : index
    %c0_6 = arith.constant 0 : index
    %c0_7 = arith.constant 0 : index
    %5 = vector.load %arg4[%c0_5, %c0_6, %c0_7] : memref<8x4x16xf32, #tpu.memory_space<vmem>>, vector<8x4x16xf32>
    %6 = vector.shape_cast %5 : vector<8x4x16xf32> to vector<8x1x4x16xf32>
    %7 = vector.shape_cast %6 : vector<8x1x4x16xf32> to vector<8x1x4x16xf32>
    %8 = vector.broadcast %7 : vector<8x1x4x16xf32> to vector<8x4x4x16xf32>
    %9 = vector.shape_cast %8 : vector<8x4x4x16xf32> to vector<32x4x16xf32>
    "tpu.trace_start"() <{level = 10 : i32, message = "bqw,bwc->bqc"}> : () -> ()
    %cst_8 = arith.constant dense<0.000000e+00> : vector<32x4x4xf32>
    %10 = tpu.matmul %9, %4, %cst_8 {dimension_numbers = #tpu.dot_dimension_numbers<[2], [1], [1], [2], [0, 0, 0, 1, 1, 2], [0], [0]>} : vector<32x4x16xf32>, vector<32x16x4xf32>, vector<32x4x4xf32> -> vector<32x4x4xf32>
    "tpu.trace_stop"() : () -> ()
    %11 = vector.shape_cast %10 : vector<32x4x4xf32> to vector<128x4xf32>
    %c0_9 = arith.constant 0 : index
    %c0_10 = arith.constant 0 : index
    %12 = vector.load %arg6[%c0_9, %c0_10] : memref<128x4xf32, #tpu.memory_space<vmem>>, vector<128x4xf32>
    tpu.vector_store %arg6[%c0_9, %c0_10], %11 {strides = array<i32>} : memref<128x4xf32, #tpu.memory_space<vmem>>, vector<128x4xf32>,
    return
  }
  func.func @transform_0(%arg0: i32, %arg1: i32, %arg2: memref<2xi32, #tpu.memory_space<smem>>) -> (i32, i32) {
    %c0_i32 = arith.constant 0 : i32
    %c0_i32_0 = arith.constant 0 : i32
    return %arg1, %c0_i32 : i32, i32
  }
  func.func @transform_1(%arg0: i32, %arg1: i32, %arg2: memref<2xi32, #tpu.memory_space<smem>>) -> (i32, i32, i32) {
    %c0_i32 = arith.constant 0 : i32
    %c0_i32_0 = arith.constant 0 : i32
    %c0_i32_1 = arith.constant 0 : i32
    return %arg1, %c0_i32, %c0_i32_0 : i32, i32, i32
  }
  func.func @transform_2(%arg0: i32, %arg1: i32, %arg2: memref<2xi32, #tpu.memory_space<smem>>) -> (i32, i32, i32, i32) {
    %0 = arith.index_cast %arg1 : i32 to index
    %1 = memref.load %arg2[%0] : memref<2xi32, #tpu.memory_space<smem>>
    %c0_i32 = arith.constant 0 : i32
    %c0_i32_0 = arith.constant 0 : i32
    %c0_i32_1 = arith.constant 0 : i32
    return %1, %arg0, %c0_i32, %c0_i32_0 : i32, i32, i32, i32
  }
  func.func @transform_3(%arg0: i32, %arg1: i32, %arg2: memref<2xi32, #tpu.memory_space<smem>>) -> (i32, i32) {
    %c0_i32 = arith.constant 0 : i32
    return %arg1, %arg0 : i32, i32
  }
}

</mosaic_0001>

<llo_original>
// kernel: tpu_custom_call.1
$region0: #{tpu_custom_call.1}
  #allocation0 [shape = 'u32[]', space=smem, size = 0x4, offset = 0x4, fixed_abs, tag = 'smem constant byte address 0x4 - core index']
  #allocation1 [shape = 'u32[144,128]{1,0:T(1,128)}', space=vmem, size = 0x12000, scoped, tag = 'internal scratch']
  #allocation2 [shape = 's32[1]{0}', space=sflag, size = 0x4, scoped, tag = 'scoped memory for tpu_custom_call.1']
  #allocation3 [shape = 'u8[512]{0}', space=smem, size = 0x200, scoped, tag = 'prefetched SMEM operand 0']
  %s0 = inlined_call_operand.vmem [shape: s32[2], index: 0, kind: input, shape index: {}]
  %s1 = inlined_call_operand.vmem [shape: f32[64,16], index: 1, kind: input, shape index: {}]
  %s2 = inlined_call_operand.vmem [shape: f32[16,4,16], index: 2, kind: input, shape index: {}]
  %s3 = inlined_call_operand.hbm [shape: f32[2,1,16,64], index: 3, kind: input, shape index: {}]
  %s4 = inlined_call_operand.vmem [shape: f32[256,4], index: 4, kind: output, shape index: {}]
  %s5 = sld [smem:[#allocation0]]
  $region49: #{tpu_custom_call.1} parent=0
    _
  %s7 = ssub.s32 1, %s5
  %s8 = scalar_select 0, %s7, %s5
  %s9 = sshll.u32 %s0, 4
  %s10 = int_to_ptr.vmem [resolvable:$true] %s9
  %12 = dma.vmem_to_smem %s10, 16, [#allocation3], [#allocation2]
  %13 = dma.done [#allocation2], 16
  %14 = sfence
  $region1: #{tpu_custom_call.1} parent=0
    #allocation4 [shape = 'u8[16384]{0}', space=vmem, size = 0x4000, scoped, tag = 'input window, operand 3']
    #allocation5 [shape = 's32[2]{0}', space=sflag, size = 0x8, scoped, tag = 'scoped memory for tpu_custom_call.1']
    %15 = vsyncpa [#allocation5], 0
    %s16 = scalar_lea.sflag [#allocation5], 1
    %17 = vsyncpa %s16, 0
    loop: start=0, step=1, limit=4
    $region2: #{tpu_custom_call.1} parent=1 // loop_pre_header
      _
    $region3: #{tpu_custom_call.1} parent=1 // loop_header
      %s19 = sphi 0, %s23
      %p20 = scmp.ge.s32.totalorder %s19, 4
      %s26 = sphi 0, %s38
      %s27 = sphi 0, %s34
      %s28 = sphi 0, %s26
      %s29 = sphi 0, %s27
      %s30 = sphi 0, %s28
      %s31 = sphi 0, %s29
      %s41 = sphi 0, %s43
      %s44 = sphi 0, %s41
      %s45 = sphi 0, %s44
      %s61 = sphi 0, %s45
      %s67 = sphi 0, %s69
      %s70 = sphi 0, %s67
      %s71 = sphi 0, %s70
      %s87 = sphi 0, %s71
      %s97 = sphi 0, %s99
      %s100 = sphi 0, %s97
      %s101 = sphi 0, %s100
      %s117 = sphi 0, %s101
      %s125 = sphi 0, %s127
      %s128 = sphi 0, %s125
      %s129 = sphi 0, %s128
      %s145 = sphi 0, %s129
    $region4: #{tpu_custom_call.1} parent=1 // loop_header_branch
      %22 = sbr.rel (%p20) target = $region8
    $region5: #{tpu_custom_call.1} parent=1 // loop_body
      %s24 = ssub.s32 %s19, 1
      %s25 = ssub.s32 %s19, 2
      %s32 = sadd.s32 1, %s27
      %p33 = scmp.ge.s32.totalorder %s32, 2
      %s34 = scalar_select %p33, 0, %s32
      %s35 = sadd.s32 1, %s26
      %s36 = scalar_select %p33, %s35, %s26
      %p37 = scmp.ge.s32.totalorder %s36, 1
      %s38 = scalar_select %p37, 0, %s36
      %s39 = ssub.s32 %s27, %s34
      %p40 = scmp.eq.s32.totalorder %s39, 0
      %s42 = sadd.s32 %s41, 1
      %s43 = scalar_select %p40, %s41, %s42
      %p46 = pneg %p40
      %p47 = scmp.eq.s32.totalorder %s19, 1
      %p48 = por %p46, %p47
      %p49 = scmp.ne.s32.totalorder %s41, %s44
      %p50 = scmp.eq.s32.totalorder %s19, 0
      %p51 = por %p49, %p50
      %p52 = scmp.ne.s32.totalorder %s41, %s44
      %p53 = scmp.eq.s32.totalorder %s24, 1
      %p54 = por %p52, %p53
      %p55 = scmp.ne.s32.totalorder %s44, %s45
      %p56 = scmp.eq.s32.totalorder %s24, 0
      %p57 = por %p55, %p56
      %p58 = scmp.ne.s32.totalorder %s44, %s45
      %p59 = scmp.eq.s32.totalorder %s25, 1
      %p60 = por %p58, %p59
      %p62 = scmp.ne.s32.totalorder %s45, %s61
      %p63 = scmp.eq.s32.totalorder %s25, 0
      %p64 = por %p62, %p63
      %s65 = ssub.s32 %s27, %s34
      %p66 = scmp.eq.s32.totalorder %s65, 0
      %s68 = sadd.s32 %s67, 1
      %s69 = scalar_select %p66, %s67, %s68
      %p72 = pneg %p66
      %p73 = scmp.eq.s32.totalorder %s19, 1
      %p74 = por %p72, %p73
      %p75 = scmp.ne.s32.totalorder %s67, %s70
      %p76 = scmp.eq.s32.totalorder %s19, 0
      %p77 = por %p75, %p76
      %p78 = scmp.ne.s32.totalorder %s67, %s70
      %p79 = scmp.eq.s32.totalorder %s24, 1
      %p80 = por %p78, %p79
      %p81 = scmp.ne.s32.totalorder %s70, %s71
      %p82 = scmp.eq.s32.totalorder %s24, 0
      %p83 = por %p81, %p82
      %p84 = scmp.ne.s32.totalorder %s70, %s71
      %p85 = scmp.eq.s32.totalorder %s25, 1
      %p86 = por %p84, %p85
      %p88 = scmp.ne.s32.totalorder %s71, %s87
      %p89 = scmp.eq.s32.totalorder %s25, 0
      %p90 = por %p88, %p89
      %s91 = sld [smem:[#allocation3 + %s27]]
      %s92 = sld [smem:[#allocation3 + %s34]]
      %s93 = ssub.s32 %s91, %s92
      %s94 = ssub.s32 %s26, %s38
      %s95 = sor.u32 %s93, %s94
      %p96 = scmp.eq.s32.totalorder %s95, 0
      %s98 = sadd.s32 %s97, 1
      %s99 = scalar_select %p96, %s97, %s98
      %p102 = pneg %p96
      %p103 = scmp.eq.s32.totalorder %s19, 1
      %p104 = por %p102, %p103
      %p105 = scmp.ne.s32.totalorder %s97, %s100
      %p106 = scmp.eq.s32.totalorder %s19, 0
      %p107 = por %p105, %p106
      %p108 = scmp.ne.s32.totalorder %s97, %s100
      %p109 = scmp.eq.s32.totalorder %s24, 1
      %p110 = por %p108, %p109
      %p111 = scmp.ne.s32.totalorder %s100, %s101
      %p112 = scmp.eq.s32.totalorder %s24, 0
      %p113 = por %p111, %p112
      %p114 = scmp.ne.s32.totalorder %s100, %s101
      %p115 = scmp.eq.s32.totalorder %s25, 1
      %p116 = por %p114, %p115
      %p118 = scmp.ne.s32.totalorder %s101, %s117
      %p119 = scmp.eq.s32.totalorder %s25, 0
      %p120 = por %p118, %p119
      %s121 = ssub.s32 %s27, %s34
      %s122 = ssub.s32 %s26, %s38
      %s123 = sor.u32 %s121, %s122
      %p124 = scmp.eq.s32.totalorder %s123, 0
      %s126 = sadd.s32 %s125, 1
      %s127 = scalar_select %p124, %s125, %s126
      %p130 = pneg %p124
      %p131 = scmp.eq.s32.totalorder %s19, 1
      %p132 = por %p130, %p131
      %p133 = scmp.ne.s32.totalorder %s125, %s128
      %p134 = scmp.eq.s32.totalorder %s19, 0
      %p135 = por %p133, %p134
      %p136 = scmp.ne.s32.totalorder %s125, %s128
      %p137 = scmp.eq.s32.totalorder %s24, 1
      %p138 = por %p136, %p137
      %p139 = scmp.ne.s32.totalorder %s128, %s129
      %p140 = scmp.eq.s32.totalorder %s24, 0
      %p141 = por %p139, %p140
      %p142 = scmp.ne.s32.totalorder %s128, %s129
      %p143 = scmp.eq.s32.totalorder %s25, 1
      %p144 = por %p142, %p143
      %p146 = scmp.ne.s32.totalorder %s129, %s145
      %p147 = scmp.eq.s32.totalorder %s25, 0
      %p148 = por %p146, %p147
      %p149 = scmp.le.s32.totalorder 1, %s19
      %p150 = scmp.lt.s32.totalorder %s19, 3
      %p151 = pnand %p149, %p150
      %p152 = pneg %p151
      // Predicated region
      $region9: #{tpu_custom_call.1} parent=5 // pred_check
        _
      $region10: #{tpu_custom_call.1} parent=5 // pred_check_branch
        %154 = sbr.rel (%p151) target = $region12
      $region11: #{tpu_custom_call.1} parent=5 // pred_region
        %s155 = ssub.s32 %s19, 1
      $region12: #{tpu_custom_call.1} parent=5 // pred_fallthru
        _
      %p156 = scmp.lt.s32.totalorder %s19, 2
      // Predicated region
      $region13: #{tpu_custom_call.1} parent=5 // pred_check
        %p157 = pneg %p156
      $region14: #{tpu_custom_call.1} parent=5 // pred_check_branch
        %159 = sbr.rel (%p157) target = $region16
      $region15: #{tpu_custom_call.1} parent=5 // pred_region
        // Predicated region
        $region17: #{tpu_custom_call.1} parent=15 // pred_check
          %p160 = pneg %p51
        $region18: #{tpu_custom_call.1} parent=15 // pred_check_branch
          %162 = sbr.rel (%p160) target = $region20
        $region19: #{tpu_custom_call.1} parent=15 // pred_region
          %s163 = smul.u32 4, %s27
          %p164 = scmp.lt.s32.totalorder %s163, 7
          %s165 = scalar_select %p164, %s163, 7
          %s166 = smul.addr %s165, 8
          %s167 = scalar_lea.vmem %s1, %s166
          %s168 = smul.u32 4, %s27
        $region20: #{tpu_custom_call.1} parent=15 // pred_fallthru
          _
        // Predicated region
        $region21: #{tpu_custom_call.1} parent=15 // pred_check
          %p169 = pneg %p77
        $region22: #{tpu_custom_call.1} parent=15 // pred_check_branch
          %171 = sbr.rel (%p169) target = $region24
        $region23: #{tpu_custom_call.1} parent=15 // pred_region
          %s172 = smul.u32 8, %s27
          %p173 = scmp.lt.s32.totalorder %s172, 15
          %s174 = scalar_select %p173, %s172, 15
          %s175 = smul.addr %s174, 4
          %s176 = scalar_lea.vmem %s2, %s175
          %s177 = smul.u32 8, %s27
        $region24: #{tpu_custom_call.1} parent=15 // pred_fallthru
          _
        // Predicated region
        $region25: #{tpu_custom_call.1} parent=15 // pred_check
          %p178 = pneg %p107
        $region26: #{tpu_custom_call.1} parent=15 // pred_check_branch
          %180 = sbr.rel (%p178) target = $region28
        $region27: #{tpu_custom_call.1} parent=15 // pred_region
          %s181 = sand.u32 %s97, 1
          %s182 = scalar_lea.sflag [#allocation5], %s181
          %s183 = sand.u32 %s97, 1
          %s184 = smul.addr %s183, 16
          %s185 = scalar_lea.vmem [#allocation4], %s184
          %s186 = sld [smem:[#allocation3 + %s27]]
          %s188 = ssub.s32 256, 256
          %189 = vsyncadd %s182, %s188
          %s190 = smul.addr %s26, 2
          %s191 = smul.addr %s186, 2
          %s192 = sadd.s32 %s190, %s191
          %s193 = smul.addr %s192, 128
          %s194 = scalar_lea.hbm %s3, %s193
          %s195 = sshll.u32 %s185, 4
          %s196 = int_to_ptr.vmem [resolvable:$true] %s195
          %201 = dma.hbm_to_vmem [thread:$0]  %s194, 256, %s196, %s182, 128, 128, 8
        $region28: #{tpu_custom_call.1} parent=15 // pred_fallthru
          _
      $region16: #{tpu_custom_call.1} parent=5 // pred_fallthru
        _
      %p202 = scmp.le.s32.totalorder 1, %s19
      %p203 = scmp.lt.s32.totalorder %s19, 3
      %p204 = pnand %p202, %p203
      %p205 = pneg %p204
      // Predicated region
      $region29: #{tpu_custom_call.1} parent=5 // pred_check
        _
      $region30: #{tpu_custom_call.1} parent=5 // pred_check_branch
        %207 = sbr.rel (%p204) target = $region32
      $region31: #{tpu_custom_call.1} parent=5 // pred_region
        %s208 = ssub.s32 %s19, 1
        %s209 = sand.u32 %s100, 1
        %s210 = scalar_lea.sflag [#allocation5], %s209
        %s211 = sand.u32 %s100, 1
        %s212 = smul.addr %s211, 16
        %s213 = scalar_lea.vmem [#allocation4], %s212
        // Predicated region
        $region33: #{tpu_custom_call.1} parent=31 // pred_check
          %p214 = pneg %p113
        $region34: #{tpu_custom_call.1} parent=31 // pred_check_branch
          %216 = sbr.rel (%p214) target = $region36
        $region35: #{tpu_custom_call.1} parent=31 // pred_region
          %217 = dma.done %s210, 256
        $region36: #{tpu_custom_call.1} parent=31 // pred_fallthru
          _
        %s218 = smul.u32 4, %s29
        %p219 = scmp.lt.s32.totalorder %s218, 7
        %s220 = scalar_select %p219, %s218, 7
        %s221 = smul.addr %s220, 8
        %s222 = scalar_lea.vmem %s1, %s221
        %p223 = pneg %p57
        %p224 = pneg %p54
        %s225 = smul.u32 8, %s29
        %p226 = scmp.lt.s32.totalorder %s225, 15
        %s227 = scalar_select %p226, %s225, 15
        %s228 = smul.addr %s227, 4
        %s229 = scalar_lea.vmem %s2, %s228
        %p230 = pneg %p83
        %p231 = pneg %p80
        %s232 = sand.u32 %s100, 1
        %s233 = scalar_lea.sflag [#allocation5], %s232
        %s234 = sand.u32 %s100, 1
        %s235 = smul.addr %s234, 16
        %s236 = scalar_lea.vmem [#allocation4], %s235
        %p237 = pneg %p113
        %p238 = pneg %p110
        %p239 = pneg %p141
        %p240 = pneg %p138
        %s241 = smul.u32 16, %s29
        %p242 = scmp.lt.s32.totalorder %s241, 31
        %s243 = scalar_select %p242, %s241, 31
        %p244 = scmp.lt.s32.totalorder %s28, 0
        %s245 = scalar_select %p244, %s28, 0
        %s246 = sadd.s32 %s245, %s243
        %s247 = smul.addr %s246, 8
        %s248 = scalar_lea.vmem %s4, %s247
        %s249 = smul.u32 4, %s29
        %p250 = scmp.lt.s32.totalorder %s249, 7
        %s251 = scalar_select %p250, %s249, 7
        %s252 = smul.addr %s251, 8
        %s253 = scalar_lea.vmem %s1, %s252
        %s254 = smul.u32 4, %s29
        %s255 = smul.u32 8, %s29
        %p256 = scmp.lt.s32.totalorder %s255, 15
        %s257 = scalar_select %p256, %s255, 15
        %s258 = smul.addr %s257, 4
        %s259 = scalar_lea.vmem %s2, %s258
        %s260 = smul.u32 8, %s29
        %s261 = sld [smem:[#allocation3 + %s29]]
        %s262 = smul.u32 16, %s29
        %p263 = scmp.lt.s32.totalorder %s262, 31
        %s264 = scalar_select %p263, %s262, 31
        %p265 = scmp.lt.s32.totalorder %s28, 0
        %s266 = scalar_select %p265, %s28, 0
        %s267 = sadd.s32 %s266, %s264
        %s268 = smul.addr %s267, 8
        %s269 = scalar_lea.vmem %s4, %s268
        %s270 = smul.u32 16, %s29
        %v271 = vld [vmem:[%s213] sm:$0xff]
        %v272 = vld [vmem:[%s213 + $0x8] sm:$0xff]
        %v273 = vld [vmem:[%s253] sm:$0xff]
        %v274 = vld [vmem:[%s253 + $0x8] sm:$0xff]
        %v275 = vld [vmem:[%s253 + $0x10] sm:$0xff]
        %v276 = vld [vmem:[%s253 + $0x18] sm:$0xff]
        %vm277 = vcmask 130048
        %v279 = vsel %vm277, %v273, 0
        %v282 = vsel %vm277, %v274, 0
        %v285 = vsel %vm277, %v275, 0
        %v288 = vsel %vm277, %v276, 0
        %290 = vmatprep.subr.mxu0 0.0
        %291 = vmatpush1.msra.mxu0 %v271
        %292 = vmatprep.subr.mxu0 0.0
        %293 = vmatpush1.msra.mxu0 %v272
        %294 = vmatprep.subr.mxu0 0.0
        %295 = vmatpush1.msra.mxu0 0.0
        %296 = vmatprep.subr.mxu0 0.0
        %297 = vmatpush1.msra.mxu0 0.0
        %298 = vmatprep.subr.mxu0 0.0
        %299 = vmatpush1.msra.mxu0 0.0
        %300 = vmatprep.subr.mxu0 0.0
        %301 = vmatpush1.msra.mxu0 0.0
        %302 = vmatprep.subr.mxu0 0.0
        %303 = vmatpush1.msra.mxu0 0.0
        %304 = vmatprep.subr.mxu0 0.0
        %305 = vmatpush1.msra.mxu0 0.0
        %306 = vmatprep.subr.mxu0 0.0
        %307 = vmatpush1.msra.mxu0 0.0
        %308 = vmatprep.subr.mxu0 0.0
        %309 = vmatpush1.msra.mxu0 0.0
        %310 = vmatprep.subr.mxu0 0.0
        %311 = vmatpush1.msra.mxu0 0.0
        %312 = vmatprep.subr.mxu0 0.0
        %313 = vmatpush1.msra.mxu0 0.0
        %314 = vmatprep.subr.mxu0 0.0
        %315 = vmatpush1.msra.mxu0 0.0
        %316 = vmatprep.subr.mxu0 0.0
        %317 = vmatpush1.msra.mxu0 0.0
        %318 = vmatprep.subr.mxu0 0.0
        %319 = vmatpush1.msra.mxu0 0.0
        %320 = vmatprep.subr.mxu0 0.0
        %321 = vmatpush1.msra.mxu0 0.0
        %322 = vmatprep.subr.mxu0 0.0
        %323 = vmatpush1.msra.mxu0 0.0
        %324 = vmatprep.subr.mxu0 0.0
        %325 = vmatpush1.msra.mxu0 0.0
        %326 = vmatprep.subr.mxu0 0.0
        %327 = vmatpush1.msra.mxu0 0.0
        %328 = vmatprep.subr.mxu0 0.0
        %329 = vmatpush1.msra.mxu0 0.0
        %330 = vmatprep.subr.mxu0 0.0
        %331 = vmatpush1.msra.mxu0 0.0
        %332 = vmatprep.subr.mxu0 0.0
        %333 = vmatpush1.msra.mxu0 0.0
        %334 = vmatprep.subr.mxu0 0.0
        %335 = vmatpush1.msra.mxu0 0.0
        %336 = vmatprep.subr.mxu0 0.0
        %337 = vmatpush1.msra.mxu0 0.0
        %338 = vmatprep.subr.mxu0 0.0
        %339 = vmatpush1.msra.mxu0 0.0
        %340 = vmatprep.subr.mxu0 0.0
        %341 = vmatpush1.msra.mxu0 0.0
        %342 = vmatprep.subr.mxu0 0.0
        %343 = vmatpush1.msra.mxu0 0.0
        %344 = vmatprep.subr.mxu0 0.0
        %345 = vmatpush1.msra.mxu0 0.0
        %346 = vmatprep.subr.mxu0 0.0
        %347 = vmatpush1.msra.mxu0 0.0
        %348 = vmatprep.subr.mxu0 0.0
        %349 = vmatpush1.msra.mxu0 0.0
        %350 = vmatprep.subr.mxu0 0.0
        %351 = vmatpush1.msra.mxu0 0.0
        %352 = vmatprep.subr.mxu0 0.0
        %353 = vmatpush1.msra.mxu0 0.0
        %354 = vmatprep.mubr.f32.mxu0 0.0
        %355 = vmatmul.mubr.f32.gmra.mrb[0].mxu0 %v279
        %v356 = vpop.f32.mrb[0].mxu0
        %v357 = vadd.f32 0.0, %v356
        %v358 = vpop.f32.mrb[0].mxu0
        %359 = vmatprep.mubr.f32.mxu0 0.0
        %360 = vmatmul.mubr.f32.gmra.mrb[0].mxu0 %v282
        %v361 = vpop.f32.mrb[0].mxu0
        %v362 = vadd.f32 0.0, %v361
        %v363 = vpop.f32.mrb[0].mxu0
        %364 = vmatprep.mubr.f32.mxu0 0.0
        %365 = vmatmul.mubr.f32.gmra.mrb[0].mxu0 %v285
        %v366 = vpop.f32.mrb[0].mxu0
        %v367 = vadd.f32 0.0, %v366
        %v368 = vpop.f32.mrb[0].mxu0
        %369 = vmatprep.mubr.f32.mxu0 0.0
        %370 = vmatmul.mubr.f32.gmra.mrb[0].mxu0 %v288
        %v371 = vpop.f32.mrb[0].mxu0
        %v372 = vadd.f32 0.0, %v371
        %v373 = vpop.f32.mrb[0].mxu0
        %374 = vdwg.mxu0
        %379 = vrot.lane.b32.xlu0 %v357, 124
        %v380 = vpop.permute.xlu0 %379
        %381 = vrot.lane.b32.xlu0 %v362, 124
        %v382 = vpop.permute.xlu0 %381
        %383 = vrot.lane.b32.xlu0 %v367, 124
        %v384 = vpop.permute.xlu0 %383
        %385 = vrot.lane.b32.xlu0 %v372, 124
        %v386 = vpop.permute.xlu0 %385
        %391 = vrot.lane.b32.xlu0 %v357, 120
        %v392 = vpop.permute.xlu0 %391
        %393 = vrot.lane.b32.xlu0 %v362, 120
        %v394 = vpop.permute.xlu0 %393
        %395 = vrot.lane.b32.xlu0 %v367, 120
        %v396 = vpop.permute.xlu0 %395
        %397 = vrot.lane.b32.xlu0 %v372, 120
        %v398 = vpop.permute.xlu0 %397
        %403 = vrot.lane.b32.xlu0 %v357, 116
        %v404 = vpop.permute.xlu0 %403
        %405 = vrot.lane.b32.xlu0 %v362, 116
        %v406 = vpop.permute.xlu0 %405
        %407 = vrot.lane.b32.xlu0 %v367, 116
        %v408 = vpop.permute.xlu0 %407
        %409 = vrot.lane.b32.xlu0 %v372, 116
        %v410 = vpop.permute.xlu0 %409
        %415 = vrot.lane.b32.xlu0 %v357, 112
        %v416 = vpop.permute.xlu0 %415
        %417 = vrot.lane.b32.xlu0 %v362, 112
        %v418 = vpop.permute.xlu0 %417
        %419 = vrot.lane.b32.xlu0 %v367, 112
        %v420 = vpop.permute.xlu0 %419
        %421 = vrot.lane.b32.xlu0 %v372, 112
        %v422 = vpop.permute.xlu0 %421
        %427 = vrot.lane.b32.xlu0 %v357, 108
        %v428 = vpop.permute.xlu0 %427
        %429 = vrot.lane.b32.xlu0 %v362, 108
        %v430 = vpop.permute.xlu0 %429
        %431 = vrot.lane.b32.xlu0 %v367, 108
        %v432 = vpop.permute.xlu0 %431
        %433 = vrot.lane.b32.xlu0 %v372, 108
        %v434 = vpop.permute.xlu0 %433
        %439 = vrot.lane.b32.xlu0 %v357, 104
        %v440 = vpop.permute.xlu0 %439
        %441 = vrot.lane.b32.xlu0 %v362, 104
        %v442 = vpop.permute.xlu0 %441
        %443 = vrot.lane.b32.xlu0 %v367, 104
        %v444 = vpop.permute.xlu0 %443
        %445 = vrot.lane.b32.xlu0 %v372, 104
        %v446 = vpop.permute.xlu0 %445
        %451 = vrot.lane.b32.xlu0 %v357, 100
        %v452 = vpop.permute.xlu0 %451
        %453 = vrot.lane.b32.xlu0 %v362, 100
        %v454 = vpop.permute.xlu0 %453
        %455 = vrot.lane.b32.xlu0 %v367, 100
        %v456 = vpop.permute.xlu0 %455
        %457 = vrot.lane.b32.xlu0 %v372, 100
        %v458 = vpop.permute.xlu0 %457
        %463 = vrot.lane.b32.xlu0 %v357, 96
        %v464 = vpop.permute.xlu0 %463
        %465 = vrot.lane.b32.xlu0 %v362, 96
        %v466 = vpop.permute.xlu0 %465
        %467 = vrot.lane.b32.xlu0 %v367, 96
        %v468 = vpop.permute.xlu0 %467
        %469 = vrot.lane.b32.xlu0 %v372, 96
        %v470 = vpop.permute.xlu0 %469
        %475 = vrot.lane.b32.xlu0 %v357, 92
        %v476 = vpop.permute.xlu0 %475
        %477 = vrot.lane.b32.xlu0 %v362, 92
        %v478 = vpop.permute.xlu0 %477
        %479 = vrot.lane.b32.xlu0 %v367, 92
        %v480 = vpop.permute.xlu0 %479
        %481 = vrot.lane.b32.xlu0 %v372, 92
        %v482 = vpop.permute.xlu0 %481
        %487 = vrot.lane.b32.xlu0 %v357, 88
        %v488 = vpop.permute.xlu0 %487
        %489 = vrot.lane.b32.xlu0 %v362, 88
        %v490 = vpop.permute.xlu0 %489
        %491 = vrot.lane.b32.xlu0 %v367, 88
        %v492 = vpop.permute.xlu0 %491
        %493 = vrot.lane.b32.xlu0 %v372, 88
        %v494 = vpop.permute.xlu0 %493
        %499 = vrot.lane.b32.xlu0 %v357, 84
        %v500 = vpop.permute.xlu0 %499
        %501 = vrot.lane.b32.xlu0 %v362, 84
        %v502 = vpop.permute.xlu0 %501
        %503 = vrot.lane.b32.xlu0 %v367, 84
        %v504 = vpop.permute.xlu0 %503
        %505 = vrot.lane.b32.xlu0 %v372, 84
        %v506 = vpop.permute.xlu0 %505
        %511 = vrot.lane.b32.xlu0 %v357, 80
        %v512 = vpop.permute.xlu0 %511
        %513 = vrot.lane.b32.xlu0 %v362, 80
        %v514 = vpop.permute.xlu0 %513
        %515 = vrot.lane.b32.xlu0 %v367, 80
        %v516 = vpop.permute.xlu0 %515
        %517 = vrot.lane.b32.xlu0 %v372, 80
        %v518 = vpop.permute.xlu0 %517
        %523 = vrot.lane.b32.xlu0 %v357, 76
        %v524 = vpop.permute.xlu0 %523
        %525 = vrot.lane.b32.xlu0 %v362, 76
        %v526 = vpop.permute.xlu0 %525
        %527 = vrot.lane.b32.xlu0 %v367, 76
        %v528 = vpop.permute.xlu0 %527
        %529 = vrot.lane.b32.xlu0 %v372, 76
        %v530 = vpop.permute.xlu0 %529
        %535 = vrot.lane.b32.xlu0 %v357, 72
        %v536 = vpop.permute.xlu0 %535
        %537 = vrot.lane.b32.xlu0 %v362, 72
        %v538 = vpop.permute.xlu0 %537
        %539 = vrot.lane.b32.xlu0 %v367, 72
        %v540 = vpop.permute.xlu0 %539
        %541 = vrot.lane.b32.xlu0 %v372, 72
        %v542 = vpop.permute.xlu0 %541
        %547 = vrot.lane.b32.xlu0 %v357, 68
        %v548 = vpop.permute.xlu0 %547
        %549 = vrot.lane.b32.xlu0 %v362, 68
        %v550 = vpop.permute.xlu0 %549
        %551 = vrot.lane.b32.xlu0 %v367, 68
        %v552 = vpop.permute.xlu0 %551
        %553 = vrot.lane.b32.xlu0 %v372, 68
        %v554 = vpop.permute.xlu0 %553
        %v559 = vcombine.low %v357, %v392
        %v560 = vcombine.high %v357, %v392
        %v562 = vunpack.c.l.s4 1983009808
        %v563 = vunpack.c.0.s8 %v562
        %v564 = vlaneseq
        %v565 = vshrl.u32 %v564, 7
        %v566 = vsub.s32 %v563, %v565
        %v567 = vrot.slane %v559, %v566
        %v569 = vunpack.c.l.s4 1983009808
        %v570 = vunpack.c.0.s8 %v569
        %v571 = vlaneseq
        %v572 = vshrl.u32 %v571, 7
        %v573 = vsub.s32 %v570, %v572
        %v574 = vrot.slane %v560, %v573
        %v575 = vcombine.low %v380, %v404
        %v576 = vcombine.high %v380, %v404
        %v578 = vunpack.c.l.s4 1983009808
        %v579 = vunpack.c.0.s8 %v578
        %v580 = vlaneseq
        %v581 = vshrl.u32 %v580, 7
        %v582 = vsub.s32 %v579, %v581
        %v583 = vrot.slane %v575, %v582
        %v585 = vunpack.c.l.s4 1983009808
        %v586 = vunpack.c.0.s8 %v585
        %v587 = vlaneseq
        %v588 = vshrl.u32 %v587, 7
        %v589 = vsub.s32 %v586, %v588
        %v590 = vrot.slane %v576, %v589
        %v591 = vcombine.low %v416, %v440
        %v592 = vcombine.high %v416, %v440
        %v594 = vunpack.c.l.s4 1983009808
        %v595 = vunpack.c.0.s8 %v594
        %v596 = vlaneseq
        %v597 = vshrl.u32 %v596, 7
        %v598 = vsub.s32 %v595, %v597
        %v599 = vrot.slane %v591, %v598
        %v601 = vunpack.c.l.s4 1983009808
        %v602 = vunpack.c.0.s8 %v601
        %v603 = vlaneseq
        %v604 = vshrl.u32 %v603, 7
        %v605 = vsub.s32 %v602, %v604
        %v606 = vrot.slane %v592, %v605
        %v607 = vcombine.low %v428, %v452
        %v608 = vcombine.high %v428, %v452
        %v610 = vunpack.c.l.s4 1983009808
        %v611 = vunpack.c.0.s8 %v610
        %v612 = vlaneseq
        %v613 = vshrl.u32 %v612, 7
        %v614 = vsub.s32 %v611, %v613
        %v615 = vrot.slane %v607, %v614
        %v617 = vunpack.c.l.s4 1983009808
        %v618 = vunpack.c.0.s8 %v617
        %v619 = vlaneseq
        %v620 = vshrl.u32 %v619, 7
        %v621 = vsub.s32 %v618, %v620
        %v622 = vrot.slane %v608, %v621
        %v623 = vcombine.low %v567, %v583
        %v624 = vcombine.high %v567, %v583
        %v626 = vunpack.c.l.s4 1934713408
        %v627 = vunpack.c.0.s8 %v626
        %v628 = vlaneseq
        %v629 = vshrl.u32 %v628, 7
        %v630 = vsub.s32 %v627, %v629
        %v631 = vrot.slane %v623, %v630
        %v633 = vunpack.c.l.s4 1934713408
        %v634 = vunpack.c.0.s8 %v633
        %v635 = vlaneseq
        %v636 = vshrl.u32 %v635, 7
        %v637 = vsub.s32 %v634, %v636
        %v638 = vrot.slane %v624, %v637
        %v639 = vcombine.low %v574, %v590
        %v640 = vcombine.high %v574, %v590
        %v642 = vunpack.c.l.s4 1934713408
        %v643 = vunpack.c.0.s8 %v642
        %v644 = vlaneseq
        %v645 = vshrl.u32 %v644, 7
        %v646 = vsub.s32 %v643, %v645
        %v647 = vrot.slane %v639, %v646
        %v649 = vunpack.c.l.s4 1934713408
        %v650 = vunpack.c.0.s8 %v649
        %v651 = vlaneseq
        %v652 = vshrl.u32 %v651, 7
        %v653 = vsub.s32 %v650, %v652
        %v654 = vrot.slane %v640, %v653
        %v655 = vcombine.low %v599, %v615
        %v656 = vcombine.high %v599, %v615
        %v658 = vunpack.c.l.s4 1934713408
        %v659 = vunpack.c.0.s8 %v658
        %v660 = vlaneseq
        %v661 = vshrl.u32 %v660, 7
        %v662 = vsub.s32 %v659, %v661
        %v663 = vrot.slane %v655, %v662
        %v665 = vunpack.c.l.s4 1934713408
        %v666 = vunpack.c.0.s8 %v665
        %v667 = vlaneseq
        %v668 = vshrl.u32 %v667, 7
        %v669 = vsub.s32 %v666, %v668
        %v670 = vrot.slane %v656, %v669
        %v671 = vcombine.low %v606, %v622
        %v672 = vcombine.high %v606, %v622
        %v674 = vunpack.c.l.s4 1934713408
        %v675 = vunpack.c.0.s8 %v674
        %v676 = vlaneseq
        %v677 = vshrl.u32 %v676, 7
        %v678 = vsub.s32 %v675, %v677
        %v679 = vrot.slane %v671, %v678
        %v681 = vunpack.c.l.s4 1934713408
        %v682 = vunpack.c.0.s8 %v681
        %v683 = vlaneseq
        %v684 = vshrl.u32 %v683, 7
        %v685 = vsub.s32 %v682, %v684
        %v686 = vrot.slane %v672, %v685
        %v687 = vcombine.low %v631, %v663
        %v688 = vcombine.high %v631, %v663
        %v689 = vcombine.low %v638, %v670
        %v690 = vcombine.high %v638, %v670
        %v691 = vcombine.low %v647, %v679
        %v692 = vcombine.high %v647, %v679
        %v693 = vcombine.low %v654, %v686
        %v694 = vcombine.high %v654, %v686
        %v695 = vcombine.low %v464, %v488
        %v696 = vcombine.high %v464, %v488
        %v698 = vunpack.c.l.s4 1983009808
        %v699 = vunpack.c.0.s8 %v698
        %v700 = vlaneseq
        %v701 = vshrl.u32 %v700, 7
        %v702 = vsub.s32 %v699, %v701
        %v703 = vrot.slane %v695, %v702
        %v705 = vunpack.c.l.s4 1983009808
        %v706 = vunpack.c.0.s8 %v705
        %v707 = vlaneseq
        %v708 = vshrl.u32 %v707, 7
        %v709 = vsub.s32 %v706, %v708
        %v710 = vrot.slane %v696, %v709
        %v711 = vcombine.low %v476, %v500
        %v712 = vcombine.high %v476, %v500
        %v714 = vunpack.c.l.s4 1983009808
        %v715 = vunpack.c.0.s8 %v714
        %v716 = vlaneseq
        %v717 = vshrl.u32 %v716, 7
        %v718 = vsub.s32 %v715, %v717
        %v719 = vrot.slane %v711, %v718
        %v721 = vunpack.c.l.s4 1983009808
        %v722 = vunpack.c.0.s8 %v721
        %v723 = vlaneseq
        %v724 = vshrl.u32 %v723, 7
        %v725 = vsub.s32 %v722, %v724
        %v726 = vrot.slane %v712, %v725
        %v727 = vcombine.low %v512, %v536
        %v728 = vcombine.high %v512, %v536
        %v730 = vunpack.c.l.s4 1983009808
        %v731 = vunpack.c.0.s8 %v730
        %v732 = vlaneseq
        %v733 = vshrl.u32 %v732, 7
        %v734 = vsub.s32 %v731, %v733
        %v735 = vrot.slane %v727, %v734
        %v737 = vunpack.c.l.s4 1983009808
        %v738 = vunpack.c.0.s8 %v737
        %v739 = vlaneseq
        %v740 = vshrl.u32 %v739, 7
        %v741 = vsub.s32 %v738, %v740
        %v742 = vrot.slane %v728, %v741
        %v743 = vcombine.low %v524, %v548
        %v744 = vcombine.high %v524, %v548
        %v746 = vunpack.c.l.s4 1983009808
        %v747 = vunpack.c.0.s8 %v746
        %v748 = vlaneseq
        %v749 = vshrl.u32 %v748, 7
        %v750 = vsub.s32 %v747, %v749
        %v751 = vrot.slane %v743, %v750
        %v753 = vunpack.c.l.s4 1983009808
        %v754 = vunpack.c.0.s8 %v753
        %v755 = vlaneseq
        %v756 = vshrl.u32 %v755, 7
        %v757 = vsub.s32 %v754, %v756
        %v758 = vrot.slane %v744, %v757
        %v759 = vcombine.low %v703, %v719
        %v760 = vcombine.high %v703, %v719
        %v762 = vunpack.c.l.s4 1934713408
        %v763 = vunpack.c.0.s8 %v762
        %v764 = vlaneseq
        %v765 = vshrl.u32 %v764, 7
        %v766 = vsub.s32 %v763, %v765
        %v767 = vrot.slane %v759, %v766
        %v769 = vunpack.c.l.s4 1934713408
        %v770 = vunpack.c.0.s8 %v769
        %v771 = vlaneseq
        %v772 = vshrl.u32 %v771, 7
        %v773 = vsub.s32 %v770, %v772
        %v774 = vrot.slane %v760, %v773
        %v775 = vcombine.low %v710, %v726
        %v776 = vcombine.high %v710, %v726
        %v778 = vunpack.c.l.s4 1934713408
        %v779 = vunpack.c.0.s8 %v778
        %v780 = vlaneseq
        %v781 = vshrl.u32 %v780, 7
        %v782 = vsub.s32 %v779, %v781
        %v783 = vrot.slane %v775, %v782
        %v785 = vunpack.c.l.s4 1934713408
        %v786 = vunpack.c.0.s8 %v785
        %v787 = vlaneseq
        %v788 = vshrl.u32 %v787, 7
        %v789 = vsub.s32 %v786, %v788
        %v790 = vrot.slane %v776, %v789
        %v791 = vcombine.low %v735, %v751
        %v792 = vcombine.high %v735, %v751
        %v794 = vunpack.c.l.s4 1934713408
        %v795 = vunpack.c.0.s8 %v794
        %v796 = vlaneseq
        %v797 = vshrl.u32 %v796, 7
        %v798 = vsub.s32 %v795, %v797
        %v799 = vrot.slane %v791, %v798
        %v801 = vunpack.c.l.s4 1934713408
        %v802 = vunpack.c.0.s8 %v801
        %v803 = vlaneseq
        %v804 = vshrl.u32 %v803, 7
        %v805 = vsub.s32 %v802, %v804
        %v806 = vrot.slane %v792, %v805
        %v807 = vcombine.low %v742, %v758
        %v808 = vcombine.high %v742, %v758
        %v810 = vunpack.c.l.s4 1934713408
        %v811 = vunpack.c.0.s8 %v810
        %v812 = vlaneseq
        %v813 = vshrl.u32 %v812, 7
        %v814 = vsub.s32 %v811, %v813
        %v815 = vrot.slane %v807, %v814
        %v817 = vunpack.c.l.s4 1934713408
        %v818 = vunpack.c.0.s8 %v817
        %v819 = vlaneseq
        %v820 = vshrl.u32 %v819, 7
        %v821 = vsub.s32 %v818, %v820
        %v822 = vrot.slane %v808, %v821
        %v823 = vcombine.low %v767, %v799
        %v824 = vcombine.high %v767, %v799
        %v825 = vcombine.low %v774, %v806
        %v826 = vcombine.high %v774, %v806
        %v827 = vcombine.low %v783, %v815
        %v828 = vcombine.high %v783, %v815
        %v829 = vcombine.low %v790, %v822
        %v830 = vcombine.high %v790, %v822
        %v831 = vcombine.low %v362, %v394
        %v832 = vcombine.high %v362, %v394
        %v834 = vunpack.c.l.s4 1983009808
        %v835 = vunpack.c.0.s8 %v834
        %v836 = vlaneseq
        %v837 = vshrl.u32 %v836, 7
        %v838 = vsub.s32 %v835, %v837
        %v839 = vrot.slane %v831, %v838
        %v841 = vunpack.c.l.s4 1983009808
        %v842 = vunpack.c.0.s8 %v841
        %v843 = vlaneseq
        %v844 = vshrl.u32 %v843, 7
        %v845 = vsub.s32 %v842, %v844
        %v846 = vrot.slane %v832, %v845
        %v847 = vcombine.low %v382, %v406
        %v848 = vcombine.high %v382, %v406
        %v850 = vunpack.c.l.s4 1983009808
        %v851 = vunpack.c.0.s8 %v850
        %v852 = vlaneseq
        %v853 = vshrl.u32 %v852, 7
        %v854 = vsub.s32 %v851, %v853
        %v855 = vrot.slane %v847, %v854
        %v857 = vunpack.c.l.s4 1983009808
        %v858 = vunpack.c.0.s8 %v857
        %v859 = vlaneseq
        %v860 = vshrl.u32 %v859, 7
        %v861 = vsub.s32 %v858, %v860
        %v862 = vrot.slane %v848, %v861
        %v863 = vcombine.low %v418, %v442
        %v864 = vcombine.high %v418, %v442
        %v866 = vunpack.c.l.s4 1983009808
        %v867 = vunpack.c.0.s8 %v866
        %v868 = vlaneseq
        %v869 = vshrl.u32 %v868, 7
        %v870 = vsub.s32 %v867, %v869
        %v871 = vrot.slane %v863, %v870
        %v873 = vunpack.c.l.s4 1983009808
        %v874 = vunpack.c.0.s8 %v873
        %v875 = vlaneseq
        %v876 = vshrl.u32 %v875, 7
        %v877 = vsub.s32 %v874, %v876
        %v878 = vrot.slane %v864, %v877
        %v879 = vcombine.low %v430, %v454
        %v880 = vcombine.high %v430, %v454
        %v882 = vunpack.c.l.s4 1983009808
        %v883 = vunpack.c.0.s8 %v882
        %v884 = vlaneseq
        %v885 = vshrl.u32 %v884, 7
        %v886 = vsub.s32 %v883, %v885
        %v887 = vrot.slane %v879, %v886
        %v889 = vunpack.c.l.s4 1983009808
        %v890 = vunpack.c.0.s8 %v889
        %v891 = vlaneseq
        %v892 = vshrl.u32 %v891, 7
        %v893 = vsub.s32 %v890, %v892
        %v894 = vrot.slane %v880, %v893
        %v895 = vcombine.low %v839, %v855
        %v896 = vcombine.high %v839, %v855
        %v898 = vunpack.c.l.s4 1934713408
        %v899 = vunpack.c.0.s8 %v898
        %v900 = vlaneseq
        %v901 = vshrl.u32 %v900, 7
        %v902 = vsub.s32 %v899, %v901
        %v903 = vrot.slane %v895, %v902
        %v905 = vunpack.c.l.s4 1934713408
        %v906 = vunpack.c.0.s8 %v905
        %v907 = vlaneseq
        %v908 = vshrl.u32 %v907, 7
        %v909 = vsub.s32 %v906, %v908
        %v910 = vrot.slane %v896, %v909
        %v911 = vcombine.low %v846, %v862
        %v912 = vcombine.high %v846, %v862
        %v914 = vunpack.c.l.s4 1934713408
        %v915 = vunpack.c.0.s8 %v914
        %v916 = vlaneseq
        %v917 = vshrl.u32 %v916, 7
        %v918 = vsub.s32 %v915, %v917
        %v919 = vrot.slane %v911, %v918
        %v921 = vunpack.c.l.s4 1934713408
        %v922 = vunpack.c.0.s8 %v921
        %v923 = vlaneseq
        %v924 = vshrl.u32 %v923, 7
        %v925 = vsub.s32 %v922, %v924
        %v926 = vrot.slane %v912, %v925
        %v927 = vcombine.low %v871, %v887
        %v928 = vcombine.high %v871, %v887
        %v930 = vunpack.c.l.s4 1934713408
        %v931 = vunpack.c.0.s8 %v930
        %v932 = vlaneseq
        %v933 = vshrl.u32 %v932, 7
        %v934 = vsub.s32 %v931, %v933
        %v935 = vrot.slane %v927, %v934
        %v937 = vunpack.c.l.s4 1934713408
        %v938 = vunpack.c.0.s8 %v937
        %v939 = vlaneseq
        %v940 = vshrl.u32 %v939, 7
        %v941 = vsub.s32 %v938, %v940
        %v942 = vrot.slane %v928, %v941
        %v943 = vcombine.low %v878, %v894
        %v944 = vcombine.high %v878, %v894
        %v946 = vunpack.c.l.s4 1934713408
        %v947 = vunpack.c.0.s8 %v946
        %v948 = vlaneseq
        %v949 = vshrl.u32 %v948, 7
        %v950 = vsub.s32 %v947, %v949
        %v951 = vrot.slane %v943, %v950
        %v953 = vunpack.c.l.s4 1934713408
        %v954 = vunpack.c.0.s8 %v953
        %v955 = vlaneseq
        %v956 = vshrl.u32 %v955, 7
        %v957 = vsub.s32 %v954, %v956
        %v958 = vrot.slane %v944, %v957
        %v959 = vcombine.low %v903, %v935
        %v960 = vcombine.high %v903, %v935
        %v961 = vcombine.low %v910, %v942
        %v962 = vcombine.high %v910, %v942
        %v963 = vcombine.low %v919, %v951
        %v964 = vcombine.high %v919, %v951
        %v965 = vcombine.low %v926, %v958
        %v966 = vcombine.high %v926, %v958
        %v967 = vcombine.low %v466, %v490
        %v968 = vcombine.high %v466, %v490
        %v970 = vunpack.c.l.s4 1983009808
        %v971 = vunpack.c.0.s8 %v970
        %v972 = vlaneseq
        %v973 = vshrl.u32 %v972, 7
        %v974 = vsub.s32 %v971, %v973
        %v975 = vrot.slane %v967, %v974
        %v977 = vunpack.c.l.s4 1983009808
        %v978 = vunpack.c.0.s8 %v977
        %v979 = vlaneseq
        %v980 = vshrl.u32 %v979, 7
        %v981 = vsub.s32 %v978, %v980
        %v982 = vrot.slane %v968, %v981
        %v983 = vcombine.low %v478, %v502
        %v984 = vcombine.high %v478, %v502
        %v986 = vunpack.c.l.s4 1983009808
        %v987 = vunpack.c.0.s8 %v986
        %v988 = vlaneseq
        %v989 = vshrl.u32 %v988, 7
        %v990 = vsub.s32 %v987, %v989
        %v991 = vrot.slane %v983, %v990
        %v993 = vunpack.c.l.s4 1983009808
        %v994 = vunpack.c.0.s8 %v993
        %v995 = vlaneseq
        %v996 = vshrl.u32 %v995, 7
        %v997 = vsub.s32 %v994, %v996
        %v998 = vrot.slane %v984, %v997
        %v999 = vcombine.low %v514, %v538
        %v1000 = vcombine.high %v514, %v538
        %v1002 = vunpack.c.l.s4 1983009808
        %v1003 = vunpack.c.0.s8 %v1002
        %v1004 = vlaneseq
        %v1005 = vshrl.u32 %v1004, 7
        %v1006 = vsub.s32 %v1003, %v1005
        %v1007 = vrot.slane %v999, %v1006
        %v1009 = vunpack.c.l.s4 1983009808
        %v1010 = vunpack.c.0.s8 %v1009
        %v1011 = vlaneseq
        %v1012 = vshrl.u32 %v1011, 7
        %v1013 = vsub.s32 %v1010, %v1012
        %v1014 = vrot.slane %v1000, %v1013
        %v1015 = vcombine.low %v526, %v550
        %v1016 = vcombine.high %v526, %v550
        %v1018 = vunpack.c.l.s4 1983009808
        %v1019 = vunpack.c.0.s8 %v1018
        %v1020 = vlaneseq
        %v1021 = vshrl.u32 %v1020, 7
        %v1022 = vsub.s32 %v1019, %v1021
        %v1023 = vrot.slane %v1015, %v1022
        %v1025 = vunpack.c.l.s4 1983009808
        %v1026 = vunpack.c.0.s8 %v1025
        %v1027 = vlaneseq
        %v1028 = vshrl.u32 %v1027, 7
        %v1029 = vsub.s32 %v1026, %v1028
        %v1030 = vrot.slane %v1016, %v1029
        %v1031 = vcombine.low %v975, %v991
        %v1032 = vcombine.high %v975, %v991
        %v1034 = vunpack.c.l.s4 1934713408
        %v1035 = vunpack.c.0.s8 %v1034
        %v1036 = vlaneseq
        %v1037 = vshrl.u32 %v1036, 7
        %v1038 = vsub.s32 %v1035, %v1037
        %v1039 = vrot.slane %v1031, %v1038
        %v1041 = vunpack.c.l.s4 1934713408
        %v1042 = vunpack.c.0.s8 %v1041
        %v1043 = vlaneseq
        %v1044 = vshrl.u32 %v1043, 7
        %v1045 = vsub.s32 %v1042, %v1044
        %v1046 = vrot.slane %v1032, %v1045
        %v1047 = vcombine.low %v982, %v998
        %v1048 = vcombine.high %v982, %v998
        %v1050 = vunpack.c.l.s4 1934713408
        %v1051 = vunpack.c.0.s8 %v1050
        %v1052 = vlaneseq
        %v1053 = vshrl.u32 %v1052, 7
        %v1054 = vsub.s32 %v1051, %v1053
        %v1055 = vrot.slane %v1047, %v1054
        %v1057 = vunpack.c.l.s4 1934713408
        %v1058 = vunpack.c.0.s8 %v1057
        %v1059 = vlaneseq
        %v1060 = vshrl.u32 %v1059, 7
        %v1061 = vsub.s32 %v1058, %v1060
        %v1062 = vrot.slane %v1048, %v1061
        %v1063 = vcombine.low %v1007, %v1023
        %v1064 = vcombine.high %v1007, %v1023
        %v1066 = vunpack.c.l.s4 1934713408
        %v1067 = vunpack.c.0.s8 %v1066
        %v1068 = vlaneseq
        %v1069 = vshrl.u32 %v1068, 7
        %v1070 = vsub.s32 %v1067, %v1069
        %v1071 = vrot.slane %v1063, %v1070
        %v1073 = vunpack.c.l.s4 1934713408
        %v1074 = vunpack.c.0.s8 %v1073
        %v1075 = vlaneseq
        %v1076 = vshrl.u32 %v1075, 7
        %v1077 = vsub.s32 %v1074, %v1076
        %v1078 = vrot.slane %v1064, %v1077
        %v1079 = vcombine.low %v1014, %v1030
        %v1080 = vcombine.high %v1014, %v1030
        %v1082 = vunpack.c.l.s4 1934713408
        %v1083 = vunpack.c.0.s8 %v1082
        %v1084 = vlaneseq
        %v1085 = vshrl.u32 %v1084, 7
        %v1086 = vsub.s32 %v1083, %v1085
        %v1087 = vrot.slane %v1079, %v1086
        %v1089 = vunpack.c.l.s4 1934713408
        %v1090 = vunpack.c.0.s8 %v1089
        %v1091 = vlaneseq
        %v1092 = vshrl.u32 %v1091, 7
        %v1093 = vsub.s32 %v1090, %v1092
        %v1094 = vrot.slane %v1080, %v1093
        %v1095 = vcombine.low %v1039, %v1071
        %v1096 = vcombine.high %v1039, %v1071
        %v1097 = vcombine.low %v1046, %v1078
        %v1098 = vcombine.high %v1046, %v1078
        %v1099 = vcombine.low %v1055, %v1087
        %v1100 = vcombine.high %v1055, %v1087
        %v1101 = vcombine.low %v1062, %v1094
        %v1102 = vcombine.high %v1062, %v1094
        %v1103 = vcombine.low %v367, %v396
        %v1104 = vcombine.high %v367, %v396
        %v1106 = vunpack.c.l.s4 1983009808
        %v1107 = vunpack.c.0.s8 %v1106
        %v1108 = vlaneseq
        %v1109 = vshrl.u32 %v1108, 7
        %v1110 = vsub.s32 %v1107, %v1109
        %v1111 = vrot.slane %v1103, %v1110
        %v1113 = vunpack.c.l.s4 1983009808
        %v1114 = vunpack.c.0.s8 %v1113
        %v1115 = vlaneseq
        %v1116 = vshrl.u32 %v1115, 7
        %v1117 = vsub.s32 %v1114, %v1116
        %v1118 = vrot.slane %v1104, %v1117
        %v1119 = vcombine.low %v384, %v408
        %v1120 = vcombine.high %v384, %v408
        %v1122 = vunpack.c.l.s4 1983009808
        %v1123 = vunpack.c.0.s8 %v1122
        %v1124 = vlaneseq
        %v1125 = vshrl.u32 %v1124, 7
        %v1126 = vsub.s32 %v1123, %v1125
        %v1127 = vrot.slane %v1119, %v1126
        %v1129 = vunpack.c.l.s4 1983009808
        %v1130 = vunpack.c.0.s8 %v1129
        %v1131 = vlaneseq
        %v1132 = vshrl.u32 %v1131, 7
        %v1133 = vsub.s32 %v1130, %v1132
        %v1134 = vrot.slane %v1120, %v1133
        %v1135 = vcombine.low %v420, %v444
        %v1136 = vcombine.high %v420, %v444
        %v1138 = vunpack.c.l.s4 1983009808
        %v1139 = vunpack.c.0.s8 %v1138
        %v1140 = vlaneseq
        %v1141 = vshrl.u32 %v1140, 7
        %v1142 = vsub.s32 %v1139, %v1141
        %v1143 = vrot.slane %v1135, %v1142
        %v1145 = vunpack.c.l.s4 1983009808
        %v1146 = vunpack.c.0.s8 %v1145
        %v1147 = vlaneseq
        %v1148 = vshrl.u32 %v1147, 7
        %v1149 = vsub.s32 %v1146, %v1148
        %v1150 = vrot.slane %v1136, %v1149
        %v1151 = vcombine.low %v432, %v456
        %v1152 = vcombine.high %v432, %v456
        %v1154 = vunpack.c.l.s4 1983009808
        %v1155 = vunpack.c.0.s8 %v1154
        %v1156 = vlaneseq
        %v1157 = vshrl.u32 %v1156, 7
        %v1158 = vsub.s32 %v1155, %v1157
        %v1159 = vrot.slane %v1151, %v1158
        %v1161 = vunpack.c.l.s4 1983009808
        %v1162 = vunpack.c.0.s8 %v1161
        %v1163 = vlaneseq
        %v1164 = vshrl.u32 %v1163, 7
        %v1165 = vsub.s32 %v1162, %v1164
        %v1166 = vrot.slane %v1152, %v1165
        %v1167 = vcombine.low %v1111, %v1127
        %v1168 = vcombine.high %v1111, %v1127
        %v1170 = vunpack.c.l.s4 1934713408
        %v1171 = vunpack.c.0.s8 %v1170
        %v1172 = vlaneseq
        %v1173 = vshrl.u32 %v1172, 7
        %v1174 = vsub.s32 %v1171, %v1173
        %v1175 = vrot.slane %v1167, %v1174
        %v1177 = vunpack.c.l.s4 1934713408
        %v1178 = vunpack.c.0.s8 %v1177
        %v1179 = vlaneseq
        %v1180 = vshrl.u32 %v1179, 7
        %v1181 = vsub.s32 %v1178, %v1180
        %v1182 = vrot.slane %v1168, %v1181
        %v1183 = vcombine.low %v1118, %v1134
        %v1184 = vcombine.high %v1118, %v1134
        %v1186 = vunpack.c.l.s4 1934713408
        %v1187 = vunpack.c.0.s8 %v1186
        %v1188 = vlaneseq
        %v1189 = vshrl.u32 %v1188, 7
        %v1190 = vsub.s32 %v1187, %v1189
        %v1191 = vrot.slane %v1183, %v1190
        %v1193 = vunpack.c.l.s4 1934713408
        %v1194 = vunpack.c.0.s8 %v1193
        %v1195 = vlaneseq
        %v1196 = vshrl.u32 %v1195, 7
        %v1197 = vsub.s32 %v1194, %v1196
        %v1198 = vrot.slane %v1184, %v1197
        %v1199 = vcombine.low %v1143, %v1159
        %v1200 = vcombine.high %v1143, %v1159
        %v1202 = vunpack.c.l.s4 1934713408
        %v1203 = vunpack.c.0.s8 %v1202
        %v1204 = vlaneseq
        %v1205 = vshrl.u32 %v1204, 7
        %v1206 = vsub.s32 %v1203, %v1205
        %v1207 = vrot.slane %v1199, %v1206
        %v1209 = vunpack.c.l.s4 1934713408
        %v1210 = vunpack.c.0.s8 %v1209
        %v1211 = vlaneseq
        %v1212 = vshrl.u32 %v1211, 7
        %v1213 = vsub.s32 %v1210, %v1212
        %v1214 = vrot.slane %v1200, %v1213
        %v1215 = vcombine.low %v1150, %v1166
        %v1216 = vcombine.high %v1150, %v1166
        %v1218 = vunpack.c.l.s4 1934713408
        %v1219 = vunpack.c.0.s8 %v1218
        %v1220 = vlaneseq
        %v1221 = vshrl.u32 %v1220, 7
        %v1222 = vsub.s32 %v1219, %v1221
        %v1223 = vrot.slane %v1215, %v1222
        %v1225 = vunpack.c.l.s4 1934713408
        %v1226 = vunpack.c.0.s8 %v1225
        %v1227 = vlaneseq
        %v1228 = vshrl.u32 %v1227, 7
        %v1229 = vsub.s32 %v1226, %v1228
        %v1230 = vrot.slane %v1216, %v1229
        %v1231 = vcombine.low %v1175, %v1207
        %v1232 = vcombine.high %v1175, %v1207
        %v1233 = vcombine.low %v1182, %v1214
        %v1234 = vcombine.high %v1182, %v1214
        %v1235 = vcombine.low %v1191, %v1223
        %v1236 = vcombine.high %v1191, %v1223
        %v1237 = vcombine.low %v1198, %v1230
        %v1238 = vcombine.high %v1198, %v1230
        %v1239 = vcombine.low %v468, %v492
        %v1240 = vcombine.high %v468, %v492
        %v1242 = vunpack.c.l.s4 1983009808
        %v1243 = vunpack.c.0.s8 %v1242
        %v1244 = vlaneseq
        %v1245 = vshrl.u32 %v1244, 7
        %v1246 = vsub.s32 %v1243, %v1245
        %v1247 = vrot.slane %v1239, %v1246
        %v1249 = vunpack.c.l.s4 1983009808
        %v1250 = vunpack.c.0.s8 %v1249
        %v1251 = vlaneseq
        %v1252 = vshrl.u32 %v1251, 7
        %v1253 = vsub.s32 %v1250, %v1252
        %v1254 = vrot.slane %v1240, %v1253
        %v1255 = vcombine.low %v480, %v504
        %v1256 = vcombine.high %v480, %v504
        %v1258 = vunpack.c.l.s4 1983009808
        %v1259 = vunpack.c.0.s8 %v1258
        %v1260 = vlaneseq
        %v1261 = vshrl.u32 %v1260, 7
        %v1262 = vsub.s32 %v1259, %v1261
        %v1263 = vrot.slane %v1255, %v1262
        %v1265 = vunpack.c.l.s4 1983009808
        %v1266 = vunpack.c.0.s8 %v1265
        %v1267 = vlaneseq
        %v1268 = vshrl.u32 %v1267, 7
        %v1269 = vsub.s32 %v1266, %v1268
        %v1270 = vrot.slane %v1256, %v1269
        %v1271 = vcombine.low %v516, %v540
        %v1272 = vcombine.high %v516, %v540
        %v1274 = vunpack.c.l.s4 1983009808
        %v1275 = vunpack.c.0.s8 %v1274
        %v1276 = vlaneseq
        %v1277 = vshrl.u32 %v1276, 7
        %v1278 = vsub.s32 %v1275, %v1277
        %v1279 = vrot.slane %v1271, %v1278
        %v1281 = vunpack.c.l.s4 1983009808
        %v1282 = vunpack.c.0.s8 %v1281
        %v1283 = vlaneseq
        %v1284 = vshrl.u32 %v1283, 7
        %v1285 = vsub.s32 %v1282, %v1284
        %v1286 = vrot.slane %v1272, %v1285
        %v1287 = vcombine.low %v528, %v552
        %v1288 = vcombine.high %v528, %v552
        %v1290 = vunpack.c.l.s4 1983009808
        %v1291 = vunpack.c.0.s8 %v1290
        %v1292 = vlaneseq
        %v1293 = vshrl.u32 %v1292, 7
        %v1294 = vsub.s32 %v1291, %v1293
        %v1295 = vrot.slane %v1287, %v1294
        %v1297 = vunpack.c.l.s4 1983009808
        %v1298 = vunpack.c.0.s8 %v1297
        %v1299 = vlaneseq
        %v1300 = vshrl.u32 %v1299, 7
        %v1301 = vsub.s32 %v1298, %v1300
        %v1302 = vrot.slane %v1288, %v1301
        %v1303 = vcombine.low %v1247, %v1263
        %v1304 = vcombine.high %v1247, %v1263
        %v1306 = vunpack.c.l.s4 1934713408
        %v1307 = vunpack.c.0.s8 %v1306
        %v1308 = vlaneseq
        %v1309 = vshrl.u32 %v1308, 7
        %v1310 = vsub.s32 %v1307, %v1309
        %v1311 = vrot.slane %v1303, %v1310
        %v1313 = vunpack.c.l.s4 1934713408
        %v1314 = vunpack.c.0.s8 %v1313
        %v1315 = vlaneseq
        %v1316 = vshrl.u32 %v1315, 7
        %v1317 = vsub.s32 %v1314, %v1316
        %v1318 = vrot.slane %v1304, %v1317
        %v1319 = vcombine.low %v1254, %v1270
        %v1320 = vcombine.high %v1254, %v1270
        %v1322 = vunpack.c.l.s4 1934713408
        %v1323 = vunpack.c.0.s8 %v1322
        %v1324 = vlaneseq
        %v1325 = vshrl.u32 %v1324, 7
        %v1326 = vsub.s32 %v1323, %v1325
        %v1327 = vrot.slane %v1319, %v1326
        %v1329 = vunpack.c.l.s4 1934713408
        %v1330 = vunpack.c.0.s8 %v1329
        %v1331 = vlaneseq
        %v1332 = vshrl.u32 %v1331, 7
        %v1333 = vsub.s32 %v1330, %v1332
        %v1334 = vrot.slane %v1320, %v1333
        %v1335 = vcombine.low %v1279, %v1295
        %v1336 = vcombine.high %v1279, %v1295
        %v1338 = vunpack.c.l.s4 1934713408
        %v1339 = vunpack.c.0.s8 %v1338
        %v1340 = vlaneseq
        %v1341 = vshrl.u32 %v1340, 7
        %v1342 = vsub.s32 %v1339, %v1341
        %v1343 = vrot.slane %v1335, %v1342
        %v1345 = vunpack.c.l.s4 1934713408
        %v1346 = vunpack.c.0.s8 %v1345
        %v1347 = vlaneseq
        %v1348 = vshrl.u32 %v1347, 7
        %v1349 = vsub.s32 %v1346, %v1348
        %v1350 = vrot.slane %v1336, %v1349
        %v1351 = vcombine.low %v1286, %v1302
        %v1352 = vcombine.high %v1286, %v1302
        %v1354 = vunpack.c.l.s4 1934713408
        %v1355 = vunpack.c.0.s8 %v1354
        %v1356 = vlaneseq
        %v1357 = vshrl.u32 %v1356, 7
        %v1358 = vsub.s32 %v1355, %v1357
        %v1359 = vrot.slane %v1351, %v1358
        %v1361 = vunpack.c.l.s4 1934713408
        %v1362 = vunpack.c.0.s8 %v1361
        %v1363 = vlaneseq
        %v1364 = vshrl.u32 %v1363, 7
        %v1365 = vsub.s32 %v1362, %v1364
        %v1366 = vrot.slane %v1352, %v1365
        %v1367 = vcombine.low %v1311, %v1343
        %v1368 = vcombine.high %v1311, %v1343
        %v1369 = vcombine.low %v1318, %v1350
        %v1370 = vcombine.high %v1318, %v1350
        %v1371 = vcombine.low %v1327, %v1359
        %v1372 = vcombine.high %v1327, %v1359
        %v1373 = vcombine.low %v1334, %v1366
        %v1374 = vcombine.high %v1334, %v1366
        %v1375 = vcombine.low %v372, %v398
        %v1376 = vcombine.high %v372, %v398
        %v1378 = vunpack.c.l.s4 1983009808
        %v1379 = vunpack.c.0.s8 %v1378
        %v1380 = vlaneseq
        %v1381 = vshrl.u32 %v1380, 7
        %v1382 = vsub.s32 %v1379, %v1381
        %v1383 = vrot.slane %v1375, %v1382
        %v1385 = vunpack.c.l.s4 1983009808
        %v1386 = vunpack.c.0.s8 %v1385
        %v1387 = vlaneseq
        %v1388 = vshrl.u32 %v1387, 7
        %v1389 = vsub.s32 %v1386, %v1388
        %v1390 = vrot.slane %v1376, %v1389
        %v1391 = vcombine.low %v386, %v410
        %v1392 = vcombine.high %v386, %v410
        %v1394 = vunpack.c.l.s4 1983009808
        %v1395 = vunpack.c.0.s8 %v1394
        %v1396 = vlaneseq
        %v1397 = vshrl.u32 %v1396, 7
        %v1398 = vsub.s32 %v1395, %v1397
        %v1399 = vrot.slane %v1391, %v1398
        %v1401 = vunpack.c.l.s4 1983009808
        %v1402 = vunpack.c.0.s8 %v1401
        %v1403 = vlaneseq
        %v1404 = vshrl.u32 %v1403, 7
        %v1405 = vsub.s32 %v1402, %v1404
        %v1406 = vrot.slane %v1392, %v1405
        %v1407 = vcombine.low %v422, %v446
        %v1408 = vcombine.high %v422, %v446
        %v1410 = vunpack.c.l.s4 1983009808
        %v1411 = vunpack.c.0.s8 %v1410
        %v1412 = vlaneseq
        %v1413 = vshrl.u32 %v1412, 7
        %v1414 = vsub.s32 %v1411, %v1413
        %v1415 = vrot.slane %v1407, %v1414
        %v1417 = vunpack.c.l.s4 1983009808
        %v1418 = vunpack.c.0.s8 %v1417
        %v1419 = vlaneseq
        %v1420 = vshrl.u32 %v1419, 7
        %v1421 = vsub.s32 %v1418, %v1420
        %v1422 = vrot.slane %v1408, %v1421
        %v1423 = vcombine.low %v434, %v458
        %v1424 = vcombine.high %v434, %v458
        %v1426 = vunpack.c.l.s4 1983009808
        %v1427 = vunpack.c.0.s8 %v1426
        %v1428 = vlaneseq
        %v1429 = vshrl.u32 %v1428, 7
        %v1430 = vsub.s32 %v1427, %v1429
        %v1431 = vrot.slane %v1423, %v1430
        %v1433 = vunpack.c.l.s4 1983009808
        %v1434 = vunpack.c.0.s8 %v1433
        %v1435 = vlaneseq
        %v1436 = vshrl.u32 %v1435, 7
        %v1437 = vsub.s32 %v1434, %v1436
        %v1438 = vrot.slane %v1424, %v1437
        %v1439 = vcombine.low %v1383, %v1399
        %v1440 = vcombine.high %v1383, %v1399
        %v1442 = vunpack.c.l.s4 1934713408
        %v1443 = vunpack.c.0.s8 %v1442
        %v1444 = vlaneseq
        %v1445 = vshrl.u32 %v1444, 7
        %v1446 = vsub.s32 %v1443, %v1445
        %v1447 = vrot.slane %v1439, %v1446
        %v1449 = vunpack.c.l.s4 1934713408
        %v1450 = vunpack.c.0.s8 %v1449
        %v1451 = vlaneseq
        %v1452 = vshrl.u32 %v1451, 7
        %v1453 = vsub.s32 %v1450, %v1452
        %v1454 = vrot.slane %v1440, %v1453
        %v1455 = vcombine.low %v1390, %v1406
        %v1456 = vcombine.high %v1390, %v1406
        %v1458 = vunpack.c.l.s4 1934713408
        %v1459 = vunpack.c.0.s8 %v1458
        %v1460 = vlaneseq
        %v1461 = vshrl.u32 %v1460, 7
        %v1462 = vsub.s32 %v1459, %v1461
        %v1463 = vrot.slane %v1455, %v1462
        %v1465 = vunpack.c.l.s4 1934713408
        %v1466 = vunpack.c.0.s8 %v1465
        %v1467 = vlaneseq
        %v1468 = vshrl.u32 %v1467, 7
        %v1469 = vsub.s32 %v1466, %v1468
        %v1470 = vrot.slane %v1456, %v1469
        %v1471 = vcombine.low %v1415, %v1431
        %v1472 = vcombine.high %v1415, %v1431
        %v1474 = vunpack.c.l.s4 1934713408
        %v1475 = vunpack.c.0.s8 %v1474
        %v1476 = vlaneseq
        %v1477 = vshrl.u32 %v1476, 7
        %v1478 = vsub.s32 %v1475, %v1477
        %v1479 = vrot.slane %v1471, %v1478
        %v1481 = vunpack.c.l.s4 1934713408
        %v1482 = vunpack.c.0.s8 %v1481
        %v1483 = vlaneseq
        %v1484 = vshrl.u32 %v1483, 7
        %v1485 = vsub.s32 %v1482, %v1484
        %v1486 = vrot.slane %v1472, %v1485
        %v1487 = vcombine.low %v1422, %v1438
        %v1488 = vcombine.high %v1422, %v1438
        %v1490 = vunpack.c.l.s4 1934713408
        %v1491 = vunpack.c.0.s8 %v1490
        %v1492 = vlaneseq
        %v1493 = vshrl.u32 %v1492, 7
        %v1494 = vsub.s32 %v1491, %v1493
        %v1495 = vrot.slane %v1487, %v1494
        %v1497 = vunpack.c.l.s4 1934713408
        %v1498 = vunpack.c.0.s8 %v1497
        %v1499 = vlaneseq
        %v1500 = vshrl.u32 %v1499, 7
        %v1501 = vsub.s32 %v1498, %v1500
        %v1502 = vrot.slane %v1488, %v1501
        %v1503 = vcombine.low %v1447, %v1479
        %v1504 = vcombine.high %v1447, %v1479
        %v1505 = vcombine.low %v1454, %v1486
        %v1506 = vcombine.high %v1454, %v1486
        %v1507 = vcombine.low %v1463, %v1495
        %v1508 = vcombine.high %v1463, %v1495
        %v1509 = vcombine.low %v1470, %v1502
        %v1510 = vcombine.high %v1470, %v1502
        %v1511 = vcombine.low %v470, %v494
        %v1512 = vcombine.high %v470, %v494
        %v1514 = vunpack.c.l.s4 1983009808
        %v1515 = vunpack.c.0.s8 %v1514
        %v1516 = vlaneseq
        %v1517 = vshrl.u32 %v1516, 7
        %v1518 = vsub.s32 %v1515, %v1517
        %v1519 = vrot.slane %v1511, %v1518
        %v1521 = vunpack.c.l.s4 1983009808
        %v1522 = vunpack.c.0.s8 %v1521
        %v1523 = vlaneseq
        %v1524 = vshrl.u32 %v1523, 7
        %v1525 = vsub.s32 %v1522, %v1524
        %v1526 = vrot.slane %v1512, %v1525
        %v1527 = vcombine.low %v482, %v506
        %v1528 = vcombine.high %v482, %v506
        %v1530 = vunpack.c.l.s4 1983009808
        %v1531 = vunpack.c.0.s8 %v1530
        %v1532 = vlaneseq
        %v1533 = vshrl.u32 %v1532, 7
        %v1534 = vsub.s32 %v1531, %v1533
        %v1535 = vrot.slane %v1527, %v1534
        %v1537 = vunpack.c.l.s4 1983009808
        %v1538 = vunpack.c.0.s8 %v1537
        %v1539 = vlaneseq
        %v1540 = vshrl.u32 %v1539, 7
        %v1541 = vsub.s32 %v1538, %v1540
        %v1542 = vrot.slane %v1528, %v1541
        %v1543 = vcombine.low %v518, %v542
        %v1544 = vcombine.high %v518, %v542
        %v1546 = vunpack.c.l.s4 1983009808
        %v1547 = vunpack.c.0.s8 %v1546
        %v1548 = vlaneseq
        %v1549 = vshrl.u32 %v1548, 7
        %v1550 = vsub.s32 %v1547, %v1549
        %v1551 = vrot.slane %v1543, %v1550
        %v1553 = vunpack.c.l.s4 1983009808
        %v1554 = vunpack.c.0.s8 %v1553
        %v1555 = vlaneseq
        %v1556 = vshrl.u32 %v1555, 7
        %v1557 = vsub.s32 %v1554, %v1556
        %v1558 = vrot.slane %v1544, %v1557
        %v1559 = vcombine.low %v530, %v554
        %v1560 = vcombine.high %v530, %v554
        %v1562 = vunpack.c.l.s4 1983009808
        %v1563 = vunpack.c.0.s8 %v1562
        %v1564 = vlaneseq
        %v1565 = vshrl.u32 %v1564, 7
        %v1566 = vsub.s32 %v1563, %v1565
        %v1567 = vrot.slane %v1559, %v1566
        %v1569 = vunpack.c.l.s4 1983009808
        %v1570 = vunpack.c.0.s8 %v1569
        %v1571 = vlaneseq
        %v1572 = vshrl.u32 %v1571, 7
        %v1573 = vsub.s32 %v1570, %v1572
        %v1574 = vrot.slane %v1560, %v1573
        %v1575 = vcombine.low %v1519, %v1535
        %v1576 = vcombine.high %v1519, %v1535
        %v1578 = vunpack.c.l.s4 1934713408
        %v1579 = vunpack.c.0.s8 %v1578
        %v1580 = vlaneseq
        %v1581 = vshrl.u32 %v1580, 7
        %v1582 = vsub.s32 %v1579, %v1581
        %v1583 = vrot.slane %v1575, %v1582
        %v1585 = vunpack.c.l.s4 1934713408
        %v1586 = vunpack.c.0.s8 %v1585
        %v1587 = vlaneseq
        %v1588 = vshrl.u32 %v1587, 7
        %v1589 = vsub.s32 %v1586, %v1588
        %v1590 = vrot.slane %v1576, %v1589
        %v1591 = vcombine.low %v1526, %v1542
        %v1592 = vcombine.high %v1526, %v1542
        %v1594 = vunpack.c.l.s4 1934713408
        %v1595 = vunpack.c.0.s8 %v1594
        %v1596 = vlaneseq
        %v1597 = vshrl.u32 %v1596, 7
        %v1598 = vsub.s32 %v1595, %v1597
        %v1599 = vrot.slane %v1591, %v1598
        %v1601 = vunpack.c.l.s4 1934713408
        %v1602 = vunpack.c.0.s8 %v1601
        %v1603 = vlaneseq
        %v1604 = vshrl.u32 %v1603, 7
        %v1605 = vsub.s32 %v1602, %v1604
        %v1606 = vrot.slane %v1592, %v1605
        %v1607 = vcombine.low %v1551, %v1567
        %v1608 = vcombine.high %v1551, %v1567
        %v1610 = vunpack.c.l.s4 1934713408
        %v1611 = vunpack.c.0.s8 %v1610
        %v1612 = vlaneseq
        %v1613 = vshrl.u32 %v1612, 7
        %v1614 = vsub.s32 %v1611, %v1613
        %v1615 = vrot.slane %v1607, %v1614
        %v1617 = vunpack.c.l.s4 1934713408
        %v1618 = vunpack.c.0.s8 %v1617
        %v1619 = vlaneseq
        %v1620 = vshrl.u32 %v1619, 7
        %v1621 = vsub.s32 %v1618, %v1620
        %v1622 = vrot.slane %v1608, %v1621
        %v1623 = vcombine.low %v1558, %v1574
        %v1624 = vcombine.high %v1558, %v1574
        %v1626 = vunpack.c.l.s4 1934713408
        %v1627 = vunpack.c.0.s8 %v1626
        %v1628 = vlaneseq
        %v1629 = vshrl.u32 %v1628, 7
        %v1630 = vsub.s32 %v1627, %v1629
        %v1631 = vrot.slane %v1623, %v1630
        %v1633 = vunpack.c.l.s4 1934713408
        %v1634 = vunpack.c.0.s8 %v1633
        %v1635 = vlaneseq
        %v1636 = vshrl.u32 %v1635, 7
        %v1637 = vsub.s32 %v1634, %v1636
        %v1638 = vrot.slane %v1624, %v1637
        %v1639 = vcombine.low %v1583, %v1615
        %v1640 = vcombine.high %v1583, %v1615
        %v1641 = vcombine.low %v1590, %v1622
        %v1642 = vcombine.high %v1590, %v1622
        %v1643 = vcombine.low %v1599, %v1631
        %v1644 = vcombine.high %v1599, %v1631
        %v1645 = vcombine.low %v1606, %v1638
        %v1646 = vcombine.high %v1606, %v1638
        %v1647 = vld [vmem:[%s259] sm:$0xf]
        %v1648 = vld [vmem:[%s259 + $0x4] sm:$0xf]
        %v1649 = vld [vmem:[%s259 + $0x8] sm:$0xf]
        %v1650 = vld [vmem:[%s259 + $0xc] sm:$0xf]
        %v1651 = vld [vmem:[%s259 + $0x10] sm:$0xf]
        %v1652 = vld [vmem:[%s259 + $0x14] sm:$0xf]
        %v1653 = vld [vmem:[%s259 + $0x18] sm:$0xf]
        %v1654 = vld [vmem:[%s259 + $0x1c] sm:$0xf]
        %v1656 = vsel %vm277, %v1647, 0
        %1658 = vmatprep.subr.mxu0 0.0
        %1659 = vmatpush1.msra.mxu0 %v687
        %1660 = vmatprep.subr.mxu0 0.0
        %1661 = vmatpush1.msra.mxu0 %v823
        %1662 = vmatprep.subr.mxu0 0.0
        %1663 = vmatpush1.msra.mxu0 0.0
        %1664 = vmatprep.subr.mxu0 0.0
        %1665 = vmatpush1.msra.mxu0 0.0
        %1666 = vmatprep.subr.mxu0 0.0
        %1667 = vmatpush1.msra.mxu0 0.0
        %1668 = vmatprep.subr.mxu0 0.0
        %1669 = vmatpush1.msra.mxu0 0.0
        %1670 = vmatprep.subr.mxu0 0.0
        %1671 = vmatpush1.msra.mxu0 0.0
        %1672 = vmatprep.subr.mxu0 0.0
        %1673 = vmatpush1.msra.mxu0 0.0
        %1674 = vmatprep.subr.mxu0 0.0
        %1675 = vmatpush1.msra.mxu0 0.0
        %1676 = vmatprep.subr.mxu0 0.0
        %1677 = vmatpush1.msra.mxu0 0.0
        %1678 = vmatprep.subr.mxu0 0.0
        %1679 = vmatpush1.msra.mxu0 0.0
        %1680 = vmatprep.subr.mxu0 0.0
        %1681 = vmatpush1.msra.mxu0 0.0
        %1682 = vmatprep.subr.mxu0 0.0
        %1683 = vmatpush1.msra.mxu0 0.0
        %1684 = vmatprep.subr.mxu0 0.0
        %1685 = vmatpush1.msra.mxu0 0.0
        %1686 = vmatprep.subr.mxu0 0.0
        %1687 = vmatpush1.msra.mxu0 0.0
        %1688 = vmatprep.subr.mxu0 0.0
        %1689 = vmatpush1.msra.mxu0 0.0
        %1690 = vmatprep.subr.mxu0 0.0
        %1691 = vmatpush1.msra.mxu0 0.0
        %1692 = vmatprep.subr.mxu0 0.0
        %1693 = vmatpush1.msra.mxu0 0.0
        %1694 = vmatprep.subr.mxu0 0.0
        %1695 = vmatpush1.msra.mxu0 0.0
        %1696 = vmatprep.subr.mxu0 0.0
        %1697 = vmatpush1.msra.mxu0 0.0
        %1698 = vmatprep.subr.mxu0 0.0
        %1699 = vmatpush1.msra.mxu0 0.0
        %1700 = vmatprep.subr.mxu0 0.0
        %1701 = vmatpush1.msra.mxu0 0.0
        %1702 = vmatprep.subr.mxu0 0.0
        %1703 = vmatpush1.msra.mxu0 0.0
        %1704 = vmatprep.subr.mxu0 0.0
        %1705 = vmatpush1.msra.mxu0 0.0
        %1706 = vmatprep.subr.mxu0 0.0
        %1707 = vmatpush1.msra.mxu0 0.0
        %1708 = vmatprep.subr.mxu0 0.0
        %1709 = vmatpush1.msra.mxu0 0.0
        %1710 = vmatprep.subr.mxu0 0.0
        %1711 = vmatpush1.msra.mxu0 0.0
        %1712 = vmatprep.subr.mxu0 0.0
        %1713 = vmatpush1.msra.mxu0 0.0
        %1714 = vmatprep.subr.mxu0 0.0
        %1715 = vmatpush1.msra.mxu0 0.0
        %1716 = vmatprep.subr.mxu0 0.0
        %1717 = vmatpush1.msra.mxu0 0.0
        %1718 = vmatprep.subr.mxu0 0.0
        %1719 = vmatpush1.msra.mxu0 0.0
        %1720 = vmatprep.subr.mxu0 0.0
        %1721 = vmatpush1.msra.mxu0 0.0
        %1722 = vmatprep.mubr.f32.mxu0 0.0
        %1723 = vmatmul.mubr.f32.gmra.mrb[0].mxu0 %v1656
        %v1724 = vpop.f32.mrb[0].mxu0
        %v1725 = vadd.f32 0.0, %v1724
        %v1726 = vpop.f32.mrb[0].mxu0
        %1727 = vdwg.mxu0
        %1728 = vmatprep.subr.mxu0 0.0
        %1729 = vmatpush1.msra.mxu0 %v688
        %1730 = vmatprep.subr.mxu0 0.0
        %1731 = vmatpush1.msra.mxu0 %v824
        %1732 = vmatprep.subr.mxu0 0.0
        %1733 = vmatpush1.msra.mxu0 0.0
        %1734 = vmatprep.subr.mxu0 0.0
        %1735 = vmatpush1.msra.mxu0 0.0
        %1736 = vmatprep.subr.mxu0 0.0
        %1737 = vmatpush1.msra.mxu0 0.0
        %1738 = vmatprep.subr.mxu0 0.0
        %1739 = vmatpush1.msra.mxu0 0.0
        %1740 = vmatprep.subr.mxu0 0.0
        %1741 = vmatpush1.msra.mxu0 0.0
        %1742 = vmatprep.subr.mxu0 0.0
        %1743 = vmatpush1.msra.mxu0 0.0
        %1744 = vmatprep.subr.mxu0 0.0
        %1745 = vmatpush1.msra.mxu0 0.0
        %1746 = vmatprep.subr.mxu0 0.0
        %1747 = vmatpush1.msra.mxu0 0.0
        %1748 = vmatprep.subr.mxu0 0.0
        %1749 = vmatpush1.msra.mxu0 0.0
        %1750 = vmatprep.subr.mxu0 0.0
        %1751 = vmatpush1.msra.mxu0 0.0
        %1752 = vmatprep.subr.mxu0 0.0
        %1753 = vmatpush1.msra.mxu0 0.0
        %1754 = vmatprep.subr.mxu0 0.0
        %1755 = vmatpush1.msra.mxu0 0.0
        %1756 = vmatprep.subr.mxu0 0.0
        %1757 = vmatpush1.msra.mxu0 0.0
        %1758 = vmatprep.subr.mxu0 0.0
        %1759 = vmatpush1.msra.mxu0 0.0
        %1760 = vmatprep.subr.mxu0 0.0
        %1761 = vmatpush1.msra.mxu0 0.0
        %1762 = vmatprep.subr.mxu0 0.0
        %1763 = vmatpush1.msra.mxu0 0.0
        %1764 = vmatprep.subr.mxu0 0.0
        %1765 = vmatpush1.msra.mxu0 0.0
        %1766 = vmatprep.subr.mxu0 0.0
        %1767 = vmatpush1.msra.mxu0 0.0
        %1768 = vmatprep.subr.mxu0 0.0
        %1769 = vmatpush1.msra.mxu0 0.0
        %1770 = vmatprep.subr.mxu0 0.0
        %1771 = vmatpush1.msra.mxu0 0.0
        %1772 = vmatprep.subr.mxu0 0.0
        %1773 = vmatpush1.msra.mxu0 0.0
        %1774 = vmatprep.subr.mxu0 0.0
        %1775 = vmatpush1.msra.mxu0 0.0
        %1776 = vmatprep.subr.mxu0 0.0
        %1777 = vmatpush1.msra.mxu0 0.0
        %1778 = vmatprep.subr.mxu0 0.0
        %1779 = vmatpush1.msra.mxu0 0.0
        %1780 = vmatprep.subr.mxu0 0.0
        %1781 = vmatpush1.msra.mxu0 0.0
        %1782 = vmatprep.subr.mxu0 0.0
        %1783 = vmatpush1.msra.mxu0 0.0
        %1784 = vmatprep.subr.mxu0 0.0
        %1785 = vmatpush1.msra.mxu0 0.0
        %1786 = vmatprep.subr.mxu0 0.0
        %1787 = vmatpush1.msra.mxu0 0.0
        %1788 = vmatprep.subr.mxu0 0.0
        %1789 = vmatpush1.msra.mxu0 0.0
        %1790 = vmatprep.subr.mxu0 0.0
        %1791 = vmatpush1.msra.mxu0 0.0
        %1792 = vmatprep.mubr.f32.mxu0 0.0
        %1793 = vmatmul.mubr.f32.gmra.mrb[0].mxu0 %v1656
        %v1794 = vpop.f32.mrb[0].mxu0
        %v1795 = vadd.f32 0.0, %v1794
        %v1796 = vpop.f32.mrb[0].mxu0
        %1797 = vdwg.mxu0
        %1798 = vmatprep.subr.mxu0 0.0
        %1799 = vmatpush1.msra.mxu0 %v689
        %1800 = vmatprep.subr.mxu0 0.0
        %1801 = vmatpush1.msra.mxu0 %v825
        %1802 = vmatprep.subr.mxu0 0.0
        %1803 = vmatpush1.msra.mxu0 0.0
        %1804 = vmatprep.subr.mxu0 0.0
        %1805 = vmatpush1.msra.mxu0 0.0
        %1806 = vmatprep.subr.mxu0 0.0
        %1807 = vmatpush1.msra.mxu0 0.0
        %1808 = vmatprep.subr.mxu0 0.0
        %1809 = vmatpush1.msra.mxu0 0.0
        %1810 = vmatprep.subr.mxu0 0.0
        %1811 = vmatpush1.msra.mxu0 0.0
        %1812 = vmatprep.subr.mxu0 0.0
        %1813 = vmatpush1.msra.mxu0 0.0
        %1814 = vmatprep.subr.mxu0 0.0
        %1815 = vmatpush1.msra.mxu0 0.0
        %1816 = vmatprep.subr.mxu0 0.0
        %1817 = vmatpush1.msra.mxu0 0.0
        %1818 = vmatprep.subr.mxu0 0.0
        %1819 = vmatpush1.msra.mxu0 0.0
        %1820 = vmatprep.subr.mxu0 0.0
        %1821 = vmatpush1.msra.mxu0 0.0
        %1822 = vmatprep.subr.mxu0 0.0
        %1823 = vmatpush1.msra.mxu0 0.0
        %1824 = vmatprep.subr.mxu0 0.0
        %1825 = vmatpush1.msra.mxu0 0.0
        %1826 = vmatprep.subr.mxu0 0.0
        %1827 = vmatpush1.msra.mxu0 0.0
        %1828 = vmatprep.subr.mxu0 0.0
        %1829 = vmatpush1.msra.mxu0 0.0
        %1830 = vmatprep.subr.mxu0 0.0
        %1831 = vmatpush1.msra.mxu0 0.0
        %1832 = vmatprep.subr.mxu0 0.0
        %1833 = vmatpush1.msra.mxu0 0.0
        %1834 = vmatprep.subr.mxu0 0.0
        %1835 = vmatpush1.msra.mxu0 0.0
        %1836 = vmatprep.subr.mxu0 0.0
        %1837 = vmatpush1.msra.mxu0 0.0
        %1838 = vmatprep.subr.mxu0 0.0
        %1839 = vmatpush1.msra.mxu0 0.0
        %1840 = vmatprep.subr.mxu0 0.0
        %1841 = vmatpush1.msra.mxu0 0.0
        %1842 = vmatprep.subr.mxu0 0.0
        %1843 = vmatpush1.msra.mxu0 0.0
        %1844 = vmatprep.subr.mxu0 0.0
        %1845 = vmatpush1.msra.mxu0 0.0
        %1846 = vmatprep.subr.mxu0 0.0
        %1847 = vmatpush1.msra.mxu0 0.0
        %1848 = vmatprep.subr.mxu0 0.0
        %1849 = vmatpush1.msra.mxu0 0.0
        %1850 = vmatprep.subr.mxu0 0.0
        %1851 = vmatpush1.msra.mxu0 0.0
        %1852 = vmatprep.subr.mxu0 0.0
        %1853 = vmatpush1.msra.mxu0 0.0
        %1854 = vmatprep.subr.mxu0 0.0
        %1855 = vmatpush1.msra.mxu0 0.0
        %1856 = vmatprep.subr.mxu0 0.0
        %1857 = vmatpush1.msra.mxu0 0.0
        %1858 = vmatprep.subr.mxu0 0.0
        %1859 = vmatpush1.msra.mxu0 0.0
        %1860 = vmatprep.subr.mxu0 0.0
        %1861 = vmatpush1.msra.mxu0 0.0
        %1862 = vmatprep.mubr.f32.mxu0 0.0
        %1863 = vmatmul.mubr.f32.gmra.mrb[0].mxu0 %v1656
        %v1864 = vpop.f32.mrb[0].mxu0
        %v1865 = vadd.f32 0.0, %v1864
        %v1866 = vpop.f32.mrb[0].mxu0
        %1867 = vdwg.mxu0
        %1868 = vmatprep.subr.mxu0 0.0
        %1869 = vmatpush1.msra.mxu0 %v690
        %1870 = vmatprep.subr.mxu0 0.0
        %1871 = vmatpush1.msra.mxu0 %v826
        %1872 = vmatprep.subr.mxu0 0.0
        %1873 = vmatpush1.msra.mxu0 0.0
        %1874 = vmatprep.subr.mxu0 0.0
        %1875 = vmatpush1.msra.mxu0 0.0
        %1876 = vmatprep.subr.mxu0 0.0
        %1877 = vmatpush1.msra.mxu0 0.0
        %1878 = vmatprep.subr.mxu0 0.0
        %1879 = vmatpush1.msra.mxu0 0.0
        %1880 = vmatprep.subr.mxu0 0.0
        %1881 = vmatpush1.msra.mxu0 0.0
        %1882 = vmatprep.subr.mxu0 0.0
        %1883 = vmatpush1.msra.mxu0 0.0
        %1884 = vmatprep.subr.mxu0 0.0
        %1885 = vmatpush1.msra.mxu0 0.0
        %1886 = vmatprep.subr.mxu0 0.0
        %1887 = vmatpush1.msra.mxu0 0.0
        %1888 = vmatprep.subr.mxu0 0.0
        %1889 = vmatpush1.msra.mxu0 0.0
        %1890 = vmatprep.subr.mxu0 0.0
        %1891 = vmatpush1.msra.mxu0 0.0
        %1892 = vmatprep.subr.mxu0 0.0
        %1893 = vmatpush1.msra.mxu0 0.0
        %1894 = vmatprep.subr.mxu0 0.0
        %1895 = vmatpush1.msra.mxu0 0.0
        %1896 = vmatprep.subr.mxu0 0.0
        %1897 = vmatpush1.msra.mxu0 0.0
        %1898 = vmatprep.subr.mxu0 0.0
        %1899 = vmatpush1.msra.mxu0 0.0
        %1900 = vmatprep.subr.mxu0 0.0
        %1901 = vmatpush1.msra.mxu0 0.0
        %1902 = vmatprep.subr.mxu0 0.0
        %1903 = vmatpush1.msra.mxu0 0.0
        %1904 = vmatprep.subr.mxu0 0.0
        %1905 = vmatpush1.msra.mxu0 0.0
        %1906 = vmatprep.subr.mxu0 0.0
        %1907 = vmatpush1.msra.mxu0 0.0
        %1908 = vmatprep.subr.mxu0 0.0
        %1909 = vmatpush1.msra.mxu0 0.0
        %1910 = vmatprep.subr.mxu0 0.0
        %1911 = vmatpush1.msra.mxu0 0.0
        %1912 = vmatprep.subr.mxu0 0.0
        %1913 = vmatpush1.msra.mxu0 0.0
        %1914 = vmatprep.subr.mxu0 0.0
        %1915 = vmatpush1.msra.mxu0 0.0
        %1916 = vmatprep.subr.mxu0 0.0
        %1917 = vmatpush1.msra.mxu0 0.0
        %1918 = vmatprep.subr.mxu0 0.0
        %1919 = vmatpush1.msra.mxu0 0.0
        %1920 = vmatprep.subr.mxu0 0.0
        %1921 = vmatpush1.msra.mxu0 0.0
        %1922 = vmatprep.subr.mxu0 0.0
        %1923 = vmatpush1.msra.mxu0 0.0
        %1924 = vmatprep.subr.mxu0 0.0
        %1925 = vmatpush1.msra.mxu0 0.0
        %1926 = vmatprep.subr.mxu0 0.0
        %1927 = vmatpush1.msra.mxu0 0.0
        %1928 = vmatprep.subr.mxu0 0.0
        %1929 = vmatpush1.msra.mxu0 0.0
        %1930 = vmatprep.subr.mxu0 0.0
        %1931 = vmatpush1.msra.mxu0 0.0
        %1932 = vmatprep.mubr.f32.mxu0 0.0
        %1933 = vmatmul.mubr.f32.gmra.mrb[0].mxu0 %v1656
        %v1934 = vpop.f32.mrb[0].mxu0
        %v1935 = vadd.f32 0.0, %v1934
        %v1936 = vpop.f32.mrb[0].mxu0
        %1937 = vdwg.mxu0
        %v1939 = vsel %vm277, %v1648, 0
        %1941 = vmatprep.subr.mxu0 0.0
        %1942 = vmatpush1.msra.mxu0 %v691
        %1943 = vmatprep.subr.mxu0 0.0
        %1944 = vmatpush1.msra.mxu0 %v827
        %1945 = vmatprep.subr.mxu0 0.0
        %1946 = vmatpush1.msra.mxu0 0.0
        %1947 = vmatprep.subr.mxu0 0.0
        %1948 = vmatpush1.msra.mxu0 0.0
        %1949 = vmatprep.subr.mxu0 0.0
        %1950 = vmatpush1.msra.mxu0 0.0
        %1951 = vmatprep.subr.mxu0 0.0
        %1952 = vmatpush1.msra.mxu0 0.0
        %1953 = vmatprep.subr.mxu0 0.0
        %1954 = vmatpush1.msra.mxu0 0.0
        %1955 = vmatprep.subr.mxu0 0.0
        %1956 = vmatpush1.msra.mxu0 0.0
        %1957 = vmatprep.subr.mxu0 0.0
        %1958 = vmatpush1.msra.mxu0 0.0
        %1959 = vmatprep.subr.mxu0 0.0
        %1960 = vmatpush1.msra.mxu0 0.0
        %1961 = vmatprep.subr.mxu0 0.0
        %1962 = vmatpush1.msra.mxu0 0.0
        %1963 = vmatprep.subr.mxu0 0.0
        %1964 = vmatpush1.msra.mxu0 0.0
        %1965 = vmatprep.subr.mxu0 0.0
        %1966 = vmatpush1.msra.mxu0 0.0
        %1967 = vmatprep.subr.mxu0 0.0
        %1968 = vmatpush1.msra.mxu0 0.0
        %1969 = vmatprep.subr.mxu0 0.0
        %1970 = vmatpush1.msra.mxu0 0.0
        %1971 = vmatprep.subr.mxu0 0.0
        %1972 = vmatpush1.msra.mxu0 0.0
        %1973 = vmatprep.subr.mxu0 0.0
        %1974 = vmatpush1.msra.mxu0 0.0
        %1975 = vmatprep.subr.mxu0 0.0
        %1976 = vmatpush1.msra.mxu0 0.0
        %1977 = vmatprep.subr.mxu0 0.0
        %1978 = vmatpush1.msra.mxu0 0.0
        %1979 = vmatprep.subr.mxu0 0.0
        %1980 = vmatpush1.msra.mxu0 0.0
        %1981 = vmatprep.subr.mxu0 0.0
        %1982 = vmatpush1.msra.mxu0 0.0
        %1983 = vmatprep.subr.mxu0 0.0
        %1984 = vmatpush1.msra.mxu0 0.0
        %1985 = vmatprep.subr.mxu0 0.0
        %1986 = vmatpush1.msra.mxu0 0.0
        %1987 = vmatprep.subr.mxu0 0.0
        %1988 = vmatpush1.msra.mxu0 0.0
        %1989 = vmatprep.subr.mxu0 0.0
        %1990 = vmatpush1.msra.mxu0 0.0
        %1991 = vmatprep.subr.mxu0 0.0
        %1992 = vmatpush1.msra.mxu0 0.0
        %1993 = vmatprep.subr.mxu0 0.0
        %1994 = vmatpush1.msra.mxu0 0.0
        %1995 = vmatprep.subr.mxu0 0.0
        %1996 = vmatpush1.msra.mxu0 0.0
        %1997 = vmatprep.subr.mxu0 0.0
        %1998 = vmatpush1.msra.mxu0 0.0
        %1999 = vmatprep.subr.mxu0 0.0
        %2000 = vmatpush1.msra.mxu0 0.0
        %2001 = vmatprep.subr.mxu0 0.0
        %2002 = vmatpush1.msra.mxu0 0.0
        %2003 = vmatprep.subr.mxu0 0.0
        %2004 = vmatpush1.msra.mxu0 0.0
        %2005 = vmatprep.mubr.f32.mxu0 0.0
        %2006 = vmatmul.mubr.f32.gmra.mrb[0].mxu0 %v1939
        %v2007 = vpop.f32.mrb[0].mxu0
        %v2008 = vadd.f32 0.0, %v2007
        %v2009 = vpop.f32.mrb[0].mxu0
        %2010 = vdwg.mxu0
        %2011 = vmatprep.subr.mxu0 0.0
        %2012 = vmatpush1.msra.mxu0 %v692
        %2013 = vmatprep.subr.mxu0 0.0
        %2014 = vmatpush1.msra.mxu0 %v828
        %2015 = vmatprep.subr.mxu0 0.0
        %2016 = vmatpush1.msra.mxu0 0.0
        %2017 = vmatprep.subr.mxu0 0.0
        %2018 = vmatpush1.msra.mxu0 0.0
        %2019 = vmatprep.subr.mxu0 0.0
        %2020 = vmatpush1.msra.mxu0 0.0
        %2021 = vmatprep.subr.mxu0 0.0
        %2022 = vmatpush1.msra.mxu0 0.0
        %2023 = vmatprep.subr.mxu0 0.0
        %2024 = vmatpush1.msra.mxu0 0.0
        %2025 = vmatprep.subr.mxu0 0.0
        %2026 = vmatpush1.msra.mxu0 0.0
        %2027 = vmatprep.subr.mxu0 0.0
        %2028 = vmatpush1.msra.mxu0 0.0
        %2029 = vmatprep.subr.mxu0 0.0
        %2030 = vmatpush1.msra.mxu0 0.0
        %2031 = vmatprep.subr.mxu0 0.0
        %2032 = vmatpush1.msra.mxu0 0.0
        %2033 = vmatprep.subr.mxu0 0.0
        %2034 = vmatpush1.msra.mxu0 0.0
        %2035 = vmatprep.subr.mxu0 0.0
        %2036 = vmatpush1.msra.mxu0 0.0
        %2037 = vmatprep.subr.mxu0 0.0
        %2038 = vmatpush1.msra.mxu0 0.0
        %2039 = vmatprep.subr.mxu0 0.0
        %2040 = vmatpush1.msra.mxu0 0.0
        %2041 = vmatprep.subr.mxu0 0.0
        %2042 = vmatpush1.msra.mxu0 0.0
        %2043 = vmatprep.subr.mxu0 0.0
        %2044 = vmatpush1.msra.mxu0 0.0
        %2045 = vmatprep.subr.mxu0 0.0
        %2046 = vmatpush1.msra.mxu0 0.0
        %2047 = vmatprep.subr.mxu0 0.0
        %2048 = vmatpush1.msra.mxu0 0.0
        %2049 = vmatprep.subr.mxu0 0.0
        %2050 = vmatpush1.msra.mxu0 0.0
        %2051 = vmatprep.subr.mxu0 0.0
        %2052 = vmatpush1.msra.mxu0 0.0
        %2053 = vmatprep.subr.mxu0 0.0
        %2054 = vmatpush1.msra.mxu0 0.0
        %2055 = vmatprep.subr.mxu0 0.0
        %2056 = vmatpush1.msra.mxu0 0.0
        %2057 = vmatprep.subr.mxu0 0.0
        %2058 = vmatpush1.msra.mxu0 0.0
        %2059 = vmatprep.subr.mxu0 0.0
        %2060 = vmatpush1.msra.mxu0 0.0
        %2061 = vmatprep.subr.mxu0 0.0
        %2062 = vmatpush1.msra.mxu0 0.0
        %2063 = vmatprep.subr.mxu0 0.0
        %2064 = vmatpush1.msra.mxu0 0.0
        %2065 = vmatprep.subr.mxu0 0.0
        %2066 = vmatpush1.msra.mxu0 0.0
        %2067 = vmatprep.subr.mxu0 0.0
        %2068 = vmatpush1.msra.mxu0 0.0
        %2069 = vmatprep.subr.mxu0 0.0
        %2070 = vmatpush1.msra.mxu0 0.0
        %2071 = vmatprep.subr.mxu0 0.0
        %2072 = vmatpush1.msra.mxu0 0.0
        %2073 = vmatprep.subr.mxu0 0.0
        %2074 = vmatpush1.msra.mxu0 0.0
        %2075 = vmatprep.mubr.f32.mxu0 0.0
        %2076 = vmatmul.mubr.f32.gmra.mrb[0].mxu0 %v1939
        %v2077 = vpop.f32.mrb[0].mxu0
        %v2078 = vadd.f32 0.0, %v2077
        %v2079 = vpop.f32.mrb[0].mxu0
        %2080 = vdwg.mxu0
        %2081 = vmatprep.subr.mxu0 0.0
        %2082 = vmatpush1.msra.mxu0 %v693
        %2083 = vmatprep.subr.mxu0 0.0
        %2084 = vmatpush1.msra.mxu0 %v829
        %2085 = vmatprep.subr.mxu0 0.0
        %2086 = vmatpush1.msra.mxu0 0.0
        %2087 = vmatprep.subr.mxu0 0.0
        %2088 = vmatpush1.msra.mxu0 0.0
        %2089 = vmatprep.subr.mxu0 0.0
        %2090 = vmatpush1.msra.mxu0 0.0
        %2091 = vmatprep.subr.mxu0 0.0
        %2092 = vmatpush1.msra.mxu0 0.0
        %2093 = vmatprep.subr.mxu0 0.0
        %2094 = vmatpush1.msra.mxu0 0.0
        %2095 = vmatprep.subr.mxu0 0.0
        %2096 = vmatpush1.msra.mxu0 0.0
        %2097 = vmatprep.subr.mxu0 0.0
        %2098 = vmatpush1.msra.mxu0 0.0
        %2099 = vmatprep.subr.mxu0 0.0
        %2100 = vmatpush1.msra.mxu0 0.0
        %2101 = vmatprep.subr.mxu0 0.0
        %2102 = vmatpush1.msra.mxu0 0.0
        %2103 = vmatprep.subr.mxu0 0.0
        %2104 = vmatpush1.msra.mxu0 0.0
        %2105 = vmatprep.subr.mxu0 0.0
        %2106 = vmatpush1.msra.mxu0 0.0
        %2107 = vmatprep.subr.mxu0 0.0
        %2108 = vmatpush1.msra.mxu0 0.0
        %2109 = vmatprep.subr.mxu0 0.0
        %2110 = vmatpush1.msra.mxu0 0.0
        %2111 = vmatprep.subr.mxu0 0.0
        %2112 = vmatpush1.msra.mxu0 0.0
        %2113 = vmatprep.subr.mxu0 0.0
        %2114 = vmatpush1.msra.mxu0 0.0
        %2115 = vmatprep.subr.mxu0 0.0
        %2116 = vmatpush1.msra.mxu0 0.0
        %2117 = vmatprep.subr.mxu0 0.0
        %2118 = vmatpush1.msra.mxu0 0.0
        %2119 = vmatprep.subr.mxu0 0.0
        %2120 = vmatpush1.msra.mxu0 0.0
        %2121 = vmatprep.subr.mxu0 0.0
        %2122 = vmatpush1.msra.mxu0 0.0
        %2123 = vmatprep.subr.mxu0 0.0
        %2124 = vmatpush1.msra.mxu0 0.0
        %2125 = vmatprep.subr.mxu0 0.0
        %2126 = vmatpush1.msra.mxu0 0.0
        %2127 = vmatprep.subr.mxu0 0.0
        %2128 = vmatpush1.msra.mxu0 0.0
        %2129 = vmatprep.subr.mxu0 0.0
        %2130 = vmatpush1.msra.mxu0 0.0
        %2131 = vmatprep.subr.mxu0 0.0
        %2132 = vmatpush1.msra.mxu0 0.0
        %2133 = vmatprep.subr.mxu0 0.0
        %2134 = vmatpush1.msra.mxu0 0.0
        %2135 = vmatprep.subr.mxu0 0.0
        %2136 = vmatpush1.msra.mxu0 0.0
        %2137 = vmatprep.subr.mxu0 0.0
        %2138 = vmatpush1.msra.mxu0 0.0
        %2139 = vmatprep.subr.mxu0 0.0
        %2140 = vmatpush1.msra.mxu0 0.0
        %2141 = vmatprep.subr.mxu0 0.0
        %2142 = vmatpush1.msra.mxu0 0.0
        %2143 = vmatprep.subr.mxu0 0.0
        %2144 = vmatpush1.msra.mxu0 0.0
        %2145 = vmatprep.mubr.f32.mxu0 0.0
        %2146 = vmatmul.mubr.f32.gmra.mrb[0].mxu0 %v1939
        %v2147 = vpop.f32.mrb[0].mxu0
        %v2148 = vadd.f32 0.0, %v2147
        %v2149 = vpop.f32.mrb[0].mxu0
        %2150 = vdwg.mxu0
        %2151 = vmatprep.subr.mxu0 0.0
        %2152 = vmatpush1.msra.mxu0 %v694
        %2153 = vmatprep.subr.mxu0 0.0
        %2154 = vmatpush1.msra.mxu0 %v830
        %2155 = vmatprep.subr.mxu0 0.0
        %2156 = vmatpush1.msra.mxu0 0.0
        %2157 = vmatprep.subr.mxu0 0.0
        %2158 = vmatpush1.msra.mxu0 0.0
        %2159 = vmatprep.subr.mxu0 0.0
        %2160 = vmatpush1.msra.mxu0 0.0
        %2161 = vmatprep.subr.mxu0 0.0
        %2162 = vmatpush1.msra.mxu0 0.0
        %2163 = vmatprep.subr.mxu0 0.0
        %2164 = vmatpush1.msra.mxu0 0.0
        %2165 = vmatprep.subr.mxu0 0.0
        %2166 = vmatpush1.msra.mxu0 0.0
        %2167 = vmatprep.subr.mxu0 0.0
        %2168 = vmatpush1.msra.mxu0 0.0
        %2169 = vmatprep.subr.mxu0 0.0
        %2170 = vmatpush1.msra.mxu0 0.0
        %2171 = vmatprep.subr.mxu0 0.0
        %2172 = vmatpush1.msra.mxu0 0.0
        %2173 = vmatprep.subr.mxu0 0.0
        %2174 = vmatpush1.msra.mxu0 0.0
        %2175 = vmatprep.subr.mxu0 0.0
        %2176 = vmatpush1.msra.mxu0 0.0
        %2177 = vmatprep.subr.mxu0 0.0
        %2178 = vmatpush1.msra.mxu0 0.0
        %2179 = vmatprep.subr.mxu0 0.0
        %2180 = vmatpush1.msra.mxu0 0.0
        %2181 = vmatprep.subr.mxu0 0.0
        %2182 = vmatpush1.msra.mxu0 0.0
        %2183 = vmatprep.subr.mxu0 0.0
        %2184 = vmatpush1.msra.mxu0 0.0
        %2185 = vmatprep.subr.mxu0 0.0
        %2186 = vmatpush1.msra.mxu0 0.0
        %2187 = vmatprep.subr.mxu0 0.0
        %2188 = vmatpush1.msra.mxu0 0.0
        %2189 = vmatprep.subr.mxu0 0.0
        %2190 = vmatpush1.msra.mxu0 0.0
        %2191 = vmatprep.subr.mxu0 0.0
        %2192 = vmatpush1.msra.mxu0 0.0
        %2193 = vmatprep.subr.mxu0 0.0
        %2194 = vmatpush1.msra.mxu0 0.0
        %2195 = vmatprep.subr.mxu0 0.0
        %2196 = vmatpush1.msra.mxu0 0.0
        %2197 = vmatprep.subr.mxu0 0.0
        %2198 = vmatpush1.msra.mxu0 0.0
        %2199 = vmatprep.subr.mxu0 0.0
        %2200 = vmatpush1.msra.mxu0 0.0
        %2201 = vmatprep.subr.mxu0 0.0
        %2202 = vmatpush1.msra.mxu0 0.0
        %2203 = vmatprep.subr.mxu0 0.0
        %2204 = vmatpush1.msra.mxu0 0.0
        %2205 = vmatprep.subr.mxu0 0.0
        %2206 = vmatpush1.msra.mxu0 0.0
        %2207 = vmatprep.subr.mxu0 0.0
        %2208 = vmatpush1.msra.mxu0 0.0
        %2209 = vmatprep.subr.mxu0 0.0
        %2210 = vmatpush1.msra.mxu0 0.0
        %2211 = vmatprep.subr.mxu0 0.0
        %2212 = vmatpush1.msra.mxu0 0.0
        %2213 = vmatprep.subr.mxu0 0.0
        %2214 = vmatpush1.msra.mxu0 0.0
        %2215 = vmatprep.mubr.f32.mxu0 0.0
        %2216 = vmatmul.mubr.f32.gmra.mrb[0].mxu0 %v1939
        %v2217 = vpop.f32.mrb[0].mxu0
        %v2218 = vadd.f32 0.0, %v2217
        %v2219 = vpop.f32.mrb[0].mxu0
        %2220 = vdwg.mxu0
        %v2222 = vsel %vm277, %v1649, 0
        %2224 = vmatprep.subr.mxu0 0.0
        %2225 = vmatpush1.msra.mxu0 %v959
        %2226 = vmatprep.subr.mxu0 0.0
        %2227 = vmatpush1.msra.mxu0 %v1095
        %2228 = vmatprep.subr.mxu0 0.0
        %2229 = vmatpush1.msra.mxu0 0.0
        %2230 = vmatprep.subr.mxu0 0.0
        %2231 = vmatpush1.msra.mxu0 0.0
        %2232 = vmatprep.subr.mxu0 0.0
        %2233 = vmatpush1.msra.mxu0 0.0
        %2234 = vmatprep.subr.mxu0 0.0
        %2235 = vmatpush1.msra.mxu0 0.0
        %2236 = vmatprep.subr.mxu0 0.0
        %2237 = vmatpush1.msra.mxu0 0.0
        %2238 = vmatprep.subr.mxu0 0.0
        %2239 = vmatpush1.msra.mxu0 0.0
        %2240 = vmatprep.subr.mxu0 0.0
        %2241 = vmatpush1.msra.mxu0 0.0
        %2242 = vmatprep.subr.mxu0 0.0
        %2243 = vmatpush1.msra.mxu0 0.0
        %2244 = vmatprep.subr.mxu0 0.0
        %2245 = vmatpush1.msra.mxu0 0.0
        %2246 = vmatprep.subr.mxu0 0.0
        %2247 = vmatpush1.msra.mxu0 0.0
        %2248 = vmatprep.subr.mxu0 0.0
        %2249 = vmatpush1.msra.mxu0 0.0
        %2250 = vmatprep.subr.mxu0 0.0
        %2251 = vmatpush1.msra.mxu0 0.0
        %2252 = vmatprep.subr.mxu0 0.0
        %2253 = vmatpush1.msra.mxu0 0.0
        %2254 = vmatprep.subr.mxu0 0.0
        %2255 = vmatpush1.msra.mxu0 0.0
        %2256 = vmatprep.subr.mxu0 0.0
        %2257 = vmatpush1.msra.mxu0 0.0
        %2258 = vmatprep.subr.mxu0 0.0
        %2259 = vmatpush1.msra.mxu0 0.0
        %2260 = vmatprep.subr.mxu0 0.0
        %2261 = vmatpush1.msra.mxu0 0.0
        %2262 = vmatprep.subr.mxu0 0.0
        %2263 = vmatpush1.msra.mxu0 0.0
        %2264 = vmatprep.subr.mxu0 0.0
        %2265 = vmatpush1.msra.mxu0 0.0
        %2266 = vmatprep.subr.mxu0 0.0
        %2267 = vmatpush1.msra.mxu0 0.0
        %2268 = vmatprep.subr.mxu0 0.0
        %2269 = vmatpush1.msra.mxu0 0.0
        %2270 = vmatprep.subr.mxu0 0.0
        %2271 = vmatpush1.msra.mxu0 0.0
        %2272 = vmatprep.subr.mxu0 0.0
        %2273 = vmatpush1.msra.mxu0 0.0
        %2274 = vmatprep.subr.mxu0 0.0
        %2275 = vmatpush1.msra.mxu0 0.0
        %2276 = vmatprep.subr.mxu0 0.0
        %2277 = vmatpush1.msra.mxu0 0.0
        %2278 = vmatprep.subr.mxu0 0.0
        %2279 = vmatpush1.msra.mxu0 0.0
        %2280 = vmatprep.subr.mxu0 0.0
        %2281 = vmatpush1.msra.mxu0 0.0
        %2282 = vmatprep.subr.mxu0 0.0
        %2283 = vmatpush1.msra.mxu0 0.0
        %2284 = vmatprep.subr.mxu0 0.0
        %2285 = vmatpush1.msra.mxu0 0.0
        %2286 = vmatprep.subr.mxu0 0.0
        %2287 = vmatpush1.msra.mxu0 0.0
        %2288 = vmatprep.mubr.f32.mxu0 0.0
        %2289 = vmatmul.mubr.f32.gmra.mrb[0].mxu0 %v2222
        %v2290 = vpop.f32.mrb[0].mxu0
        %v2291 = vadd.f32 0.0, %v2290
        %v2292 = vpop.f32.mrb[0].mxu0
        %2293 = vdwg.mxu0
        %2294 = vmatprep.subr.mxu0 0.0
        %2295 = vmatpush1.msra.mxu0 %v960
        %2296 = vmatprep.subr.mxu0 0.0
        %2297 = vmatpush1.msra.mxu0 %v1096
        %2298 = vmatprep.subr.mxu0 0.0
        %2299 = vmatpush1.msra.mxu0 0.0
        %2300 = vmatprep.subr.mxu0 0.0
        %2301 = vmatpush1.msra.mxu0 0.0
        %2302 = vmatprep.subr.mxu0 0.0
        %2303 = vmatpush1.msra.mxu0 0.0
        %2304 = vmatprep.subr.mxu0 0.0
        %2305 = vmatpush1.msra.mxu0 0.0
        %2306 = vmatprep.subr.mxu0 0.0
        %2307 = vmatpush1.msra.mxu0 0.0
        %2308 = vmatprep.subr.mxu0 0.0
        %2309 = vmatpush1.msra.mxu0 0.0
        %2310 = vmatprep.subr.mxu0 0.0
        %2311 = vmatpush1.msra.mxu0 0.0
        %2312 = vmatprep.subr.mxu0 0.0
        %2313 = vmatpush1.msra.mxu0 0.0
        %2314 = vmatprep.subr.mxu0 0.0
        %2315 = vmatpush1.msra.mxu0 0.0
        %2316 = vmatprep.subr.mxu0 0.0
        %2317 = vmatpush1.msra.mxu0 0.0
        %2318 = vmatprep.subr.mxu0 0.0
        %2319 = vmatpush1.msra.mxu0 0.0
        %2320 = vmatprep.subr.mxu0 0.0
        %2321 = vmatpush1.msra.mxu0 0.0
        %2322 = vmatprep.subr.mxu0 0.0
        %2323 = vmatpush1.msra.mxu0 0.0
        %2324 = vmatprep.subr.mxu0 0.0
        %2325 = vmatpush1.msra.mxu0 0.0
        %2326 = vmatprep.subr.mxu0 0.0
        %2327 = vmatpush1.msra.mxu0 0.0
        %2328 = vmatprep.subr.mxu0 0.0
        %2329 = vmatpush1.msra.mxu0 0.0
        %2330 = vmatprep.subr.mxu0 0.0
        %2331 = vmatpush1.msra.mxu0 0.0
        %2332 = vmatprep.subr.mxu0 0.0
        %2333 = vmatpush1.msra.mxu0 0.0
        %2334 = vmatprep.subr.mxu0 0.0
        %2335 = vmatpush1.msra.mxu0 0.0
        %2336 = vmatprep.subr.mxu0 0.0
        %2337 = vmatpush1.msra.mxu0 0.0
        %2338 = vmatprep.subr.mxu0 0.0
        %2339 = vmatpush1.msra.mxu0 0.0
        %2340 = vmatprep.subr.mxu0 0.0
        %2341 = vmatpush1.msra.mxu0 0.0
        %2342 = vmatprep.subr.mxu0 0.0
        %2343 = vmatpush1.msra.mxu0 0.0
        %2344 = vmatprep.subr.mxu0 0.0
        %2345 = vmatpush1.msra.mxu0 0.0
        %2346 = vmatprep.subr.mxu0 0.0
        %2347 = vmatpush1.msra.mxu0 0.0
        %2348 = vmatprep.subr.mxu0 0.0
        %2349 = vmatpush1.msra.mxu0 0.0
        %2350 = vmatprep.subr.mxu0 0.0
        %2351 = vmatpush1.msra.mxu0 0.0
        %2352 = vmatprep.subr.mxu0 0.0
        %2353 = vmatpush1.msra.mxu0 0.0
        %2354 = vmatprep.subr.mxu0 0.0
        %2355 = vmatpush1.msra.mxu0 0.0
        %2356 = vmatprep.subr.mxu0 0.0
        %2357 = vmatpush1.msra.mxu0 0.0
        %2358 = vmatprep.mubr.f32.mxu0 0.0
        %2359 = vmatmul.mubr.f32.gmra.mrb[0].mxu0 %v2222
        %v2360 = vpop.f32.mrb[0].mxu0
        %v2361 = vadd.f32 0.0, %v2360
        %v2362 = vpop.f32.mrb[0].mxu0
        %2363 = vdwg.mxu0
        %2364 = vmatprep.subr.mxu0 0.0
        %2365 = vmatpush1.msra.mxu0 %v961
        %2366 = vmatprep.subr.mxu0 0.0
        %2367 = vmatpush1.msra.mxu0 %v1097
        %2368 = vmatprep.subr.mxu0 0.0
        %2369 = vmatpush1.msra.mxu0 0.0
        %2370 = vmatprep.subr.mxu0 0.0
        %2371 = vmatpush1.msra.mxu0 0.0
        %2372 = vmatprep.subr.mxu0 0.0
        %2373 = vmatpush1.msra.mxu0 0.0
        %2374 = vmatprep.subr.mxu0 0.0
        %2375 = vmatpush1.msra.mxu0 0.0
        %2376 = vmatprep.subr.mxu0 0.0
        %2377 = vmatpush1.msra.mxu0 0.0
        %2378 = vmatprep.subr.mxu0 0.0
        %2379 = vmatpush1.msra.mxu0 0.0
        %2380 = vmatprep.subr.mxu0 0.0
        %2381 = vmatpush1.msra.mxu0 0.0
        %2382 = vmatprep.subr.mxu0 0.0
        %2383 = vmatpush1.msra.mxu0 0.0
        %2384 = vmatprep.subr.mxu0 0.0
        %2385 = vmatpush1.msra.mxu0 0.0
        %2386 = vmatprep.subr.mxu0 0.0
        %2387 = vmatpush1.msra.mxu0 0.0
        %2388 = vmatprep.subr.mxu0 0.0
        %2389 = vmatpush1.msra.mxu0 0.0
        %2390 = vmatprep.subr.mxu0 0.0
        %2391 = vmatpush1.msra.mxu0 0.0
        %2392 = vmatprep.subr.mxu0 0.0
        %2393 = vmatpush1.msra.mxu0 0.0
        %2394 = vmatprep.subr.mxu0 0.0
        %2395 = vmatpush1.msra.mxu0 0.0
        %2396 = vmatprep.subr.mxu0 0.0
        %2397 = vmatpush1.msra.mxu0 0.0
        %2398 = vmatprep.subr.mxu0 0.0
        %2399 = vmatpush1.msra.mxu0 0.0
        %2400 = vmatprep.subr.mxu0 0.0
        %2401 = vmatpush1.msra.mxu0 0.0
        %2402 = vmatprep.subr.mxu0 0.0
        %2403 = vmatpush1.msra.mxu0 0.0
        %2404 = vmatprep.subr.mxu0 0.0
        %2405 = vmatpush1.msra.mxu0 0.0
        %2406 = vmatprep.subr.mxu0 0.0
        %2407 = vmatpush1.msra.mxu0 0.0
        %2408 = vmatprep.subr.mxu0 0.0
        %2409 = vmatpush1.msra.mxu0 0.0
        %2410 = vmatprep.subr.mxu0 0.0
        %2411 = vmatpush1.msra.mxu0 0.0
        %2412 = vmatprep.subr.mxu0 0.0
        %2413 = vmatpush1.msra.mxu0 0.0
        %2414 = vmatprep.subr.mxu0 0.0
        %2415 = vmatpush1.msra.mxu0 0.0
        %2416 = vmatprep.subr.mxu0 0.0
        %2417 = vmatpush1.msra.mxu0 0.0
        %2418 = vmatprep.subr.mxu0 0.0
        %2419 = vmatpush1.msra.mxu0 0.0
        %2420 = vmatprep.subr.mxu0 0.0
        %2421 = vmatpush1.msra.mxu0 0.0
        %2422 = vmatprep.subr.mxu0 0.0
        %2423 = vmatpush1.msra.mxu0 0.0
        %2424 = vmatprep.subr.mxu0 0.0
        %2425 = vmatpush1.msra.mxu0 0.0
        %2426 = vmatprep.subr.mxu0 0.0
        %2427 = vmatpush1.msra.mxu0 0.0
        %2428 = vmatprep.mubr.f32.mxu0 0.0
        %2429 = vmatmul.mubr.f32.gmra.mrb[0].mxu0 %v2222
        %v2430 = vpop.f32.mrb[0].mxu0
        %v2431 = vadd.f32 0.0, %v2430
        %v2432 = vpop.f32.mrb[0].mxu0
        %2433 = vdwg.mxu0
        %2434 = vmatprep.subr.mxu0 0.0
        %2435 = vmatpush1.msra.mxu0 %v962
        %2436 = vmatprep.subr.mxu0 0.0
        %2437 = vmatpush1.msra.mxu0 %v1098
        %2438 = vmatprep.subr.mxu0 0.0
        %2439 = vmatpush1.msra.mxu0 0.0
        %2440 = vmatprep.subr.mxu0 0.0
        %2441 = vmatpush1.msra.mxu0 0.0
        %2442 = vmatprep.subr.mxu0 0.0
        %2443 = vmatpush1.msra.mxu0 0.0
        %2444 = vmatprep.subr.mxu0 0.0
        %2445 = vmatpush1.msra.mxu0 0.0
        %2446 = vmatprep.subr.mxu0 0.0
        %2447 = vmatpush1.msra.mxu0 0.0
        %2448 = vmatprep.subr.mxu0 0.0
        %2449 = vmatpush1.msra.mxu0 0.0
        %2450 = vmatprep.subr.mxu0 0.0
        %2451 = vmatpush1.msra.mxu0 0.0
        %2452 = vmatprep.subr.mxu0 0.0
        %2453 = vmatpush1.msra.mxu0 0.0
        %2454 = vmatprep.subr.mxu0 0.0
        %2455 = vmatpush1.msra.mxu0 0.0
        %2456 = vmatprep.subr.mxu0 0.0
        %2457 = vmatpush1.msra.mxu0 0.0
        %2458 = vmatprep.subr.mxu0 0.0
        %2459 = vmatpush1.msra.mxu0 0.0
        %2460 = vmatprep.subr.mxu0 0.0
        %2461 = vmatpush1.msra.mxu0 0.0
        %2462 = vmatprep.subr.mxu0 0.0
        %2463 = vmatpush1.msra.mxu0 0.0
        %2464 = vmatprep.subr.mxu0 0.0
        %2465 = vmatpush1.msra.mxu0 0.0
        %2466 = vmatprep.subr.mxu0 0.0
        %2467 = vmatpush1.msra.mxu0 0.0
        %2468 = vmatprep.subr.mxu0 0.0
        %2469 = vmatpush1.msra.mxu0 0.0
        %2470 = vmatprep.subr.mxu0 0.0
        %2471 = vmatpush1.msra.mxu0 0.0
        %2472 = vmatprep.subr.mxu0 0.0
        %2473 = vmatpush1.msra.mxu0 0.0
        %2474 = vmatprep.subr.mxu0 0.0
        %2475 = vmatpush1.msra.mxu0 0.0
        %2476 = vmatprep.subr.mxu0 0.0
        %2477 = vmatpush1.msra.mxu0 0.0
        %2478 = vmatprep.subr.mxu0 0.0
        %2479 = vmatpush1.msra.mxu0 0.0
        %2480 = vmatprep.subr.mxu0 0.0
        %2481 = vmatpush1.msra.mxu0 0.0
        %2482 = vmatprep.subr.mxu0 0.0
        %2483 = vmatpush1.msra.mxu0 0.0
        %2484 = vmatprep.subr.mxu0 0.0
        %2485 = vmatpush1.msra.mxu0 0.0
        %2486 = vmatprep.subr.mxu0 0.0
        %2487 = vmatpush1.msra.mxu0 0.0
        %2488 = vmatprep.subr.mxu0 0.0
        %2489 = vmatpush1.msra.mxu0 0.0
        %2490 = vmatprep.subr.mxu0 0.0
        %2491 = vmatpush1.msra.mxu0 0.0
        %2492 = vmatprep.subr.mxu0 0.0
        %2493 = vmatpush1.msra.mxu0 0.0
        %2494 = vmatprep.subr.mxu0 0.0
        %2495 = vmatpush1.msra.mxu0 0.0
        %2496 = vmatprep.subr.mxu0 0.0
        %2497 = vmatpush1.msra.mxu0 0.0
        %2498 = vmatprep.mubr.f32.mxu0 0.0
        %2499 = vmatmul.mubr.f32.gmra.mrb[0].mxu0 %v2222
        %v2500 = vpop.f32.mrb[0].mxu0
        %v2501 = vadd.f32 0.0, %v2500
        %v2502 = vpop.f32.mrb[0].mxu0
        %2503 = vdwg.mxu0
        %v2505 = vsel %vm277, %v1650, 0
        %2507 = vmatprep.subr.mxu0 0.0
        %2508 = vmatpush1.msra.mxu0 %v963
        %2509 = vmatprep.subr.mxu0 0.0
        %2510 = vmatpush1.msra.mxu0 %v1099
        %2511 = vmatprep.subr.mxu0 0.0
        %2512 = vmatpush1.msra.mxu0 0.0
        %2513 = vmatprep.subr.mxu0 0.0
        %2514 = vmatpush1.msra.mxu0 0.0
        %2515 = vmatprep.subr.mxu0 0.0
        %2516 = vmatpush1.msra.mxu0 0.0
        %2517 = vmatprep.subr.mxu0 0.0
        %2518 = vmatpush1.msra.mxu0 0.0
        %2519 = vmatprep.subr.mxu0 0.0
        %2520 = vmatpush1.msra.mxu0 0.0
        %2521 = vmatprep.subr.mxu0 0.0
        %2522 = vmatpush1.msra.mxu0 0.0
        %2523 = vmatprep.subr.mxu0 0.0
        %2524 = vmatpush1.msra.mxu0 0.0
        %2525 = vmatprep.subr.mxu0 0.0
        %2526 = vmatpush1.msra.mxu0 0.0
        %2527 = vmatprep.subr.mxu0 0.0
        %2528 = vmatpush1.msra.mxu0 0.0
        %2529 = vmatprep.subr.mxu0 0.0
        %2530 = vmatpush1.msra.mxu0 0.0
        %2531 = vmatprep.subr.mxu0 0.0
        %2532 = vmatpush1.msra.mxu0 0.0
        %2533 = vmatprep.subr.mxu0 0.0
        %2534 = vmatpush1.msra.mxu0 0.0
        %2535 = vmatprep.subr.mxu0 0.0
        %2536 = vmatpush1.msra.mxu0 0.0
        %2537 = vmatprep.subr.mxu0 0.0
        %2538 = vmatpush1.msra.mxu0 0.0
        %2539 = vmatprep.subr.mxu0 0.0
        %2540 = vmatpush1.msra.mxu0 0.0
        %2541 = vmatprep.subr.mxu0 0.0
        %2542 = vmatpush1.msra.mxu0 0.0
        %2543 = vmatprep.subr.mxu0 0.0
        %2544 = vmatpush1.msra.mxu0 0.0
        %2545 = vmatprep.subr.mxu0 0.0
        %2546 = vmatpush1.msra.mxu0 0.0
        %2547 = vmatprep.subr.mxu0 0.0
        %2548 = vmatpush1.msra.mxu0 0.0
        %2549 = vmatprep.subr.mxu0 0.0
        %2550 = vmatpush1.msra.mxu0 0.0
        %2551 = vmatprep.subr.mxu0 0.0
        %2552 = vmatpush1.msra.mxu0 0.0
        %2553 = vmatprep.subr.mxu0 0.0
        %2554 = vmatpush1.msra.mxu0 0.0
        %2555 = vmatprep.subr.mxu0 0.0
        %2556 = vmatpush1.msra.mxu0 0.0
        %2557 = vmatprep.subr.mxu0 0.0
        %2558 = vmatpush1.msra.mxu0 0.0
        %2559 = vmatprep.subr.mxu0 0.0
        %2560 = vmatpush1.msra.mxu0 0.0
        %2561 = vmatprep.subr.mxu0 0.0
        %2562 = vmatpush1.msra.mxu0 0.0
        %2563 = vmatprep.subr.mxu0 0.0
        %2564 = vmatpush1.msra.mxu0 0.0
        %2565 = vmatprep.subr.mxu0 0.0
        %2566 = vmatpush1.msra.mxu0 0.0
        %2567 = vmatprep.subr.mxu0 0.0
        %2568 = vmatpush1.msra.mxu0 0.0
        %2569 = vmatprep.subr.mxu0 0.0
        %2570 = vmatpush1.msra.mxu0 0.0
        %2571 = vmatprep.mubr.f32.mxu0 0.0
        %2572 = vmatmul.mubr.f32.gmra.mrb[0].mxu0 %v2505
        %v2573 = vpop.f32.mrb[0].mxu0
        %v2574 = vadd.f32 0.0, %v2573
        %v2575 = vpop.f32.mrb[0].mxu0
        %2576 = vdwg.mxu0
        %2577 = vmatprep.subr.mxu0 0.0
        %2578 = vmatpush1.msra.mxu0 %v964
        %2579 = vmatprep.subr.mxu0 0.0
        %2580 = vmatpush1.msra.mxu0 %v1100
        %2581 = vmatprep.subr.mxu0 0.0
        %2582 = vmatpush1.msra.mxu0 0.0
        %2583 = vmatprep.subr.mxu0 0.0
        %2584 = vmatpush1.msra.mxu0 0.0
        %2585 = vmatprep.subr.mxu0 0.0
        %2586 = vmatpush1.msra.mxu0 0.0
        %2587 = vmatprep.subr.mxu0 0.0
        %2588 = vmatpush1.msra.mxu0 0.0
        %2589 = vmatprep.subr.mxu0 0.0
        %2590 = vmatpush1.msra.mxu0 0.0
        %2591 = vmatprep.subr.mxu0 0.0
        %2592 = vmatpush1.msra.mxu0 0.0
        %2593 = vmatprep.subr.mxu0 0.0
        %2594 = vmatpush1.msra.mxu0 0.0
        %2595 = vmatprep.subr.mxu0 0.0
        %2596 = vmatpush1.msra.mxu0 0.0
        %2597 = vmatprep.subr.mxu0 0.0
        %2598 = vmatpush1.msra.mxu0 0.0
        %2599 = vmatprep.subr.mxu0 0.0
        %2600 = vmatpush1.msra.mxu0 0.0
        %2601 = vmatprep.subr.mxu0 0.0
        %2602 = vmatpush1.msra.mxu0 0.0
        %2603 = vmatprep.subr.mxu0 0.0
        %2604 = vmatpush1.msra.mxu0 0.0
        %2605 = vmatprep.subr.mxu0 0.0
        %2606 = vmatpush1.msra.mxu0 0.0
        %2607 = vmatprep.subr.mxu0 0.0
        %2608 = vmatpush1.msra.mxu0 0.0
        %2609 = vmatprep.subr.mxu0 0.0
        %2610 = vmatpush1.msra.mxu0 0.0
        %2611 = vmatprep.subr.mxu0 0.0
        %2612 = vmatpush1.msra.mxu0 0.0
        %2613 = vmatprep.subr.mxu0 0.0
        %2614 = vmatpush1.msra.mxu0 0.0
        %2615 = vmatprep.subr.mxu0 0.0
        %2616 = vmatpush1.msra.mxu0 0.0
        %2617 = vmatprep.subr.mxu0 0.0
        %2618 = vmatpush1.msra.mxu0 0.0
        %2619 = vmatprep.subr.mxu0 0.0
        %2620 = vmatpush1.msra.mxu0 0.0
        %2621 = vmatprep.subr.mxu0 0.0
        %2622 = vmatpush1.msra.mxu0 0.0
        %2623 = vmatprep.subr.mxu0 0.0
        %2624 = vmatpush1.msra.mxu0 0.0
        %2625 = vmatprep.subr.mxu0 0.0
        %2626 = vmatpush1.msra.mxu0 0.0
        %2627 = vmatprep.subr.mxu0 0.0
        %2628 = vmatpush1.msra.mxu0 0.0
        %2629 = vmatprep.subr.mxu0 0.0
        %2630 = vmatpush1.msra.mxu0 0.0
        %2631 = vmatprep.subr.mxu0 0.0
        %2632 = vmatpush1.msra.mxu0 0.0
        %2633 = vmatprep.subr.mxu0 0.0
        %2634 = vmatpush1.msra.mxu0 0.0
        %2635 = vmatprep.subr.mxu0 0.0
        %2636 = vmatpush1.msra.mxu0 0.0
        %2637 = vmatprep.subr.mxu0 0.0
        %2638 = vmatpush1.msra.mxu0 0.0
        %2639 = vmatprep.subr.mxu0 0.0
        %2640 = vmatpush1.msra.mxu0 0.0
        %2641 = vmatprep.mubr.f32.mxu0 0.0
        %2642 = vmatmul.mubr.f32.gmra.mrb[0].mxu0 %v2505
        %v2643 = vpop.f32.mrb[0].mxu0
        %v2644 = vadd.f32 0.0, %v2643
        %v2645 = vpop.f32.mrb[0].mxu0
        %2646 = vdwg.mxu0
        %2647 = vmatprep.subr.mxu0 0.0
        %2648 = vmatpush1.msra.mxu0 %v965
        %2649 = vmatprep.subr.mxu0 0.0
        %2650 = vmatpush1.msra.mxu0 %v1101
        %2651 = vmatprep.subr.mxu0 0.0
        %2652 = vmatpush1.msra.mxu0 0.0
        %2653 = vmatprep.subr.mxu0 0.0
        %2654 = vmatpush1.msra.mxu0 0.0
        %2655 = vmatprep.subr.mxu0 0.0
        %2656 = vmatpush1.msra.mxu0 0.0
        %2657 = vmatprep.subr.mxu0 0.0
        %2658 = vmatpush1.msra.mxu0 0.0
        %2659 = vmatprep.subr.mxu0 0.0
        %2660 = vmatpush1.msra.mxu0 0.0
        %2661 = vmatprep.subr.mxu0 0.0
        %2662 = vmatpush1.msra.mxu0 0.0
        %2663 = vmatprep.subr.mxu0 0.0
        %2664 = vmatpush1.msra.mxu0 0.0
        %2665 = vmatprep.subr.mxu0 0.0
        %2666 = vmatpush1.msra.mxu0 0.0
        %2667 = vmatprep.subr.mxu0 0.0
        %2668 = vmatpush1.msra.mxu0 0.0
        %2669 = vmatprep.subr.mxu0 0.0
        %2670 = vmatpush1.msra.mxu0 0.0
        %2671 = vmatprep.subr.mxu0 0.0
        %2672 = vmatpush1.msra.mxu0 0.0
        %2673 = vmatprep.subr.mxu0 0.0
        %2674 = vmatpush1.msra.mxu0 0.0
        %2675 = vmatprep.subr.mxu0 0.0
        %2676 = vmatpush1.msra.mxu0 0.0
        %2677 = vmatprep.subr.mxu0 0.0
        %2678 = vmatpush1.msra.mxu0 0.0
        %2679 = vmatprep.subr.mxu0 0.0
        %2680 = vmatpush1.msra.mxu0 0.0
        %2681 = vmatprep.subr.mxu0 0.0
        %2682 = vmatpush1.msra.mxu0 0.0
        %2683 = vmatprep.subr.mxu0 0.0
        %2684 = vmatpush1.msra.mxu0 0.0
        %2685 = vmatprep.subr.mxu0 0.0
        %2686 = vmatpush1.msra.mxu0 0.0
        %2687 = vmatprep.subr.mxu0 0.0
        %2688 = vmatpush1.msra.mxu0 0.0
        %2689 = vmatprep.subr.mxu0 0.0
        %2690 = vmatpush1.msra.mxu0 0.0
        %2691 = vmatprep.subr.mxu0 0.0
        %2692 = vmatpush1.msra.mxu0 0.0
        %2693 = vmatprep.subr.mxu0 0.0
        %2694 = vmatpush1.msra.mxu0 0.0
        %2695 = vmatprep.subr.mxu0 0.0
        %2696 = vmatpush1.msra.mxu0 0.0
        %2697 = vmatprep.subr.mxu0 0.0
        %2698 = vmatpush1.msra.mxu0 0.0
        %2699 = vmatprep.subr.mxu0 0.0
        %2700 = vmatpush1.msra.mxu0 0.0
        %2701 = vmatprep.subr.mxu0 0.0
        %2702 = vmatpush1.msra.mxu0 0.0
        %2703 = vmatprep.subr.mxu0 0.0
        %2704 = vmatpush1.msra.mxu0 0.0
        %2705 = vmatprep.subr.mxu0 0.0
        %2706 = vmatpush1.msra.mxu0 0.0
        %2707 = vmatprep.subr.mxu0 0.0
        %2708 = vmatpush1.msra.mxu0 0.0
        %2709 = vmatprep.subr.mxu0 0.0
        %2710 = vmatpush1.msra.mxu0 0.0
        %2711 = vmatprep.mubr.f32.mxu0 0.0
        %2712 = vmatmul.mubr.f32.gmra.mrb[0].mxu0 %v2505
        %v2713 = vpop.f32.mrb[0].mxu0
        %v2714 = vadd.f32 0.0, %v2713
        %v2715 = vpop.f32.mrb[0].mxu0
        %2716 = vdwg.mxu0
        %2717 = vmatprep.subr.mxu0 0.0
        %2718 = vmatpush1.msra.mxu0 %v966
        %2719 = vmatprep.subr.mxu0 0.0
        %2720 = vmatpush1.msra.mxu0 %v1102
        %2721 = vmatprep.subr.mxu0 0.0
        %2722 = vmatpush1.msra.mxu0 0.0
        %2723 = vmatprep.subr.mxu0 0.0
        %2724 = vmatpush1.msra.mxu0 0.0
        %2725 = vmatprep.subr.mxu0 0.0
        %2726 = vmatpush1.msra.mxu0 0.0
        %2727 = vmatprep.subr.mxu0 0.0
        %2728 = vmatpush1.msra.mxu0 0.0
        %2729 = vmatprep.subr.mxu0 0.0
        %2730 = vmatpush1.msra.mxu0 0.0
        %2731 = vmatprep.subr.mxu0 0.0
        %2732 = vmatpush1.msra.mxu0 0.0
        %2733 = vmatprep.subr.mxu0 0.0
        %2734 = vmatpush1.msra.mxu0 0.0
        %2735 = vmatprep.subr.mxu0 0.0
        %2736 = vmatpush1.msra.mxu0 0.0
        %2737 = vmatprep.subr.mxu0 0.0
        %2738 = vmatpush1.msra.mxu0 0.0
        %2739 = vmatprep.subr.mxu0 0.0
        %2740 = vmatpush1.msra.mxu0 0.0
        %2741 = vmatprep.subr.mxu0 0.0
        %2742 = vmatpush1.msra.mxu0 0.0
        %2743 = vmatprep.subr.mxu0 0.0
        %2744 = vmatpush1.msra.mxu0 0.0
        %2745 = vmatprep.subr.mxu0 0.0
        %2746 = vmatpush1.msra.mxu0 0.0
        %2747 = vmatprep.subr.mxu0 0.0
        %2748 = vmatpush1.msra.mxu0 0.0
        %2749 = vmatprep.subr.mxu0 0.0
        %2750 = vmatpush1.msra.mxu0 0.0
        %2751 = vmatprep.subr.mxu0 0.0
        %2752 = vmatpush1.msra.mxu0 0.0
        %2753 = vmatprep.subr.mxu0 0.0
        %2754 = vmatpush1.msra.mxu0 0.0
        %2755 = vmatprep.subr.mxu0 0.0
        %2756 = vmatpush1.msra.mxu0 0.0
        %2757 = vmatprep.subr.mxu0 0.0
        %2758 = vmatpush1.msra.mxu0 0.0
        %2759 = vmatprep.subr.mxu0 0.0
        %2760 = vmatpush1.msra.mxu0 0.0
        %2761 = vmatprep.subr.mxu0 0.0
        %2762 = vmatpush1.msra.mxu0 0.0
        %2763 = vmatprep.subr.mxu0 0.0
        %2764 = vmatpush1.msra.mxu0 0.0
        %2765 = vmatprep.subr.mxu0 0.0
        %2766 = vmatpush1.msra.mxu0 0.0
        %2767 = vmatprep.subr.mxu0 0.0
        %2768 = vmatpush1.msra.mxu0 0.0
        %2769 = vmatprep.subr.mxu0 0.0
        %2770 = vmatpush1.msra.mxu0 0.0
        %2771 = vmatprep.subr.mxu0 0.0
        %2772 = vmatpush1.msra.mxu0 0.0
        %2773 = vmatprep.subr.mxu0 0.0
        %2774 = vmatpush1.msra.mxu0 0.0
        %2775 = vmatprep.subr.mxu0 0.0
        %2776 = vmatpush1.msra.mxu0 0.0
        %2777 = vmatprep.subr.mxu0 0.0
        %2778 = vmatpush1.msra.mxu0 0.0
        %2779 = vmatprep.subr.mxu0 0.0
        %2780 = vmatpush1.msra.mxu0 0.0
        %2781 = vmatprep.mubr.f32.mxu0 0.0
        %2782 = vmatmul.mubr.f32.gmra.mrb[0].mxu0 %v2505
        %v2783 = vpop.f32.mrb[0].mxu0
        %v2784 = vadd.f32 0.0, %v2783
        %v2785 = vpop.f32.mrb[0].mxu0
        %2786 = vdwg.mxu0
        %v2788 = vsel %vm277, %v1651, 0
        %2790 = vmatprep.subr.mxu0 0.0
        %2791 = vmatpush1.msra.mxu0 %v1231
        %2792 = vmatprep.subr.mxu0 0.0
        %2793 = vmatpush1.msra.mxu0 %v1367
        %2794 = vmatprep.subr.mxu0 0.0
        %2795 = vmatpush1.msra.mxu0 0.0
        %2796 = vmatprep.subr.mxu0 0.0
        %2797 = vmatpush1.msra.mxu0 0.0
        %2798 = vmatprep.subr.mxu0 0.0
        %2799 = vmatpush1.msra.mxu0 0.0
        %2800 = vmatprep.subr.mxu0 0.0
        %2801 = vmatpush1.msra.mxu0 0.0
        %2802 = vmatprep.subr.mxu0 0.0
        %2803 = vmatpush1.msra.mxu0 0.0
        %2804 = vmatprep.subr.mxu0 0.0
        %2805 = vmatpush1.msra.mxu0 0.0
        %2806 = vmatprep.subr.mxu0 0.0
        %2807 = vmatpush1.msra.mxu0 0.0
        %2808 = vmatprep.subr.mxu0 0.0
        %2809 = vmatpush1.msra.mxu0 0.0
        %2810 = vmatprep.subr.mxu0 0.0
        %2811 = vmatpush1.msra.mxu0 0.0
        %2812 = vmatprep.subr.mxu0 0.0
        %2813 = vmatpush1.msra.mxu0 0.0
        %2814 = vmatprep.subr.mxu0 0.0
        %2815 = vmatpush1.msra.mxu0 0.0
        %2816 = vmatprep.subr.mxu0 0.0
        %2817 = vmatpush1.msra.mxu0 0.0
        %2818 = vmatprep.subr.mxu0 0.0
        %2819 = vmatpush1.msra.mxu0 0.0
        %2820 = vmatprep.subr.mxu0 0.0
        %2821 = vmatpush1.msra.mxu0 0.0
        %2822 = vmatprep.subr.mxu0 0.0
        %2823 = vmatpush1.msra.mxu0 0.0
        %2824 = vmatprep.subr.mxu0 0.0
        %2825 = vmatpush1.msra.mxu0 0.0
        %2826 = vmatprep.subr.mxu0 0.0
        %2827 = vmatpush1.msra.mxu0 0.0
        %2828 = vmatprep.subr.mxu0 0.0
        %2829 = vmatpush1.msra.mxu0 0.0
        %2830 = vmatprep.subr.mxu0 0.0
        %2831 = vmatpush1.msra.mxu0 0.0
        %2832 = vmatprep.subr.mxu0 0.0
        %2833 = vmatpush1.msra.mxu0 0.0
        %2834 = vmatprep.subr.mxu0 0.0
        %2835 = vmatpush1.msra.mxu0 0.0
        %2836 = vmatprep.subr.mxu0 0.0
        %2837 = vmatpush1.msra.mxu0 0.0
        %2838 = vmatprep.subr.mxu0 0.0
        %2839 = vmatpush1.msra.mxu0 0.0
        %2840 = vmatprep.subr.mxu0 0.0
        %2841 = vmatpush1.msra.mxu0 0.0
        %2842 = vmatprep.subr.mxu0 0.0
        %2843 = vmatpush1.msra.mxu0 0.0
        %2844 = vmatprep.subr.mxu0 0.0
        %2845 = vmatpush1.msra.mxu0 0.0
        %2846 = vmatprep.subr.mxu0 0.0
        %2847 = vmatpush1.msra.mxu0 0.0
        %2848 = vmatprep.subr.mxu0 0.0
        %2849 = vmatpush1.msra.mxu0 0.0
        %2850 = vmatprep.subr.mxu0 0.0
        %2851 = vmatpush1.msra.mxu0 0.0
        %2852 = vmatprep.subr.mxu0 0.0
        %2853 = vmatpush1.msra.mxu0 0.0
        %2854 = vmatprep.mubr.f32.mxu0 0.0
        %2855 = vmatmul.mubr.f32.gmra.mrb[0].mxu0 %v2788
        %v2856 = vpop.f32.mrb[0].mxu0
        %v2857 = vadd.f32 0.0, %v2856
        %v2858 = vpop.f32.mrb[0].mxu0
        %2859 = vdwg.mxu0
        %2860 = vmatprep.subr.mxu0 0.0
        %2861 = vmatpush1.msra.mxu0 %v1232
        %2862 = vmatprep.subr.mxu0 0.0
        %2863 = vmatpush1.msra.mxu0 %v1368
        %2864 = vmatprep.subr.mxu0 0.0
        %2865 = vmatpush1.msra.mxu0 0.0
        %2866 = vmatprep.subr.mxu0 0.0
        %2867 = vmatpush1.msra.mxu0 0.0
        %2868 = vmatprep.subr.mxu0 0.0
        %2869 = vmatpush1.msra.mxu0 0.0
        %2870 = vmatprep.subr.mxu0 0.0
        %2871 = vmatpush1.msra.mxu0 0.0
        %2872 = vmatprep.subr.mxu0 0.0
        %2873 = vmatpush1.msra.mxu0 0.0
        %2874 = vmatprep.subr.mxu0 0.0
        %2875 = vmatpush1.msra.mxu0 0.0
        %2876 = vmatprep.subr.mxu0 0.0
        %2877 = vmatpush1.msra.mxu0 0.0
        %2878 = vmatprep.subr.mxu0 0.0
        %2879 = vmatpush1.msra.mxu0 0.0
        %2880 = vmatprep.subr.mxu0 0.0
        %2881 = vmatpush1.msra.mxu0 0.0
        %2882 = vmatprep.subr.mxu0 0.0
        %2883 = vmatpush1.msra.mxu0 0.0
        %2884 = vmatprep.subr.mxu0 0.0
        %2885 = vmatpush1.msra.mxu0 0.0
        %2886 = vmatprep.subr.mxu0 0.0
        %2887 = vmatpush1.msra.mxu0 0.0
        %2888 = vmatprep.subr.mxu0 0.0
        %2889 = vmatpush1.msra.mxu0 0.0
        %2890 = vmatprep.subr.mxu0 0.0
        %2891 = vmatpush1.msra.mxu0 0.0
        %2892 = vmatprep.subr.mxu0 0.0
        %2893 = vmatpush1.msra.mxu0 0.0
        %2894 = vmatprep.subr.mxu0 0.0
        %2895 = vmatpush1.msra.mxu0 0.0
        %2896 = vmatprep.subr.mxu0 0.0
        %2897 = vmatpush1.msra.mxu0 0.0
        %2898 = vmatprep.subr.mxu0 0.0
        %2899 = vmatpush1.msra.mxu0 0.0
        %2900 = vmatprep.subr.mxu0 0.0
        %2901 = vmatpush1.msra.mxu0 0.0
        %2902 = vmatprep.subr.mxu0 0.0
        %2903 = vmatpush1.msra.mxu0 0.0
        %2904 = vmatprep.subr.mxu0 0.0
        %2905 = vmatpush1.msra.mxu0 0.0
        %2906 = vmatprep.subr.mxu0 0.0
        %2907 = vmatpush1.msra.mxu0 0.0
        %2908 = vmatprep.subr.mxu0 0.0
        %2909 = vmatpush1.msra.mxu0 0.0
        %2910 = vmatprep.subr.mxu0 0.0
        %2911 = vmatpush1.msra.mxu0 0.0
        %2912 = vmatprep.subr.mxu0 0.0
        %2913 = vmatpush1.msra.mxu0 0.0
        %2914 = vmatprep.subr.mxu0 0.0
        %2915 = vmatpush1.msra.mxu0 0.0
        %2916 = vmatprep.subr.mxu0 0.0
        %2917 = vmatpush1.msra.mxu0 0.0
        %2918 = vmatprep.subr.mxu0 0.0
        %2919 = vmatpush1.msra.mxu0 0.0
        %2920 = vmatprep.subr.mxu0 0.0
        %2921 = vmatpush1.msra.mxu0 0.0
        %2922 = vmatprep.subr.mxu0 0.0
        %2923 = vmatpush1.msra.mxu0 0.0
        %2924 = vmatprep.mubr.f32.mxu0 0.0
        %2925 = vmatmul.mubr.f32.gmra.mrb[0].mxu0 %v2788
        %v2926 = vpop.f32.mrb[0].mxu0
        %v2927 = vadd.f32 0.0, %v2926
        %v2928 = vpop.f32.mrb[0].mxu0
        %2929 = vdwg.mxu0
        %2930 = vmatprep.subr.mxu0 0.0
        %2931 = vmatpush1.msra.mxu0 %v1233
        %2932 = vmatprep.subr.mxu0 0.0
        %2933 = vmatpush1.msra.mxu0 %v1369
        %2934 = vmatprep.subr.mxu0 0.0
        %2935 = vmatpush1.msra.mxu0 0.0
        %2936 = vmatprep.subr.mxu0 0.0
        %2937 = vmatpush1.msra.mxu0 0.0
        %2938 = vmatprep.subr.mxu0 0.0
        %2939 = vmatpush1.msra.mxu0 0.0
        %2940 = vmatprep.subr.mxu0 0.0
        %2941 = vmatpush1.msra.mxu0 0.0
        %2942 = vmatprep.subr.mxu0 0.0
        %2943 = vmatpush1.msra.mxu0 0.0
        %2944 = vmatprep.subr.mxu0 0.0
        %2945 = vmatpush1.msra.mxu0 0.0
        %2946 = vmatprep.subr.mxu0 0.0
        %2947 = vmatpush1.msra.mxu0 0.0
        %2948 = vmatprep.subr.mxu0 0.0
        %2949 = vmatpush1.msra.mxu0 0.0
        %2950 = vmatprep.subr.mxu0 0.0
        %2951 = vmatpush1.msra.mxu0 0.0
        %2952 = vmatprep.subr.mxu0 0.0
        %2953 = vmatpush1.msra.mxu0 0.0
        %2954 = vmatprep.subr.mxu0 0.0
        %2955 = vmatpush1.msra.mxu0 0.0
        %2956 = vmatprep.subr.mxu0 0.0
        %2957 = vmatpush1.msra.mxu0 0.0
        %2958 = vmatprep.subr.mxu0 0.0
        %2959 = vmatpush1.msra.mxu0 0.0
        %2960 = vmatprep.subr.mxu0 0.0
        %2961 = vmatpush1.msra.mxu0 0.0
        %2962 = vmatprep.subr.mxu0 0.0
        %2963 = vmatpush1.msra.mxu0 0.0
        %2964 = vmatprep.subr.mxu0 0.0
        %2965 = vmatpush1.msra.mxu0 0.0
        %2966 = vmatprep.subr.mxu0 0.0
        %2967 = vmatpush1.msra.mxu0 0.0
        %2968 = vmatprep.subr.mxu0 0.0
        %2969 = vmatpush1.msra.mxu0 0.0
        %2970 = vmatprep.subr.mxu0 0.0
        %2971 = vmatpush1.msra.mxu0 0.0
        %2972 = vmatprep.subr.mxu0 0.0
        %2973 = vmatpush1.msra.mxu0 0.0
        %2974 = vmatprep.subr.mxu0 0.0
        %2975 = vmatpush1.msra.mxu0 0.0
        %2976 = vmatprep.subr.mxu0 0.0
        %2977 = vmatpush1.msra.mxu0 0.0
        %2978 = vmatprep.subr.mxu0 0.0
        %2979 = vmatpush1.msra.mxu0 0.0
        %2980 = vmatprep.subr.mxu0 0.0
        %2981 = vmatpush1.msra.mxu0 0.0
        %2982 = vmatprep.subr.mxu0 0.0
        %2983 = vmatpush1.msra.mxu0 0.0
        %2984 = vmatprep.subr.mxu0 0.0
        %2985 = vmatpush1.msra.mxu0 0.0
        %2986 = vmatprep.subr.mxu0 0.0
        %2987 = vmatpush1.msra.mxu0 0.0
        %2988 = vmatprep.subr.mxu0 0.0
        %2989 = vmatpush1.msra.mxu0 0.0
        %2990 = vmatprep.subr.mxu0 0.0
        %2991 = vmatpush1.msra.mxu0 0.0
        %2992 = vmatprep.subr.mxu0 0.0
        %2993 = vmatpush1.msra.mxu0 0.0
        %2994 = vmatprep.mubr.f32.mxu0 0.0
        %2995 = vmatmul.mubr.f32.gmra.mrb[0].mxu0 %v2788
        %v2996 = vpop.f32.mrb[0].mxu0
        %v2997 = vadd.f32 0.0, %v2996
        %v2998 = vpop.f32.mrb[0].mxu0
        %2999 = vdwg.mxu0
        %3000 = vmatprep.subr.mxu0 0.0
        %3001 = vmatpush1.msra.mxu0 %v1234
        %3002 = vmatprep.subr.mxu0 0.0
        %3003 = vmatpush1.msra.mxu0 %v1370
        %3004 = vmatprep.subr.mxu0 0.0
        %3005 = vmatpush1.msra.mxu0 0.0
        %3006 = vmatprep.subr.mxu0 0.0
        %3007 = vmatpush1.msra.mxu0 0.0
        %3008 = vmatprep.subr.mxu0 0.0
        %3009 = vmatpush1.msra.mxu0 0.0
        %3010 = vmatprep.subr.mxu0 0.0
        %3011 = vmatpush1.msra.mxu0 0.0
        %3012 = vmatprep.subr.mxu0 0.0
        %3013 = vmatpush1.msra.mxu0 0.0
        %3014 = vmatprep.subr.mxu0 0.0
        %3015 = vmatpush1.msra.mxu0 0.0
        %3016 = vmatprep.subr.mxu0 0.0
        %3017 = vmatpush1.msra.mxu0 0.0
        %3018 = vmatprep.subr.mxu0 0.0
        %3019 = vmatpush1.msra.mxu0 0.0
        %3020 = vmatprep.subr.mxu0 0.0
        %3021 = vmatpush1.msra.mxu0 0.0
        %3022 = vmatprep.subr.mxu0 0.0
        %3023 = vmatpush1.msra.mxu0 0.0
        %3024 = vmatprep.subr.mxu0 0.0
        %3025 = vmatpush1.msra.mxu0 0.0
        %3026 = vmatprep.subr.mxu0 0.0
        %3027 = vmatpush1.msra.mxu0 0.0
        %3028 = vmatprep.subr.mxu0 0.0
        %3029 = vmatpush1.msra.mxu0 0.0
        %3030 = vmatprep.subr.mxu0 0.0
        %3031 = vmatpush1.msra.mxu0 0.0
        %3032 = vmatprep.subr.mxu0 0.0
        %3033 = vmatpush1.msra.mxu0 0.0
        %3034 = vmatprep.subr.mxu0 0.0
        %3035 = vmatpush1.msra.mxu0 0.0
        %3036 = vmatprep.subr.mxu0 0.0
        %3037 = vmatpush1.msra.mxu0 0.0
        %3038 = vmatprep.subr.mxu0 0.0
        %3039 = vmatpush1.msra.mxu0 0.0
        %3040 = vmatprep.subr.mxu0 0.0
        %3041 = vmatpush1.msra.mxu0 0.0
        %3042 = vmatprep.subr.mxu0 0.0
        %3043 = vmatpush1.msra.mxu0 0.0
        %3044 = vmatprep.subr.mxu0 0.0
        %3045 = vmatpush1.msra.mxu0 0.0
        %3046 = vmatprep.subr.mxu0 0.0
        %3047 = vmatpush1.msra.mxu0 0.0
        %3048 = vmatprep.subr.mxu0 0.0
        %3049 = vmatpush1.msra.mxu0 0.0
        %3050 = vmatprep.subr.mxu0 0.0
        %3051 = vmatpush1.msra.mxu0 0.0
        %3052 = vmatprep.subr.mxu0 0.0
        %3053 = vmatpush1.msra.mxu0 0.0
        %3054 = vmatprep.subr.mxu0 0.0
        %3055 = vmatpush1.msra.mxu0 0.0
        %3056 = vmatprep.subr.mxu0 0.0
        %3057 = vmatpush1.msra.mxu0 0.0
        %3058 = vmatprep.subr.mxu0 0.0
        %3059 = vmatpush1.msra.mxu0 0.0
        %3060 = vmatprep.subr.mxu0 0.0
        %3061 = vmatpush1.msra.mxu0 0.0
        %3062 = vmatprep.subr.mxu0 0.0
        %3063 = vmatpush1.msra.mxu0 0.0
        %3064 = vmatprep.mubr.f32.mxu0 0.0
        %3065 = vmatmul.mubr.f32.gmra.mrb[0].mxu0 %v2788
        %v3066 = vpop.f32.mrb[0].mxu0
        %v3067 = vadd.f32 0.0, %v3066
        %v3068 = vpop.f32.mrb[0].mxu0
        %3069 = vdwg.mxu0
        %v3071 = vsel %vm277, %v1652, 0
        %3073 = vmatprep.subr.mxu0 0.0
        %3074 = vmatpush1.msra.mxu0 %v1235
        %3075 = vmatprep.subr.mxu0 0.0
        %3076 = vmatpush1.msra.mxu0 %v1371
        %3077 = vmatprep.subr.mxu0 0.0
        %3078 = vmatpush1.msra.mxu0 0.0
        %3079 = vmatprep.subr.mxu0 0.0
        %3080 = vmatpush1.msra.mxu0 0.0
        %3081 = vmatprep.subr.mxu0 0.0
        %3082 = vmatpush1.msra.mxu0 0.0
        %3083 = vmatprep.subr.mxu0 0.0
        %3084 = vmatpush1.msra.mxu0 0.0
        %3085 = vmatprep.subr.mxu0 0.0
        %3086 = vmatpush1.msra.mxu0 0.0
        %3087 = vmatprep.subr.mxu0 0.0
        %3088 = vmatpush1.msra.mxu0 0.0
        %3089 = vmatprep.subr.mxu0 0.0
        %3090 = vmatpush1.msra.mxu0 0.0
        %3091 = vmatprep.subr.mxu0 0.0
        %3092 = vmatpush1.msra.mxu0 0.0
        %3093 = vmatprep.subr.mxu0 0.0
        %3094 = vmatpush1.msra.mxu0 0.0
        %3095 = vmatprep.subr.mxu0 0.0
        %3096 = vmatpush1.msra.mxu0 0.0
        %3097 = vmatprep.subr.mxu0 0.0
        %3098 = vmatpush1.msra.mxu0 0.0
        %3099 = vmatprep.subr.mxu0 0.0
        %3100 = vmatpush1.msra.mxu0 0.0
        %3101 = vmatprep.subr.mxu0 0.0
        %3102 = vmatpush1.msra.mxu0 0.0
        %3103 = vmatprep.subr.mxu0 0.0
        %3104 = vmatpush1.msra.mxu0 0.0
        %3105 = vmatprep.subr.mxu0 0.0
        %3106 = vmatpush1.msra.mxu0 0.0
        %3107 = vmatprep.subr.mxu0 0.0
        %3108 = vmatpush1.msra.mxu0 0.0
        %3109 = vmatprep.subr.mxu0 0.0
        %3110 = vmatpush1.msra.mxu0 0.0
        %3111 = vmatprep.subr.mxu0 0.0
        %3112 = vmatpush1.msra.mxu0 0.0
        %3113 = vmatprep.subr.mxu0 0.0
        %3114 = vmatpush1.msra.mxu0 0.0
        %3115 = vmatprep.subr.mxu0 0.0
        %3116 = vmatpush1.msra.mxu0 0.0
        %3117 = vmatprep.subr.mxu0 0.0
        %3118 = vmatpush1.msra.mxu0 0.0
        %3119 = vmatprep.subr.mxu0 0.0
        %3120 = vmatpush1.msra.mxu0 0.0
        %3121 = vmatprep.subr.mxu0 0.0
        %3122 = vmatpush1.msra.mxu0 0.0
        %3123 = vmatprep.subr.mxu0 0.0
        %3124 = vmatpush1.msra.mxu0 0.0
        %3125 = vmatprep.subr.mxu0 0.0
        %3126 = vmatpush1.msra.mxu0 0.0
        %3127 = vmatprep.subr.mxu0 0.0
        %3128 = vmatpush1.msra.mxu0 0.0
        %3129 = vmatprep.subr.mxu0 0.0
        %3130 = vmatpush1.msra.mxu0 0.0
        %3131 = vmatprep.subr.mxu0 0.0
        %3132 = vmatpush1.msra.mxu0 0.0
        %3133 = vmatprep.subr.mxu0 0.0
        %3134 = vmatpush1.msra.mxu0 0.0
        %3135 = vmatprep.subr.mxu0 0.0
        %3136 = vmatpush1.msra.mxu0 0.0
        %3137 = vmatprep.mubr.f32.mxu0 0.0
        %3138 = vmatmul.mubr.f32.gmra.mrb[0].mxu0 %v3071
        %v3139 = vpop.f32.mrb[0].mxu0
        %v3140 = vadd.f32 0.0, %v3139
        %v3141 = vpop.f32.mrb[0].mxu0
        %3142 = vdwg.mxu0
        %3143 = vmatprep.subr.mxu0 0.0
        %3144 = vmatpush1.msra.mxu0 %v1236
        %3145 = vmatprep.subr.mxu0 0.0
        %3146 = vmatpush1.msra.mxu0 %v1372
        %3147 = vmatprep.subr.mxu0 0.0
        %3148 = vmatpush1.msra.mxu0 0.0
        %3149 = vmatprep.subr.mxu0 0.0
        %3150 = vmatpush1.msra.mxu0 0.0
        %3151 = vmatprep.subr.mxu0 0.0
        %3152 = vmatpush1.msra.mxu0 0.0
        %3153 = vmatprep.subr.mxu0 0.0
        %3154 = vmatpush1.msra.mxu0 0.0
        %3155 = vmatprep.subr.mxu0 0.0
        %3156 = vmatpush1.msra.mxu0 0.0
        %3157 = vmatprep.subr.mxu0 0.0
        %3158 = vmatpush1.msra.mxu0 0.0
        %3159 = vmatprep.subr.mxu0 0.0
        %3160 = vmatpush1.msra.mxu0 0.0
        %3161 = vmatprep.subr.mxu0 0.0
        %3162 = vmatpush1.msra.mxu0 0.0
        %3163 = vmatprep.subr.mxu0 0.0
        %3164 = vmatpush1.msra.mxu0 0.0
        %3165 = vmatprep.subr.mxu0 0.0
        %3166 = vmatpush1.msra.mxu0 0.0
        %3167 = vmatprep.subr.mxu0 0.0
        %3168 = vmatpush1.msra.mxu0 0.0
        %3169 = vmatprep.subr.mxu0 0.0
        %3170 = vmatpush1.msra.mxu0 0.0
        %3171 = vmatprep.subr.mxu0 0.0
        %3172 = vmatpush1.msra.mxu0 0.0
        %3173 = vmatprep.subr.mxu0 0.0
        %3174 = vmatpush1.msra.mxu0 0.0
        %3175 = vmatprep.subr.mxu0 0.0
        %3176 = vmatpush1.msra.mxu0 0.0
        %3177 = vmatprep.subr.mxu0 0.0
        %3178 = vmatpush1.msra.mxu0 0.0
        %3179 = vmatprep.subr.mxu0 0.0
        %3180 = vmatpush1.msra.mxu0 0.0
        %3181 = vmatprep.subr.mxu0 0.0
        %3182 = vmatpush1.msra.mxu0 0.0
        %3183 = vmatprep.subr.mxu0 0.0
        %3184 = vmatpush1.msra.mxu0 0.0
        %3185 = vmatprep.subr.mxu0 0.0
        %3186 = vmatpush1.msra.mxu0 0.0
        %3187 = vmatprep.subr.mxu0 0.0
        %3188 = vmatpush1.msra.mxu0 0.0
        %3189 = vmatprep.subr.mxu0 0.0
        %3190 = vmatpush1.msra.mxu0 0.0
        %3191 = vmatprep.subr.mxu0 0.0
        %3192 = vmatpush1.msra.mxu0 0.0
        %3193 = vmatprep.subr.mxu0 0.0
        %3194 = vmatpush1.msra.mxu0 0.0
        %3195 = vmatprep.subr.mxu0 0.0
        %3196 = vmatpush1.msra.mxu0 0.0
        %3197 = vmatprep.subr.mxu0 0.0
        %3198 = vmatpush1.msra.mxu0 0.0
        %3199 = vmatprep.subr.mxu0 0.0
        %3200 = vmatpush1.msra.mxu0 0.0
        %3201 = vmatprep.subr.mxu0 0.0
        %3202 = vmatpush1.msra.mxu0 0.0
        %3203 = vmatprep.subr.mxu0 0.0
        %3204 = vmatpush1.msra.mxu0 0.0
        %3205 = vmatprep.subr.mxu0 0.0
        %3206 = vmatpush1.msra.mxu0 0.0
        %3207 = vmatprep.mubr.f32.mxu0 0.0
        %3208 = vmatmul.mubr.f32.gmra.mrb[0].mxu0 %v3071
        %v3209 = vpop.f32.mrb[0].mxu0
        %v3210 = vadd.f32 0.0, %v3209
        %v3211 = vpop.f32.mrb[0].mxu0
        %3212 = vdwg.mxu0
        %3213 = vmatprep.subr.mxu0 0.0
        %3214 = vmatpush1.msra.mxu0 %v1237
        %3215 = vmatprep.subr.mxu0 0.0
        %3216 = vmatpush1.msra.mxu0 %v1373
        %3217 = vmatprep.subr.mxu0 0.0
        %3218 = vmatpush1.msra.mxu0 0.0
        %3219 = vmatprep.subr.mxu0 0.0
        %3220 = vmatpush1.msra.mxu0 0.0
        %3221 = vmatprep.subr.mxu0 0.0
        %3222 = vmatpush1.msra.mxu0 0.0
        %3223 = vmatprep.subr.mxu0 0.0
        %3224 = vmatpush1.msra.mxu0 0.0
        %3225 = vmatprep.subr.mxu0 0.0
        %3226 = vmatpush1.msra.mxu0 0.0
        %3227 = vmatprep.subr.mxu0 0.0
        %3228 = vmatpush1.msra.mxu0 0.0
        %3229 = vmatprep.subr.mxu0 0.0
        %3230 = vmatpush1.msra.mxu0 0.0
        %3231 = vmatprep.subr.mxu0 0.0
        %3232 = vmatpush1.msra.mxu0 0.0
        %3233 = vmatprep.subr.mxu0 0.0
        %3234 = vmatpush1.msra.mxu0 0.0
        %3235 = vmatprep.subr.mxu0 0.0
        %3236 = vmatpush1.msra.mxu0 0.0
        %3237 = vmatprep.subr.mxu0 0.0
        %3238 = vmatpush1.msra.mxu0 0.0
        %3239 = vmatprep.subr.mxu0 0.0
        %3240 = vmatpush1.msra.mxu0 0.0
        %3241 = vmatprep.subr.mxu0 0.0
        %3242 = vmatpush1.msra.mxu0 0.0
        %3243 = vmatprep.subr.mxu0 0.0
        %3244 = vmatpush1.msra.mxu0 0.0
        %3245 = vmatprep.subr.mxu0 0.0
        %3246 = vmatpush1.msra.mxu0 0.0
        %3247 = vmatprep.subr.mxu0 0.0
        %3248 = vmatpush1.msra.mxu0 0.0
        %3249 = vmatprep.subr.mxu0 0.0
        %3250 = vmatpush1.msra.mxu0 0.0
        %3251 = vmatprep.subr.mxu0 0.0
        %3252 = vmatpush1.msra.mxu0 0.0
        %3253 = vmatprep.subr.mxu0 0.0
        %3254 = vmatpush1.msra.mxu0 0.0
        %3255 = vmatprep.subr.mxu0 0.0
        %3256 = vmatpush1.msra.mxu0 0.0
        %3257 = vmatprep.subr.mxu0 0.0
        %3258 = vmatpush1.msra.mxu0 0.0
        %3259 = vmatprep.subr.mxu0 0.0
        %3260 = vmatpush1.msra.mxu0 0.0
        %3261 = vmatprep.subr.mxu0 0.0
        %3262 = vmatpush1.msra.mxu0 0.0
        %3263 = vmatprep.subr.mxu0 0.0
        %3264 = vmatpush1.msra.mxu0 0.0
        %3265 = vmatprep.subr.mxu0 0.0
        %3266 = vmatpush1.msra.mxu0 0.0
        %3267 = vmatprep.subr.mxu0 0.0
        %3268 = vmatpush1.msra.mxu0 0.0
        %3269 = vmatprep.subr.mxu0 0.0
        %3270 = vmatpush1.msra.mxu0 0.0
        %3271 = vmatprep.subr.mxu0 0.0
        %3272 = vmatpush1.msra.mxu0 0.0
        %3273 = vmatprep.subr.mxu0 0.0
        %3274 = vmatpush1.msra.mxu0 0.0
        %3275 = vmatprep.subr.mxu0 0.0
        %3276 = vmatpush1.msra.mxu0 0.0
        %3277 = vmatprep.mubr.f32.mxu0 0.0
        %3278 = vmatmul.mubr.f32.gmra.mrb[0].mxu0 %v3071
        %v3279 = vpop.f32.mrb[0].mxu0
        %v3280 = vadd.f32 0.0, %v3279
        %v3281 = vpop.f32.mrb[0].mxu0
        %3282 = vdwg.mxu0
        %3283 = vmatprep.subr.mxu0 0.0
        %3284 = vmatpush1.msra.mxu0 %v1238
        %3285 = vmatprep.subr.mxu0 0.0
        %3286 = vmatpush1.msra.mxu0 %v1374
        %3287 = vmatprep.subr.mxu0 0.0
        %3288 = vmatpush1.msra.mxu0 0.0
        %3289 = vmatprep.subr.mxu0 0.0
        %3290 = vmatpush1.msra.mxu0 0.0
        %3291 = vmatprep.subr.mxu0 0.0
        %3292 = vmatpush1.msra.mxu0 0.0
        %3293 = vmatprep.subr.mxu0 0.0
        %3294 = vmatpush1.msra.mxu0 0.0
        %3295 = vmatprep.subr.mxu0 0.0
        %3296 = vmatpush1.msra.mxu0 0.0
        %3297 = vmatprep.subr.mxu0 0.0
        %3298 = vmatpush1.msra.mxu0 0.0
        %3299 = vmatprep.subr.mxu0 0.0
        %3300 = vmatpush1.msra.mxu0 0.0
        %3301 = vmatprep.subr.mxu0 0.0
        %3302 = vmatpush1.msra.mxu0 0.0
        %3303 = vmatprep.subr.mxu0 0.0
        %3304 = vmatpush1.msra.mxu0 0.0
        %3305 = vmatprep.subr.mxu0 0.0
        %3306 = vmatpush1.msra.mxu0 0.0
        %3307 = vmatprep.subr.mxu0 0.0
        %3308 = vmatpush1.msra.mxu0 0.0
        %3309 = vmatprep.subr.mxu0 0.0
        %3310 = vmatpush1.msra.mxu0 0.0
        %3311 = vmatprep.subr.mxu0 0.0
        %3312 = vmatpush1.msra.mxu0 0.0
        %3313 = vmatprep.subr.mxu0 0.0
        %3314 = vmatpush1.msra.mxu0 0.0
        %3315 = vmatprep.subr.mxu0 0.0
        %3316 = vmatpush1.msra.mxu0 0.0
        %3317 = vmatprep.subr.mxu0 0.0
        %3318 = vmatpush1.msra.mxu0 0.0
        %3319 = vmatprep.subr.mxu0 0.0
        %3320 = vmatpush1.msra.mxu0 0.0
        %3321 = vmatprep.subr.mxu0 0.0
        %3322 = vmatpush1.msra.mxu0 0.0
        %3323 = vmatprep.subr.mxu0 0.0
        %3324 = vmatpush1.msra.mxu0 0.0
        %3325 = vmatprep.subr.mxu0 0.0
        %3326 = vmatpush1.msra.mxu0 0.0
        %3327 = vmatprep.subr.mxu0 0.0
        %3328 = vmatpush1.msra.mxu0 0.0
        %3329 = vmatprep.subr.mxu0 0.0
        %3330 = vmatpush1.msra.mxu0 0.0
        %3331 = vmatprep.subr.mxu0 0.0
        %3332 = vmatpush1.msra.mxu0 0.0
        %3333 = vmatprep.subr.mxu0 0.0
        %3334 = vmatpush1.msra.mxu0 0.0
        %3335 = vmatprep.subr.mxu0 0.0
        %3336 = vmatpush1.msra.mxu0 0.0
        %3337 = vmatprep.subr.mxu0 0.0
        %3338 = vmatpush1.msra.mxu0 0.0
        %3339 = vmatprep.subr.mxu0 0.0
        %3340 = vmatpush1.msra.mxu0 0.0
        %3341 = vmatprep.subr.mxu0 0.0
        %3342 = vmatpush1.msra.mxu0 0.0
        %3343 = vmatprep.subr.mxu0 0.0
        %3344 = vmatpush1.msra.mxu0 0.0
        %3345 = vmatprep.subr.mxu0 0.0
        %3346 = vmatpush1.msra.mxu0 0.0
        %3347 = vmatprep.mubr.f32.mxu0 0.0
        %3348 = vmatmul.mubr.f32.gmra.mrb[0].mxu0 %v3071
        %v3349 = vpop.f32.mrb[0].mxu0
        %v3350 = vadd.f32 0.0, %v3349
        %v3351 = vpop.f32.mrb[0].mxu0
        %3352 = vdwg.mxu0
        %v3354 = vsel %vm277, %v1653, 0
        %3356 = vmatprep.subr.mxu0 0.0
        %3357 = vmatpush1.msra.mxu0 %v1503
        %3358 = vmatprep.subr.mxu0 0.0
        %3359 = vmatpush1.msra.mxu0 %v1639
        %3360 = vmatprep.subr.mxu0 0.0
        %3361 = vmatpush1.msra.mxu0 0.0
        %3362 = vmatprep.subr.mxu0 0.0
        %3363 = vmatpush1.msra.mxu0 0.0
        %3364 = vmatprep.subr.mxu0 0.0
        %3365 = vmatpush1.msra.mxu0 0.0
        %3366 = vmatprep.subr.mxu0 0.0
        %3367 = vmatpush1.msra.mxu0 0.0
        %3368 = vmatprep.subr.mxu0 0.0
        %3369 = vmatpush1.msra.mxu0 0.0
        %3370 = vmatprep.subr.mxu0 0.0
        %3371 = vmatpush1.msra.mxu0 0.0
        %3372 = vmatprep.subr.mxu0 0.0
        %3373 = vmatpush1.msra.mxu0 0.0
        %3374 = vmatprep.subr.mxu0 0.0
        %3375 = vmatpush1.msra.mxu0 0.0
        %3376 = vmatprep.subr.mxu0 0.0
        %3377 = vmatpush1.msra.mxu0 0.0
        %3378 = vmatprep.subr.mxu0 0.0
        %3379 = vmatpush1.msra.mxu0 0.0
        %3380 = vmatprep.subr.mxu0 0.0
        %3381 = vmatpush1.msra.mxu0 0.0
        %3382 = vmatprep.subr.mxu0 0.0
        %3383 = vmatpush1.msra.mxu0 0.0
        %3384 = vmatprep.subr.mxu0 0.0
        %3385 = vmatpush1.msra.mxu0 0.0
        %3386 = vmatprep.subr.mxu0 0.0
        %3387 = vmatpush1.msra.mxu0 0.0
        %3388 = vmatprep.subr.mxu0 0.0
        %3389 = vmatpush1.msra.mxu0 0.0
        %3390 = vmatprep.subr.mxu0 0.0
        %3391 = vmatpush1.msra.mxu0 0.0
        %3392 = vmatprep.subr.mxu0 0.0
        %3393 = vmatpush1.msra.mxu0 0.0
        %3394 = vmatprep.subr.mxu0 0.0
        %3395 = vmatpush1.msra.mxu0 0.0
        %3396 = vmatprep.subr.mxu0 0.0
        %3397 = vmatpush1.msra.mxu0 0.0
        %3398 = vmatprep.subr.mxu0 0.0
        %3399 = vmatpush1.msra.mxu0 0.0
        %3400 = vmatprep.subr.mxu0 0.0
        %3401 = vmatpush1.msra.mxu0 0.0
        %3402 = vmatprep.subr.mxu0 0.0
        %3403 = vmatpush1.msra.mxu0 0.0
        %3404 = vmatprep.subr.mxu0 0.0
        %3405 = vmatpush1.msra.mxu0 0.0
        %3406 = vmatprep.subr.mxu0 0.0
        %3407 = vmatpush1.msra.mxu0 0.0
        %3408 = vmatprep.subr.mxu0 0.0
        %3409 = vmatpush1.msra.mxu0 0.0
        %3410 = vmatprep.subr.mxu0 0.0
        %3411 = vmatpush1.msra.mxu0 0.0
        %3412 = vmatprep.subr.mxu0 0.0
        %3413 = vmatpush1.msra.mxu0 0.0
        %3414 = vmatprep.subr.mxu0 0.0
        %3415 = vmatpush1.msra.mxu0 0.0
        %3416 = vmatprep.subr.mxu0 0.0
        %3417 = vmatpush1.msra.mxu0 0.0
        %3418 = vmatprep.subr.mxu0 0.0
        %3419 = vmatpush1.msra.mxu0 0.0
        %3420 = vmatprep.mubr.f32.mxu0 0.0
        %3421 = vmatmul.mubr.f32.gmra.mrb[0].mxu0 %v3354
        %v3422 = vpop.f32.mrb[0].mxu0
        %v3423 = vadd.f32 0.0, %v3422
        %v3424 = vpop.f32.mrb[0].mxu0
        %3425 = vdwg.mxu0
        %3426 = vmatprep.subr.mxu0 0.0
        %3427 = vmatpush1.msra.mxu0 %v1504
        %3428 = vmatprep.subr.mxu0 0.0
        %3429 = vmatpush1.msra.mxu0 %v1640
        %3430 = vmatprep.subr.mxu0 0.0
        %3431 = vmatpush1.msra.mxu0 0.0
        %3432 = vmatprep.subr.mxu0 0.0
        %3433 = vmatpush1.msra.mxu0 0.0
        %3434 = vmatprep.subr.mxu0 0.0
        %3435 = vmatpush1.msra.mxu0 0.0
        %3436 = vmatprep.subr.mxu0 0.0
        %3437 = vmatpush1.msra.mxu0 0.0
        %3438 = vmatprep.subr.mxu0 0.0
        %3439 = vmatpush1.msra.mxu0 0.0
        %3440 = vmatprep.subr.mxu0 0.0
        %3441 = vmatpush1.msra.mxu0 0.0
        %3442 = vmatprep.subr.mxu0 0.0
        %3443 = vmatpush1.msra.mxu0 0.0
        %3444 = vmatprep.subr.mxu0 0.0
        %3445 = vmatpush1.msra.mxu0 0.0
        %3446 = vmatprep.subr.mxu0 0.0
        %3447 = vmatpush1.msra.mxu0 0.0
        %3448 = vmatprep.subr.mxu0 0.0
        %3449 = vmatpush1.msra.mxu0 0.0
        %3450 = vmatprep.subr.mxu0 0.0
        %3451 = vmatpush1.msra.mxu0 0.0
        %3452 = vmatprep.subr.mxu0 0.0
        %3453 = vmatpush1.msra.mxu0 0.0
        %3454 = vmatprep.subr.mxu0 0.0
        %3455 = vmatpush1.msra.mxu0 0.0
        %3456 = vmatprep.subr.mxu0 0.0
        %3457 = vmatpush1.msra.mxu0 0.0
        %3458 = vmatprep.subr.mxu0 0.0
        %3459 = vmatpush1.msra.mxu0 0.0
        %3460 = vmatprep.subr.mxu0 0.0
        %3461 = vmatpush1.msra.mxu0 0.0
        %3462 = vmatprep.subr.mxu0 0.0
        %3463 = vmatpush1.msra.mxu0 0.0
        %3464 = vmatprep.subr.mxu0 0.0
        %3465 = vmatpush1.msra.mxu0 0.0
        %3466 = vmatprep.subr.mxu0 0.0
        %3467 = vmatpush1.msra.mxu0 0.0
        %3468 = vmatprep.subr.mxu0 0.0
        %3469 = vmatpush1.msra.mxu0 0.0
        %3470 = vmatprep.subr.mxu0 0.0
        %3471 = vmatpush1.msra.mxu0 0.0
        %3472 = vmatprep.subr.mxu0 0.0
        %3473 = vmatpush1.msra.mxu0 0.0
        %3474 = vmatprep.subr.mxu0 0.0
        %3475 = vmatpush1.msra.mxu0 0.0
        %3476 = vmatprep.subr.mxu0 0.0
        %3477 = vmatpush1.msra.mxu0 0.0
        %3478 = vmatprep.subr.mxu0 0.0
        %3479 = vmatpush1.msra.mxu0 0.0
        %3480 = vmatprep.subr.mxu0 0.0
        %3481 = vmatpush1.msra.mxu0 0.0
        %3482 = vmatprep.subr.mxu0 0.0
        %3483 = vmatpush1.msra.mxu0 0.0
        %3484 = vmatprep.subr.mxu0 0.0
        %3485 = vmatpush1.msra.mxu0 0.0
        %3486 = vmatprep.subr.mxu0 0.0
        %3487 = vmatpush1.msra.mxu0 0.0
        %3488 = vmatprep.subr.mxu0 0.0
        %3489 = vmatpush1.msra.mxu0 0.0
        %3490 = vmatprep.mubr.f32.mxu0 0.0
        %3491 = vmatmul.mubr.f32.gmra.mrb[0].mxu0 %v3354
        %v3492 = vpop.f32.mrb[0].mxu0
        %v3493 = vadd.f32 0.0, %v3492
        %v3494 = vpop.f32.mrb[0].mxu0
        %3495 = vdwg.mxu0
        %3496 = vmatprep.subr.mxu0 0.0
        %3497 = vmatpush1.msra.mxu0 %v1505
        %3498 = vmatprep.subr.mxu0 0.0
        %3499 = vmatpush1.msra.mxu0 %v1641
        %3500 = vmatprep.subr.mxu0 0.0
        %3501 = vmatpush1.msra.mxu0 0.0
        %3502 = vmatprep.subr.mxu0 0.0
        %3503 = vmatpush1.msra.mxu0 0.0
        %3504 = vmatprep.subr.mxu0 0.0
        %3505 = vmatpush1.msra.mxu0 0.0
        %3506 = vmatprep.subr.mxu0 0.0
        %3507 = vmatpush1.msra.mxu0 0.0
        %3508 = vmatprep.subr.mxu0 0.0
        %3509 = vmatpush1.msra.mxu0 0.0
        %3510 = vmatprep.subr.mxu0 0.0
        %3511 = vmatpush1.msra.mxu0 0.0
        %3512 = vmatprep.subr.mxu0 0.0
        %3513 = vmatpush1.msra.mxu0 0.0
        %3514 = vmatprep.subr.mxu0 0.0
        %3515 = vmatpush1.msra.mxu0 0.0
        %3516 = vmatprep.subr.mxu0 0.0
        %3517 = vmatpush1.msra.mxu0 0.0
        %3518 = vmatprep.subr.mxu0 0.0
        %3519 = vmatpush1.msra.mxu0 0.0
        %3520 = vmatprep.subr.mxu0 0.0
        %3521 = vmatpush1.msra.mxu0 0.0
        %3522 = vmatprep.subr.mxu0 0.0
        %3523 = vmatpush1.msra.mxu0 0.0
        %3524 = vmatprep.subr.mxu0 0.0
        %3525 = vmatpush1.msra.mxu0 0.0
        %3526 = vmatprep.subr.mxu0 0.0
        %3527 = vmatpush1.msra.mxu0 0.0
        %3528 = vmatprep.subr.mxu0 0.0
        %3529 = vmatpush1.msra.mxu0 0.0
        %3530 = vmatprep.subr.mxu0 0.0
        %3531 = vmatpush1.msra.mxu0 0.0
        %3532 = vmatprep.subr.mxu0 0.0
        %3533 = vmatpush1.msra.mxu0 0.0
        %3534 = vmatprep.subr.mxu0 0.0
        %3535 = vmatpush1.msra.mxu0 0.0
        %3536 = vmatprep.subr.mxu0 0.0
        %3537 = vmatpush1.msra.mxu0 0.0
        %3538 = vmatprep.subr.mxu0 0.0
        %3539 = vmatpush1.msra.mxu0 0.0
        %3540 = vmatprep.subr.mxu0 0.0
        %3541 = vmatpush1.msra.mxu0 0.0
        %3542 = vmatprep.subr.mxu0 0.0
        %3543 = vmatpush1.msra.mxu0 0.0
        %3544 = vmatprep.subr.mxu0 0.0
        %3545 = vmatpush1.msra.mxu0 0.0
        %3546 = vmatprep.subr.mxu0 0.0
        %3547 = vmatpush1.msra.mxu0 0.0
        %3548 = vmatprep.subr.mxu0 0.0
        %3549 = vmatpush1.msra.mxu0 0.0
        %3550 = vmatprep.subr.mxu0 0.0
        %3551 = vmatpush1.msra.mxu0 0.0
        %3552 = vmatprep.subr.mxu0 0.0
        %3553 = vmatpush1.msra.mxu0 0.0
        %3554 = vmatprep.subr.mxu0 0.0
        %3555 = vmatpush1.msra.mxu0 0.0
        %3556 = vmatprep.subr.mxu0 0.0
        %3557 = vmatpush1.msra.mxu0 0.0
        %3558 = vmatprep.subr.mxu0 0.0
        %3559 = vmatpush1.msra.mxu0 0.0
        %3560 = vmatprep.mubr.f32.mxu0 0.0
        %3561 = vmatmul.mubr.f32.gmra.mrb[0].mxu0 %v3354
        %v3562 = vpop.f32.mrb[0].mxu0
        %v3563 = vadd.f32 0.0, %v3562
        %v3564 = vpop.f32.mrb[0].mxu0
        %3565 = vdwg.mxu0
        %3566 = vmatprep.subr.mxu0 0.0
        %3567 = vmatpush1.msra.mxu0 %v1506
        %3568 = vmatprep.subr.mxu0 0.0
        %3569 = vmatpush1.msra.mxu0 %v1642
        %3570 = vmatprep.subr.mxu0 0.0
        %3571 = vmatpush1.msra.mxu0 0.0
        %3572 = vmatprep.subr.mxu0 0.0
        %3573 = vmatpush1.msra.mxu0 0.0
        %3574 = vmatprep.subr.mxu0 0.0
        %3575 = vmatpush1.msra.mxu0 0.0
        %3576 = vmatprep.subr.mxu0 0.0
        %3577 = vmatpush1.msra.mxu0 0.0
        %3578 = vmatprep.subr.mxu0 0.0
        %3579 = vmatpush1.msra.mxu0 0.0
        %3580 = vmatprep.subr.mxu0 0.0
        %3581 = vmatpush1.msra.mxu0 0.0
        %3582 = vmatprep.subr.mxu0 0.0
        %3583 = vmatpush1.msra.mxu0 0.0
        %3584 = vmatprep.subr.mxu0 0.0
        %3585 = vmatpush1.msra.mxu0 0.0
        %3586 = vmatprep.subr.mxu0 0.0
        %3587 = vmatpush1.msra.mxu0 0.0
        %3588 = vmatprep.subr.mxu0 0.0
        %3589 = vmatpush1.msra.mxu0 0.0
        %3590 = vmatprep.subr.mxu0 0.0
        %3591 = vmatpush1.msra.mxu0 0.0
        %3592 = vmatprep.subr.mxu0 0.0
        %3593 = vmatpush1.msra.mxu0 0.0
        %3594 = vmatprep.subr.mxu0 0.0
        %3595 = vmatpush1.msra.mxu0 0.0
        %3596 = vmatprep.subr.mxu0 0.0
        %3597 = vmatpush1.msra.mxu0 0.0
        %3598 = vmatprep.subr.mxu0 0.0
        %3599 = vmatpush1.msra.mxu0 0.0
        %3600 = vmatprep.subr.mxu0 0.0
        %3601 = vmatpush1.msra.mxu0 0.0
        %3602 = vmatprep.subr.mxu0 0.0
        %3603 = vmatpush1.msra.mxu0 0.0
        %3604 = vmatprep.subr.mxu0 0.0
        %3605 = vmatpush1.msra.mxu0 0.0
        %3606 = vmatprep.subr.mxu0 0.0
        %3607 = vmatpush1.msra.mxu0 0.0
        %3608 = vmatprep.subr.mxu0 0.0
        %3609 = vmatpush1.msra.mxu0 0.0
        %3610 = vmatprep.subr.mxu0 0.0
        %3611 = vmatpush1.msra.mxu0 0.0
        %3612 = vmatprep.subr.mxu0 0.0
        %3613 = vmatpush1.msra.mxu0 0.0
        %3614 = vmatprep.subr.mxu0 0.0
        %3615 = vmatpush1.msra.mxu0 0.0
        %3616 = vmatprep.subr.mxu0 0.0
        %3617 = vmatpush1.msra.mxu0 0.0
        %3618 = vmatprep.subr.mxu0 0.0
        %3619 = vmatpush1.msra.mxu0 0.0
        %3620 = vmatprep.subr.mxu0 0.0
        %3621 = vmatpush1.msra.mxu0 0.0
        %3622 = vmatprep.subr.mxu0 0.0
        %3623 = vmatpush1.msra.mxu0 0.0
        %3624 = vmatprep.subr.mxu0 0.0
        %3625 = vmatpush1.msra.mxu0 0.0
        %3626 = vmatprep.subr.mxu0 0.0
        %3627 = vmatpush1.msra.mxu0 0.0
        %3628 = vmatprep.subr.mxu0 0.0
        %3629 = vmatpush1.msra.mxu0 0.0
        %3630 = vmatprep.mubr.f32.mxu0 0.0
        %3631 = vmatmul.mubr.f32.gmra.mrb[0].mxu0 %v3354
        %v3632 = vpop.f32.mrb[0].mxu0
        %v3633 = vadd.f32 0.0, %v3632
        %v3634 = vpop.f32.mrb[0].mxu0
        %3635 = vdwg.mxu0
        %v3637 = vsel %vm277, %v1654, 0
        %3639 = vmatprep.subr.mxu0 0.0
        %3640 = vmatpush1.msra.mxu0 %v1507
        %3641 = vmatprep.subr.mxu0 0.0
        %3642 = vmatpush1.msra.mxu0 %v1643
        %3643 = vmatprep.subr.mxu0 0.0
        %3644 = vmatpush1.msra.mxu0 0.0
        %3645 = vmatprep.subr.mxu0 0.0
        %3646 = vmatpush1.msra.mxu0 0.0
        %3647 = vmatprep.subr.mxu0 0.0
        %3648 = vmatpush1.msra.mxu0 0.0
        %3649 = vmatprep.subr.mxu0 0.0
        %3650 = vmatpush1.msra.mxu0 0.0
        %3651 = vmatprep.subr.mxu0 0.0
        %3652 = vmatpush1.msra.mxu0 0.0
        %3653 = vmatprep.subr.mxu0 0.0
        %3654 = vmatpush1.msra.mxu0 0.0
        %3655 = vmatprep.subr.mxu0 0.0
        %3656 = vmatpush1.msra.mxu0 0.0
        %3657 = vmatprep.subr.mxu0 0.0
        %3658 = vmatpush1.msra.mxu0 0.0
        %3659 = vmatprep.subr.mxu0 0.0
        %3660 = vmatpush1.msra.mxu0 0.0
        %3661 = vmatprep.subr.mxu0 0.0
        %3662 = vmatpush1.msra.mxu0 0.0
        %3663 = vmatprep.subr.mxu0 0.0
        %3664 = vmatpush1.msra.mxu0 0.0
        %3665 = vmatprep.subr.mxu0 0.0
        %3666 = vmatpush1.msra.mxu0 0.0
        %3667 = vmatprep.subr.mxu0 0.0
        %3668 = vmatpush1.msra.mxu0 0.0
        %3669 = vmatprep.subr.mxu0 0.0
        %3670 = vmatpush1.msra.mxu0 0.0
        %3671 = vmatprep.subr.mxu0 0.0
        %3672 = vmatpush1.msra.mxu0 0.0
        %3673 = vmatprep.subr.mxu0 0.0
        %3674 = vmatpush1.msra.mxu0 0.0
        %3675 = vmatprep.subr.mxu0 0.0
        %3676 = vmatpush1.msra.mxu0 0.0
        %3677 = vmatprep.subr.mxu0 0.0
        %3678 = vmatpush1.msra.mxu0 0.0
        %3679 = vmatprep.subr.mxu0 0.0
        %3680 = vmatpush1.msra.mxu0 0.0
        %3681 = vmatprep.subr.mxu0 0.0
        %3682 = vmatpush1.msra.mxu0 0.0
        %3683 = vmatprep.subr.mxu0 0.0
        %3684 = vmatpush1.msra.mxu0 0.0
        %3685 = vmatprep.subr.mxu0 0.0
        %3686 = vmatpush1.msra.mxu0 0.0
        %3687 = vmatprep.subr.mxu0 0.0
        %3688 = vmatpush1.msra.mxu0 0.0
        %3689 = vmatprep.subr.mxu0 0.0
        %3690 = vmatpush1.msra.mxu0 0.0
        %3691 = vmatprep.subr.mxu0 0.0
        %3692 = vmatpush1.msra.mxu0 0.0
        %3693 = vmatprep.subr.mxu0 0.0
        %3694 = vmatpush1.msra.mxu0 0.0
        %3695 = vmatprep.subr.mxu0 0.0
        %3696 = vmatpush1.msra.mxu0 0.0
        %3697 = vmatprep.subr.mxu0 0.0
        %3698 = vmatpush1.msra.mxu0 0.0
        %3699 = vmatprep.subr.mxu0 0.0
        %3700 = vmatpush1.msra.mxu0 0.0
        %3701 = vmatprep.subr.mxu0 0.0
        %3702 = vmatpush1.msra.mxu0 0.0
        %3703 = vmatprep.mubr.f32.mxu0 0.0
        %3704 = vmatmul.mubr.f32.gmra.mrb[0].mxu0 %v3637
        %v3705 = vpop.f32.mrb[0].mxu0
        %v3706 = vadd.f32 0.0, %v3705
        %v3707 = vpop.f32.mrb[0].mxu0
        %3708 = vdwg.mxu0
        %3709 = vmatprep.subr.mxu0 0.0
        %3710 = vmatpush1.msra.mxu0 %v1508
        %3711 = vmatprep.subr.mxu0 0.0
        %3712 = vmatpush1.msra.mxu0 %v1644
        %3713 = vmatprep.subr.mxu0 0.0
        %3714 = vmatpush1.msra.mxu0 0.0
        %3715 = vmatprep.subr.mxu0 0.0
        %3716 = vmatpush1.msra.mxu0 0.0
        %3717 = vmatprep.subr.mxu0 0.0
        %3718 = vmatpush1.msra.mxu0 0.0
        %3719 = vmatprep.subr.mxu0 0.0
        %3720 = vmatpush1.msra.mxu0 0.0
        %3721 = vmatprep.subr.mxu0 0.0
        %3722 = vmatpush1.msra.mxu0 0.0
        %3723 = vmatprep.subr.mxu0 0.0
        %3724 = vmatpush1.msra.mxu0 0.0
        %3725 = vmatprep.subr.mxu0 0.0
        %3726 = vmatpush1.msra.mxu0 0.0
        %3727 = vmatprep.subr.mxu0 0.0
        %3728 = vmatpush1.msra.mxu0 0.0
        %3729 = vmatprep.subr.mxu0 0.0
        %3730 = vmatpush1.msra.mxu0 0.0
        %3731 = vmatprep.subr.mxu0 0.0
        %3732 = vmatpush1.msra.mxu0 0.0
        %3733 = vmatprep.subr.mxu0 0.0
        %3734 = vmatpush1.msra.mxu0 0.0
        %3735 = vmatprep.subr.mxu0 0.0
        %3736 = vmatpush1.msra.mxu0 0.0
        %3737 = vmatprep.subr.mxu0 0.0
        %3738 = vmatpush1.msra.mxu0 0.0
        %3739 = vmatprep.subr.mxu0 0.0
        %3740 = vmatpush1.msra.mxu0 0.0
        %3741 = vmatprep.subr.mxu0 0.0
        %3742 = vmatpush1.msra.mxu0 0.0
        %3743 = vmatprep.subr.mxu0 0.0
        %3744 = vmatpush1.msra.mxu0 0.0
        %3745 = vmatprep.subr.mxu0 0.0
        %3746 = vmatpush1.msra.mxu0 0.0
        %3747 = vmatprep.subr.mxu0 0.0
        %3748 = vmatpush1.msra.mxu0 0.0
        %3749 = vmatprep.subr.mxu0 0.0
        %3750 = vmatpush1.msra.mxu0 0.0
        %3751 = vmatprep.subr.mxu0 0.0
        %3752 = vmatpush1.msra.mxu0 0.0
        %3753 = vmatprep.subr.mxu0 0.0
        %3754 = vmatpush1.msra.mxu0 0.0
        %3755 = vmatprep.subr.mxu0 0.0
        %3756 = vmatpush1.msra.mxu0 0.0
        %3757 = vmatprep.subr.mxu0 0.0
        %3758 = vmatpush1.msra.mxu0 0.0
        %3759 = vmatprep.subr.mxu0 0.0
        %3760 = vmatpush1.msra.mxu0 0.0
        %3761 = vmatprep.subr.mxu0 0.0
        %3762 = vmatpush1.msra.mxu0 0.0
        %3763 = vmatprep.subr.mxu0 0.0
        %3764 = vmatpush1.msra.mxu0 0.0
        %3765 = vmatprep.subr.mxu0 0.0
        %3766 = vmatpush1.msra.mxu0 0.0
        %3767 = vmatprep.subr.mxu0 0.0
        %3768 = vmatpush1.msra.mxu0 0.0
        %3769 = vmatprep.subr.mxu0 0.0
        %3770 = vmatpush1.msra.mxu0 0.0
        %3771 = vmatprep.subr.mxu0 0.0
        %3772 = vmatpush1.msra.mxu0 0.0
        %3773 = vmatprep.mubr.f32.mxu0 0.0
        %3774 = vmatmul.mubr.f32.gmra.mrb[0].mxu0 %v3637
        %v3775 = vpop.f32.mrb[0].mxu0
        %v3776 = vadd.f32 0.0, %v3775
        %v3777 = vpop.f32.mrb[0].mxu0
        %3778 = vdwg.mxu0
        %3779 = vmatprep.subr.mxu0 0.0
        %3780 = vmatpush1.msra.mxu0 %v1509
        %3781 = vmatprep.subr.mxu0 0.0
        %3782 = vmatpush1.msra.mxu0 %v1645
        %3783 = vmatprep.subr.mxu0 0.0
        %3784 = vmatpush1.msra.mxu0 0.0
        %3785 = vmatprep.subr.mxu0 0.0
        %3786 = vmatpush1.msra.mxu0 0.0
        %3787 = vmatprep.subr.mxu0 0.0
        %3788 = vmatpush1.msra.mxu0 0.0
        %3789 = vmatprep.subr.mxu0 0.0
        %3790 = vmatpush1.msra.mxu0 0.0
        %3791 = vmatprep.subr.mxu0 0.0
        %3792 = vmatpush1.msra.mxu0 0.0
        %3793 = vmatprep.subr.mxu0 0.0
        %3794 = vmatpush1.msra.mxu0 0.0
        %3795 = vmatprep.subr.mxu0 0.0
        %3796 = vmatpush1.msra.mxu0 0.0
        %3797 = vmatprep.subr.mxu0 0.0
        %3798 = vmatpush1.msra.mxu0 0.0
        %3799 = vmatprep.subr.mxu0 0.0
        %3800 = vmatpush1.msra.mxu0 0.0
        %3801 = vmatprep.subr.mxu0 0.0
        %3802 = vmatpush1.msra.mxu0 0.0
        %3803 = vmatprep.subr.mxu0 0.0
        %3804 = vmatpush1.msra.mxu0 0.0
        %3805 = vmatprep.subr.mxu0 0.0
        %3806 = vmatpush1.msra.mxu0 0.0
        %3807 = vmatprep.subr.mxu0 0.0
        %3808 = vmatpush1.msra.mxu0 0.0
        %3809 = vmatprep.subr.mxu0 0.0
        %3810 = vmatpush1.msra.mxu0 0.0
        %3811 = vmatprep.subr.mxu0 0.0
        %3812 = vmatpush1.msra.mxu0 0.0
        %3813 = vmatprep.subr.mxu0 0.0
        %3814 = vmatpush1.msra.mxu0 0.0
        %3815 = vmatprep.subr.mxu0 0.0
        %3816 = vmatpush1.msra.mxu0 0.0
        %3817 = vmatprep.subr.mxu0 0.0
        %3818 = vmatpush1.msra.mxu0 0.0
        %3819 = vmatprep.subr.mxu0 0.0
        %3820 = vmatpush1.msra.mxu0 0.0
        %3821 = vmatprep.subr.mxu0 0.0
        %3822 = vmatpush1.msra.mxu0 0.0
        %3823 = vmatprep.subr.mxu0 0.0
        %3824 = vmatpush1.msra.mxu0 0.0
        %3825 = vmatprep.subr.mxu0 0.0
        %3826 = vmatpush1.msra.mxu0 0.0
        %3827 = vmatprep.subr.mxu0 0.0
        %3828 = vmatpush1.msra.mxu0 0.0
        %3829 = vmatprep.subr.mxu0 0.0
        %3830 = vmatpush1.msra.mxu0 0.0
        %3831 = vmatprep.subr.mxu0 0.0
        %3832 = vmatpush1.msra.mxu0 0.0
        %3833 = vmatprep.subr.mxu0 0.0
        %3834 = vmatpush1.msra.mxu0 0.0
        %3835 = vmatprep.subr.mxu0 0.0
        %3836 = vmatpush1.msra.mxu0 0.0
        %3837 = vmatprep.subr.mxu0 0.0
        %3838 = vmatpush1.msra.mxu0 0.0
        %3839 = vmatprep.subr.mxu0 0.0
        %3840 = vmatpush1.msra.mxu0 0.0
        %3841 = vmatprep.subr.mxu0 0.0
        %3842 = vmatpush1.msra.mxu0 0.0
        %3843 = vmatprep.mubr.f32.mxu0 0.0
        %3844 = vmatmul.mubr.f32.gmra.mrb[0].mxu0 %v3637
        %v3845 = vpop.f32.mrb[0].mxu0
        %v3846 = vadd.f32 0.0, %v3845
        %v3847 = vpop.f32.mrb[0].mxu0
        %3848 = vdwg.mxu0
        %3849 = vmatprep.subr.mxu0 0.0
        %3850 = vmatpush1.msra.mxu0 %v1510
        %3851 = vmatprep.subr.mxu0 0.0
        %3852 = vmatpush1.msra.mxu0 %v1646
        %3853 = vmatprep.subr.mxu0 0.0
        %3854 = vmatpush1.msra.mxu0 0.0
        %3855 = vmatprep.subr.mxu0 0.0
        %3856 = vmatpush1.msra.mxu0 0.0
        %3857 = vmatprep.subr.mxu0 0.0
        %3858 = vmatpush1.msra.mxu0 0.0
        %3859 = vmatprep.subr.mxu0 0.0
        %3860 = vmatpush1.msra.mxu0 0.0
        %3861 = vmatprep.subr.mxu0 0.0
        %3862 = vmatpush1.msra.mxu0 0.0
        %3863 = vmatprep.subr.mxu0 0.0
        %3864 = vmatpush1.msra.mxu0 0.0
        %3865 = vmatprep.subr.mxu0 0.0
        %3866 = vmatpush1.msra.mxu0 0.0
        %3867 = vmatprep.subr.mxu0 0.0
        %3868 = vmatpush1.msra.mxu0 0.0
        %3869 = vmatprep.subr.mxu0 0.0
        %3870 = vmatpush1.msra.mxu0 0.0
        %3871 = vmatprep.subr.mxu0 0.0
        %3872 = vmatpush1.msra.mxu0 0.0
        %3873 = vmatprep.subr.mxu0 0.0
        %3874 = vmatpush1.msra.mxu0 0.0
        %3875 = vmatprep.subr.mxu0 0.0
        %3876 = vmatpush1.msra.mxu0 0.0
        %3877 = vmatprep.subr.mxu0 0.0
        %3878 = vmatpush1.msra.mxu0 0.0
        %3879 = vmatprep.subr.mxu0 0.0
        %3880 = vmatpush1.msra.mxu0 0.0
        %3881 = vmatprep.subr.mxu0 0.0
        %3882 = vmatpush1.msra.mxu0 0.0
        %3883 = vmatprep.subr.mxu0 0.0
        %3884 = vmatpush1.msra.mxu0 0.0
        %3885 = vmatprep.subr.mxu0 0.0
        %3886 = vmatpush1.msra.mxu0 0.0
        %3887 = vmatprep.subr.mxu0 0.0
        %3888 = vmatpush1.msra.mxu0 0.0
        %3889 = vmatprep.subr.mxu0 0.0
        %3890 = vmatpush1.msra.mxu0 0.0
        %3891 = vmatprep.subr.mxu0 0.0
        %3892 = vmatpush1.msra.mxu0 0.0
        %3893 = vmatprep.subr.mxu0 0.0
        %3894 = vmatpush1.msra.mxu0 0.0
        %3895 = vmatprep.subr.mxu0 0.0
        %3896 = vmatpush1.msra.mxu0 0.0
        %3897 = vmatprep.subr.mxu0 0.0
        %3898 = vmatpush1.msra.mxu0 0.0
        %3899 = vmatprep.subr.mxu0 0.0
        %3900 = vmatpush1.msra.mxu0 0.0
        %3901 = vmatprep.subr.mxu0 0.0
        %3902 = vmatpush1.msra.mxu0 0.0
        %3903 = vmatprep.subr.mxu0 0.0
        %3904 = vmatpush1.msra.mxu0 0.0
        %3905 = vmatprep.subr.mxu0 0.0
        %3906 = vmatpush1.msra.mxu0 0.0
        %3907 = vmatprep.subr.mxu0 0.0
        %3908 = vmatpush1.msra.mxu0 0.0
        %3909 = vmatprep.subr.mxu0 0.0
        %3910 = vmatpush1.msra.mxu0 0.0
        %3911 = vmatprep.subr.mxu0 0.0
        %3912 = vmatpush1.msra.mxu0 0.0
        %3913 = vmatprep.mubr.f32.mxu0 0.0
        %3914 = vmatmul.mubr.f32.gmra.mrb[0].mxu0 %v3637
        %v3915 = vpop.f32.mrb[0].mxu0
        %v3916 = vadd.f32 0.0, %v3915
        %v3917 = vpop.f32.mrb[0].mxu0
        %3918 = vdwg.mxu0
        %v3951 = vcombine.low %v1725, %v1795
        %v3952 = vcombine.low %v1865, %v1935
        %v3953 = vcombine.low %v2008, %v2078
        %v3954 = vcombine.low %v2148, %v2218
        %v3955 = vcombine.low %v2291, %v2361
        %v3956 = vcombine.low %v2431, %v2501
        %v3957 = vcombine.low %v2574, %v2644
        %v3958 = vcombine.low %v2714, %v2784
        %v3959 = vcombine.low %v2857, %v2927
        %v3960 = vcombine.low %v2997, %v3067
        %v3961 = vcombine.low %v3140, %v3210
        %v3962 = vcombine.low %v3280, %v3350
        %v3963 = vcombine.low %v3423, %v3493
        %v3964 = vcombine.low %v3563, %v3633
        %v3965 = vcombine.low %v3706, %v3776
        %v3966 = vcombine.low %v3846, %v3916
        %vm3983 = vcmask 31744
        %3984 = vst.msk [vmem:[%s269] sm:$0xff] %vm3983, %v3951
        %3985 = vst.msk [vmem:[%s269 + $0x8] sm:$0xff] %vm3983, %v3952
        %3986 = vst.msk [vmem:[%s269 + $0x10] sm:$0xff] %vm3983, %v3953
        %3987 = vst.msk [vmem:[%s269 + $0x18] sm:$0xff] %vm3983, %v3954
        %3988 = vst.msk [vmem:[%s269 + $0x20] sm:$0xff] %vm3983, %v3955
        %3989 = vst.msk [vmem:[%s269 + $0x28] sm:$0xff] %vm3983, %v3956
        %3990 = vst.msk [vmem:[%s269 + $0x30] sm:$0xff] %vm3983, %v3957
        %3991 = vst.msk [vmem:[%s269 + $0x38] sm:$0xff] %vm3983, %v3958
        %3992 = vst.msk [vmem:[%s269 + $0x40] sm:$0xff] %vm3983, %v3959
        %3993 = vst.msk [vmem:[%s269 + $0x48] sm:$0xff] %vm3983, %v3960
        %3994 = vst.msk [vmem:[%s269 + $0x50] sm:$0xff] %vm3983, %v3961
        %3995 = vst.msk [vmem:[%s269 + $0x58] sm:$0xff] %vm3983, %v3962
        %3996 = vst.msk [vmem:[%s269 + $0x60] sm:$0xff] %vm3983, %v3963
        %3997 = vst.msk [vmem:[%s269 + $0x68] sm:$0xff] %vm3983, %v3964
        %3998 = vst.msk [vmem:[%s269 + $0x70] sm:$0xff] %vm3983, %v3965
        %3999 = vst.msk [vmem:[%s269 + $0x78] sm:$0xff] %vm3983, %v3966
        %s4000 = smul.u32 16, %s29
        %p4001 = scmp.lt.s32.totalorder %s4000, 31
        %s4002 = scalar_select %p4001, %s4000, 31
        %p4003 = scmp.lt.s32.totalorder %s28, 0
        %s4004 = scalar_select %p4003, %s28, 0
        %s4005 = sadd.s32 %s4004, %s4002
        %s4006 = smul.addr %s4005, 8
        %s4007 = scalar_lea.vmem %s4, %s4006
        // Predicated region
        $region37: #{tpu_custom_call.1} parent=31 // pred_check
          %p4008 = pneg %p138
        $region38: #{tpu_custom_call.1} parent=31 // pred_check_branch
          %4010 = sbr.rel (%p4008) target = $region40
        $region39: #{tpu_custom_call.1} parent=31 // pred_region
          %s4011 = smul.u32 16, %s29
        $region40: #{tpu_custom_call.1} parent=31 // pred_fallthru
          _
      $region32: #{tpu_custom_call.1} parent=5 // pred_fallthru
        _
      %p4012 = scmp.le.s32.totalorder 2, %s19
      // Predicated region
      $region41: #{tpu_custom_call.1} parent=5 // pred_check
        %p4013 = pneg %p4012
      $region42: #{tpu_custom_call.1} parent=5 // pred_check_branch
        %4015 = sbr.rel (%p4013) target = $region44
      $region43: #{tpu_custom_call.1} parent=5 // pred_region
        %s4016 = ssub.s32 %s19, 2
        // Predicated region
        $region45: #{tpu_custom_call.1} parent=43 // pred_check
          %p4017 = pneg %p144
        $region46: #{tpu_custom_call.1} parent=43 // pred_check_branch
          %4019 = sbr.rel (%p4017) target = $region48
        $region47: #{tpu_custom_call.1} parent=43 // pred_region
          %s4020 = smul.u32 16, %s31
          %p4021 = scmp.lt.s32.totalorder %s4020, 31
          %s4022 = scalar_select %p4021, %s4020, 31
          %p4023 = scmp.lt.s32.totalorder %s30, 0
          %s4024 = scalar_select %p4023, %s30, 0
          %s4025 = sadd.s32 %s4024, %s4022
          %s4026 = smul.addr %s4025, 8
          %s4027 = scalar_lea.vmem %s4, %s4026
        $region48: #{tpu_custom_call.1} parent=43 // pred_fallthru
          _
      $region44: #{tpu_custom_call.1} parent=5 // pred_fallthru
        _
    $region6: #{tpu_custom_call.1} parent=1 // loop_footer
      %s23 = sadd.s32 1, %s19
    $region7: #{tpu_custom_call.1} parent=1 // loop_footer_branch
      %18 = sbr.rel target = $region3
    $region8: #{tpu_custom_call.1} parent=1 // loop_exit
      _
    %4028 = vsyncpa [#allocation5], 1
    %s4029 = scalar_lea.sflag [#allocation5], 1
    %4030 = vsyncpa %s4029, 1

</llo_original>
